<compile_context>
chip_gen: v7x
topology: tpu7x:2x2x1
jax: 0.10.0
libtpu: 0.0.40
codegen_flags: <defaults>
</compile_context>

<pallas_src>
import jax
import jax.numpy as jnp
from jax.experimental import pallas as pl
from jax.experimental.pallas import tpu as pltpu

FEATURES = 22
FEAT_PAD = 24                  # layer-0 contraction dim padded to a sublane multiple
HIDDEN = 64
GATES = 4 * HIDDEN             # 256 = two full 128-lane groups, no zero gate padding
NUM_LAYERS = 3
FC_DIMS = [(HIDDEN, 54), (54, 44), (44, 24), (24, 4)]
FC_PAD = 128                   # all FC *output* dims padded to 128 lanes (lane-dense)
BN_EPS = 1e-5


# ------------------------------ fused model kernel ------------------------------
def lstm_fused_kernel(x_ref,
                      wih0, whh0, b0, wih1, whh1, b1, wih2, whh2, b2,
                      fw1, fb1, fw2, fb2, fw3, fb3, fw4, fb4,
                      out_ref, xproj_ref):
    TN = x_ref.shape[0]            # T * NP (time-major, flattened)
    NP = out_ref.shape[0]          # padded batch (multiple of 8)
    T = TN // NP
    H = HIDDEN
    bf16 = jnp.bfloat16

    wih = (wih0, wih1, wih2)
    whh = (whh0, whh1, whh2)
    bias = (b0, b1, b2)

    def cell(gates, c_prev):
        # Static 64-lane slices of the (NP, 256) gate block; all math in f32.
        i = jax.nn.sigmoid(gates[:, 0 * H:1 * H])
        f = jax.nn.sigmoid(gates[:, 1 * H:2 * H])
        g = jnp.tanh(gates[:, 2 * H:3 * H])
        o = jax.nn.sigmoid(gates[:, 3 * H:4 * H])
        c_new = f * c_prev + i * g
        return o * jnp.tanh(c_new), c_new

    # Layer 0: hoist the input->gate projection over the whole sequence
    # (one (T*NP, 24) @ (24, 256) bf16 matmul; bias folded in once).
    xproj_ref[...] = (
        jnp.dot(x_ref[...], wih0[...], preferred_element_type=jnp.float32) + b0[...])

    zeros = jnp.zeros((NP, H), jnp.float32)
    h = [zeros] * NUM_LAYERS
    c = [zeros] * NUM_LAYERS

    # (layer, time) wavefront: at wave w, layer l advances its timestep t = w - l.
    # Every update in a wave only reads h/c produced by the *previous* wave, so the
    # <=3 cell updates per wave are independent streams for the scheduler.
    for w in range(T + NUM_LAYERS - 1):       # static unroll; T, L are small & static
        new_h = list(h)
        new_c = list(c)
        for l in range(NUM_LAYERS):
            t = w - l
            if not 0 <= t < T:
                continue
            rec = jnp.dot(h[l].astype(bf16), whh[l][...],
                          preferred_element_type=jnp.float32)
            if l == 0:
                gates = xproj_ref[t * NP:(t + 1) * NP, :] + rec
            else:
                # Per-step input projection for layers 1-2 (input = h of layer below).
                # Note: the two 64-deep dots could be fused into one
                # (NP,128)@(128,256) matmul via a lane-concat of [h_below|h_own];
                # kept separate here (they pipeline on the MXU within the wave).
                gates = (jnp.dot(h[l - 1].astype(bf16), wih[l][...],
                                 preferred_element_type=jnp.float32)
                         + rec + bias[l][...])
            new_h[l], new_c[l] = cell(gates, c[l])
        h, c = new_h, new_c

    # FC head: Linear -> (folded eval BN) -> ReLU x3, then final Linear.
    # Dropout is identity in inference mode.
    z = h[NUM_LAYERS - 1]
    for fw, fb, relu in ((fw1, fb1, True), (fw2, fb2, True),
                         (fw3, fb3, True), (fw4, fb4, False)):
        z = jnp.dot(z.astype(bf16), fw[...],
                    preferred_element_type=jnp.float32) + fb[...]
        if relu:
            z = jnp.maximum(z, 0.0)
    out_ref[...] = z


def lstm_model_forward(packed, x):
    """x: (N, 22, W) like the PyTorch input (N, features, seq). Returns (N, 4)."""
    N, F, W = x.shape
    assert F == FEATURES
    xt = jnp.transpose(x, (2, 0, 1)).astype(jnp.float32)      # time-major (T, N, F)
    NP = max(8, ((N + 7) // 8) * 8)                           # batch -> sublane group
    xt = jnp.pad(xt, ((0, 0), (0, NP - N), (0, FEAT_PAD - F)))
    x2d = xt.reshape(W * NP, FEAT_PAD).astype(jnp.bfloat16)   # bf16 MXU operand

    vmem = pl.BlockSpec(memory_space=pltpu.MemorySpace.VMEM)
    out = pl.pallas_call(
        lstm_fused_kernel,
        out_shape=jax.ShapeDtypeStruct((NP, FC_PAD), jnp.float32),
        in_specs=[vmem] * (1 + len(packed)),
        out_specs=vmem,
        # Hoisted layer-0 x-projection; ~1 KiB per (t,row) -> chunk over time or set
        # vmem_limit_bytes if T*NP is scaled up (v7x has 64 MiB physical VMEM).
        scratch_shapes=[pltpu.VMEM((W * NP, GATES), jnp.float32)],
    )(x2d, *packed)
    return out[:N, :FC_DIMS[-1][1]]


# ------------------------------- parameter handling -------------------------------
def init_raw_params(key):
    """PyTorch-style raw parameters (unpadded), incl. BN running stats."""
    p = {}
    keys = iter(jax.random.split(key, NUM_LAYERS * 4 + 4 * 2))
    k_lstm = 1.0 / (HIDDEN ** 0.5)
    for l in range(NUM_LAYERS):
        in_dim = FEATURES if l == 0 else HIDDEN
        p[f"wih_{l}"] = jax.random.uniform(next(keys), (4 * HIDDEN, in_dim),
                                           jnp.float32, -k_lstm, k_lstm)
        p[f"whh_{l}"] = jax.random.uniform(next(keys), (4 * HIDDEN, HIDDEN),
                                           jnp.float32, -k_lstm, k_lstm)
        p[f"bih_{l}"] = jax.random.uniform(next(keys), (4 * HIDDEN,),
                                           jnp.float32, -k_lstm, k_lstm)
        p[f"bhh_{l}"] = jax.random.uniform(next(keys), (4 * HIDDEN,),
                                           jnp.float32, -k_lstm, k_lstm)
    for idx, (din, dout) in enumerate(FC_DIMS, start=1):
        k_fc = 1.0 / (din ** 0.5)
        p[f"w{idx}"] = jax.random.uniform(next(keys), (dout, din), jnp.float32, -k_fc, k_fc)
        p[f"b{idx}"] = jax.random.uniform(next(keys), (dout,), jnp.float32, -k_fc, k_fc)
        if idx < 4:
            p[f"gamma{idx}"] = jnp.ones((dout,), jnp.float32)
            p[f"beta{idx}"] = jnp.zeros((dout,), jnp.float32)
            p[f"mean{idx}"] = jnp.zeros((dout,), jnp.float32)   # eval running stats
            p[f"var{idx}"] = jnp.ones((dout,), jnp.float32)
    return p


def pack_params(raw):
    """bf16 matmul weights (f32 biases), gates packed 4*H=256 wide (PyTorch i|f|g|o
    order), layer-0 contraction padded 22->24, eval BN folded into the FC Linears,
    FC output dims padded to 128 lanes."""
    args = []
    for l in range(NUM_LAYERS):
        wih_t = raw[f"wih_{l}"].T                               # (in_dim, 256)
        if l == 0:
            wih_t = jnp.pad(wih_t, ((0, FEAT_PAD - FEATURES), (0, 0)))
        whh_t = raw[f"whh_{l}"].T                               # (64, 256)
        b = (raw[f"bih_{l}"] + raw[f"bhh_{l}"]).reshape(1, GATES)
        args += [wih_t.astype(jnp.bfloat16), whh_t.astype(jnp.bfloat16), b]
    for idx, (din, dout) in enumerate(FC_DIMS, start=1):
        w_t = raw[f"w{idx}"].T                                  # (din, dout)
        b = raw[f"b{idx}"]
        if idx < 4:   # fold eval-mode BatchNorm into the Linear
            scale = raw[f"gamma{idx}"] / jnp.sqrt(raw[f"var{idx}"] + BN_EPS)
            shift = raw[f"beta{idx}"] - raw[f"mean{idx}"] * scale
            w_t = w_t * scale[None, :]
            b = b * scale + shift
        rows = din if idx == 1 else FC_PAD     # FC-1 input is the (NP,64) LSTM state
        w_p = jnp.zeros((rows, FC_PAD), jnp.float32).at[:din, :dout].set(w_t)
        b_p = jnp.zeros((1, FC_PAD), jnp.float32).at[0, :dout].set(b)
        args += [w_p.astype(jnp.bfloat16), b_p]
    return tuple(args)


# ------------------------------- pure-JAX reference -------------------------------
def reference_forward(raw, x, bf16_matmul=False):
    """Pure-JAX reference. bf16_matmul=True mirrors the kernel's bf16 MXU operands
    with f32 accumulation (tight check); False is the full-f32 semantic reference."""
    if bf16_matmul:
        def mm(a, b):
            return jnp.dot(a.astype(jnp.bfloat16), b.astype(jnp.bfloat16),
                           preferred_element_type=jnp.float32)
    else:
        def mm(a, b):
            return jnp.dot(a, b, precision=jax.lax.Precision.HIGHEST)

    h_seq = jnp.transpose(x, (2, 0, 1)).astype(jnp.float32)     # (T, N, F)
    T, N, _ = h_seq.shape
    for l in range(NUM_LAYERS):
        wih_t = raw[f"wih_{l}"].T
        whh_t = raw[f"whh_{l}"].T
        b = raw[f"bih_{l}"] + raw[f"bhh_{l}"]
        h = jnp.zeros((N, HIDDEN), jnp.float32)
        c = jnp.zeros((N, HIDDEN), jnp.float32)
        outs = []
        for t in range(T):
            gates = mm(h_seq[t], wih_t) + mm(h, whh_t) + b
            i = jax.nn.sigmoid(gates[:, 0:HIDDEN])
            f = jax.nn.sigmoid(gates[:, HIDDEN:2 * HIDDEN])
            g = jnp.tanh(gates[:, 2 * HIDDEN:3 * HIDDEN])
            o = jax.nn.sigmoid(gates[:, 3 * HIDDEN:4 * HIDDEN])
            c = f * c + i * g
            h = o * jnp.tanh(c)
            outs.append(h)
        h_seq = jnp.stack(outs, axis=0)
    z = h_seq[-1]
    for idx, (_, dout) in enumerate(FC_DIMS, start=1):
        w_t = raw[f"w{idx}"].T
        b = raw[f"b{idx}"]
        if idx < 4:   # eval-mode BN folded (mathematically identical to BN-after-linear)
            scale = raw[f"gamma{idx}"] / jnp.sqrt(raw[f"var{idx}"] + BN_EPS)
            shift = raw[f"beta{idx}"] - raw[f"mean{idx}"] * scale
            w_t = w_t * scale[None, :]
            b = b * scale + shift
        z = mm(z, w_t) + b
        if idx < 4:
            z = jnp.maximum(z, 0.0)
    return z


# --------------------------------------- main ---------------------------------------
if __name__ == "__main__":
    key = jax.random.PRNGKey(0)
    pkey, xkey = jax.random.split(key)
    raw = init_raw_params(pkey)
    packed = pack_params(raw)

    N, T = 2, 8
    x = jax.random.normal(xkey, (N, FEATURES, T), dtype=jnp.float32)

    out = jax.jit(lstm_model_forward)(packed, x)
    out = jax.block_until_ready(out)
    assert out.shape == (N, 4) and out.dtype == jnp.float32
    assert bool(jnp.all(jnp.isfinite(out)))

    # Tight check vs a reference that quantizes matmul operands exactly like the
    # kernel (bf16 MXU inputs, f32 accumulate): validates the kernel math & layout.
    ref_bf16 = jax.block_until_ready(reference_forward(raw, x, bf16_matmul=True))
    err_bf16 = float(jnp.max(jnp.abs(out - ref_bf16)))
    assert err_bf16 < 5e-3, f"mismatch vs bf16-matched reference: {err_bf16}"

    # Looser check vs the full-f32 reference: bounds the bf16 quantization error.
    ref_f32 = jax.block_until_ready(reference_forward(raw, x, bf16_matmul=False))
    err_f32 = float(jnp.max(jnp.abs(out - ref_f32)))
    assert err_f32 < 5e-2, f"mismatch vs f32 reference: {err_f32}"

    print("KERNEL_OK")
</pallas_src>

<mosaic_0001>
module attributes {stable_mosaic.version = 11 : i64} {
  func.func @lstm_fused_kernel(%arg0: memref<64x24xbf16, #tpu.memory_space<vmem>>, %arg1: memref<24x256xbf16, #tpu.memory_space<vmem>>, %arg2: memref<64x256xbf16, #tpu.memory_space<vmem>>, %arg3: memref<1x256xf32, #tpu.memory_space<vmem>>, %arg4: memref<64x256xbf16, #tpu.memory_space<vmem>>, %arg5: memref<64x256xbf16, #tpu.memory_space<vmem>>, %arg6: memref<1x256xf32, #tpu.memory_space<vmem>>, %arg7: memref<64x256xbf16, #tpu.memory_space<vmem>>, %arg8: memref<64x256xbf16, #tpu.memory_space<vmem>>, %arg9: memref<1x256xf32, #tpu.memory_space<vmem>>, %arg10: memref<64x128xbf16, #tpu.memory_space<vmem>>, %arg11: memref<1x128xf32, #tpu.memory_space<vmem>>, %arg12: memref<128x128xbf16, #tpu.memory_space<vmem>>, %arg13: memref<1x128xf32, #tpu.memory_space<vmem>>, %arg14: memref<128x128xbf16, #tpu.memory_space<vmem>>, %arg15: memref<1x128xf32, #tpu.memory_space<vmem>>, %arg16: memref<128x128xbf16, #tpu.memory_space<vmem>>, %arg17: memref<1x128xf32, #tpu.memory_space<vmem>>, %arg18: memref<8x128xf32, #tpu.memory_space<vmem>>, %arg19: memref<64x256xf32, #tpu.memory_space<vmem>>) attributes {dimension_semantics = [], scalar_prefetch = 0 : i64, scratch_operands = 1 : i64, tpu.core_type = #tpu.core_type<tc>} {
    %c0 = arith.constant 0 : index
    %c0_0 = arith.constant 0 : index
    %0 = vector.load %arg0[%c0, %c0_0] : memref<64x24xbf16, #tpu.memory_space<vmem>>, vector<64x24xbf16>
    %c0_1 = arith.constant 0 : index
    %c0_2 = arith.constant 0 : index
    %1 = vector.load %arg1[%c0_1, %c0_2] : memref<24x256xbf16, #tpu.memory_space<vmem>>, vector<24x256xbf16>
    %cst = arith.constant dense<0.000000e+00> : vector<64x256xf32>
    %2 = tpu.matmul %0, %1, %cst {dimension_numbers = #tpu.dot_dimension_numbers<[1], [0], [0], [1], [0, 0, 1, 1], [], []>} : vector<64x24xbf16>, vector<24x256xbf16>, vector<64x256xf32> -> vector<64x256xf32>
    %c0_3 = arith.constant 0 : index
    %c0_4 = arith.constant 0 : index
    %3 = vector.load %arg3[%c0_3, %c0_4] : memref<1x256xf32, #tpu.memory_space<vmem>>, vector<1x256xf32>
    %4 = vector.broadcast %3 : vector<1x256xf32> to vector<64x256xf32>
    %5 = arith.addf %2, %4 : vector<64x256xf32>
    %c0_5 = arith.constant 0 : index
    %c0_6 = arith.constant 0 : index
    %6 = vector.load %arg19[%c0_5, %c0_6] : memref<64x256xf32, #tpu.memory_space<vmem>>, vector<64x256xf32>
    tpu.vector_store %arg19[%c0_5, %c0_6], %5 {strides = array<i32>} : memref<64x256xf32, #tpu.memory_space<vmem>>, vector<64x256xf32>,
    %cst_7 = arith.constant 0.000000e+00 : f32
    %7 = vector.broadcast %cst_7 : f32 to vector<8x64xf32>
    %8 = arith.truncf %7 : vector<8x64xf32> to vector<8x64xbf16>
    %c0_8 = arith.constant 0 : index
    %c0_9 = arith.constant 0 : index
    %9 = vector.load %arg2[%c0_8, %c0_9] : memref<64x256xbf16, #tpu.memory_space<vmem>>, vector<64x256xbf16>
    %cst_10 = arith.constant dense<0.000000e+00> : vector<8x256xf32>
    %10 = tpu.matmul %8, %9, %cst_10 {dimension_numbers = #tpu.dot_dimension_numbers<[1], [0], [0], [1], [0, 0, 1, 1], [], []>} : vector<8x64xbf16>, vector<64x256xbf16>, vector<8x256xf32> -> vector<8x256xf32>
    %c0_11 = arith.constant 0 : index
    %c0_12 = arith.constant 0 : index
    %11 = vector.load %arg19[%c0_11, %c0_12] : memref<64x256xf32, #tpu.memory_space<vmem>>, vector<8x256xf32>
    %12 = arith.addf %11, %10 : vector<8x256xf32>
    %13 = vector.extract_strided_slice %12 {offsets = [0, 0], sizes = [8, 64], strides = [1, 1]} : vector<8x256xf32> to vector<8x64xf32>
    %14 = arith.negf %13 : vector<8x64xf32>
    %15 = math.exp %14 : vector<8x64xf32>
    %cst_13 = arith.constant 1.000000e+00 : f32
    %16 = vector.broadcast %cst_13 : f32 to vector<8x64xf32>
    %17 = arith.addf %16, %15 : vector<8x64xf32>
    %18 = arith.divf %16, %17 : vector<8x64xf32>
    %19 = vector.extract_strided_slice %12 {offsets = [0, 64], sizes = [8, 64], strides = [1, 1]} : vector<8x256xf32> to vector<8x64xf32>
    %20 = arith.negf %19 : vector<8x64xf32>
    %21 = math.exp %20 : vector<8x64xf32>
    %cst_14 = arith.constant 1.000000e+00 : f32
    %22 = vector.broadcast %cst_14 : f32 to vector<8x64xf32>
    %23 = arith.addf %22, %21 : vector<8x64xf32>
    %24 = arith.divf %22, %23 : vector<8x64xf32>
    %25 = vector.extract_strided_slice %12 {offsets = [0, 128], sizes = [8, 64], strides = [1, 1]} : vector<8x256xf32> to vector<8x64xf32>
    %26 = math.tanh %25 : vector<8x64xf32>
    %27 = vector.extract_strided_slice %12 {offsets = [0, 192], sizes = [8, 64], strides = [1, 1]} : vector<8x256xf32> to vector<8x64xf32>
    %28 = arith.negf %27 : vector<8x64xf32>
    %29 = math.exp %28 : vector<8x64xf32>
    %cst_15 = arith.constant 1.000000e+00 : f32
    %30 = vector.broadcast %cst_15 : f32 to vector<8x64xf32>
    %31 = arith.addf %30, %29 : vector<8x64xf32>
    %32 = arith.divf %30, %31 : vector<8x64xf32>
    %33 = arith.mulf %24, %7 : vector<8x64xf32>
    %34 = arith.mulf %18, %26 : vector<8x64xf32>
    %35 = arith.addf %33, %34 : vector<8x64xf32>
    %36 = math.tanh %35 : vector<8x64xf32>
    %37 = arith.mulf %32, %36 : vector<8x64xf32>
    %38 = arith.truncf %37 : vector<8x64xf32> to vector<8x64xbf16>
    %c0_16 = arith.constant 0 : index
    %c0_17 = arith.constant 0 : index
    %39 = vector.load %arg2[%c0_16, %c0_17] : memref<64x256xbf16, #tpu.memory_space<vmem>>, vector<64x256xbf16>
    %cst_18 = arith.constant dense<0.000000e+00> : vector<8x256xf32>
    %40 = tpu.matmul %38, %39, %cst_18 {dimension_numbers = #tpu.dot_dimension_numbers<[1], [0], [0], [1], [0, 0, 1, 1], [], []>} : vector<8x64xbf16>, vector<64x256xbf16>, vector<8x256xf32> -> vector<8x256xf32>
    %c8 = arith.constant 8 : index
    %c0_19 = arith.constant 0 : index
    %41 = vector.load %arg19[%c8, %c0_19] : memref<64x256xf32, #tpu.memory_space<vmem>>, vector<8x256xf32>
    %42 = arith.addf %41, %40 : vector<8x256xf32>
    %43 = vector.extract_strided_slice %42 {offsets = [0, 0], sizes = [8, 64], strides = [1, 1]} : vector<8x256xf32> to vector<8x64xf32>
    %44 = arith.negf %43 : vector<8x64xf32>
    %45 = math.exp %44 : vector<8x64xf32>
    %cst_20 = arith.constant 1.000000e+00 : f32
    %46 = vector.broadcast %cst_20 : f32 to vector<8x64xf32>
    %47 = arith.addf %46, %45 : vector<8x64xf32>
    %48 = arith.divf %46, %47 : vector<8x64xf32>
    %49 = vector.extract_strided_slice %42 {offsets = [0, 64], sizes = [8, 64], strides = [1, 1]} : vector<8x256xf32> to vector<8x64xf32>
    %50 = arith.negf %49 : vector<8x64xf32>
    %51 = math.exp %50 : vector<8x64xf32>
    %cst_21 = arith.constant 1.000000e+00 : f32
    %52 = vector.broadcast %cst_21 : f32 to vector<8x64xf32>
    %53 = arith.addf %52, %51 : vector<8x64xf32>
    %54 = arith.divf %52, %53 : vector<8x64xf32>
    %55 = vector.extract_strided_slice %42 {offsets = [0, 128], sizes = [8, 64], strides = [1, 1]} : vector<8x256xf32> to vector<8x64xf32>
    %56 = math.tanh %55 : vector<8x64xf32>
    %57 = vector.extract_strided_slice %42 {offsets = [0, 192], sizes = [8, 64], strides = [1, 1]} : vector<8x256xf32> to vector<8x64xf32>
    %58 = arith.negf %57 : vector<8x64xf32>
    %59 = math.exp %58 : vector<8x64xf32>
    %cst_22 = arith.constant 1.000000e+00 : f32
    %60 = vector.broadcast %cst_22 : f32 to vector<8x64xf32>
    %61 = arith.addf %60, %59 : vector<8x64xf32>
    %62 = arith.divf %60, %61 : vector<8x64xf32>
    %63 = arith.mulf %54, %35 : vector<8x64xf32>
    %64 = arith.mulf %48, %56 : vector<8x64xf32>
    %65 = arith.addf %63, %64 : vector<8x64xf32>
    %66 = math.tanh %65 : vector<8x64xf32>
    %67 = arith.mulf %62, %66 : vector<8x64xf32>
    %68 = arith.truncf %7 : vector<8x64xf32> to vector<8x64xbf16>
    %c0_23 = arith.constant 0 : index
    %c0_24 = arith.constant 0 : index
    %69 = vector.load %arg5[%c0_23, %c0_24] : memref<64x256xbf16, #tpu.memory_space<vmem>>, vector<64x256xbf16>
    %cst_25 = arith.constant dense<0.000000e+00> : vector<8x256xf32>
    %70 = tpu.matmul %68, %69, %cst_25 {dimension_numbers = #tpu.dot_dimension_numbers<[1], [0], [0], [1], [0, 0, 1, 1], [], []>} : vector<8x64xbf16>, vector<64x256xbf16>, vector<8x256xf32> -> vector<8x256xf32>
    %71 = arith.truncf %37 : vector<8x64xf32> to vector<8x64xbf16>
    %c0_26 = arith.constant 0 : index
    %c0_27 = arith.constant 0 : index
    %72 = vector.load %arg4[%c0_26, %c0_27] : memref<64x256xbf16, #tpu.memory_space<vmem>>, vector<64x256xbf16>
    %cst_28 = arith.constant dense<0.000000e+00> : vector<8x256xf32>
    %73 = tpu.matmul %71, %72, %cst_28 {dimension_numbers = #tpu.dot_dimension_numbers<[1], [0], [0], [1], [0, 0, 1, 1], [], []>} : vector<8x64xbf16>, vector<64x256xbf16>, vector<8x256xf32> -> vector<8x256xf32>
    %74 = arith.addf %73, %70 : vector<8x256xf32>
    %c0_29 = arith.constant 0 : index
    %c0_30 = arith.constant 0 : index
    %75 = vector.load %arg6[%c0_29, %c0_30] : memref<1x256xf32, #tpu.memory_space<vmem>>, vector<1x256xf32>
    %76 = vector.broadcast %75 : vector<1x256xf32> to vector<8x256xf32>
    %77 = arith.addf %74, %76 : vector<8x256xf32>
    %78 = vector.extract_strided_slice %77 {offsets = [0, 0], sizes = [8, 64], strides = [1, 1]} : vector<8x256xf32> to vector<8x64xf32>
    %79 = arith.negf %78 : vector<8x64xf32>
    %80 = math.exp %79 : vector<8x64xf32>
    %cst_31 = arith.constant 1.000000e+00 : f32
    %81 = vector.broadcast %cst_31 : f32 to vector<8x64xf32>
    %82 = arith.addf %81, %80 : vector<8x64xf32>
    %83 = arith.divf %81, %82 : vector<8x64xf32>
    %84 = vector.extract_strided_slice %77 {offsets = [0, 64], sizes = [8, 64], strides = [1, 1]} : vector<8x256xf32> to vector<8x64xf32>
    %85 = arith.negf %84 : vector<8x64xf32>
    %86 = math.exp %85 : vector<8x64xf32>
    %cst_32 = arith.constant 1.000000e+00 : f32
    %87 = vector.broadcast %cst_32 : f32 to vector<8x64xf32>
    %88 = arith.addf %87, %86 : vector<8x64xf32>
    %89 = arith.divf %87, %88 : vector<8x64xf32>
    %90 = vector.extract_strided_slice %77 {offsets = [0, 128], sizes = [8, 64], strides = [1, 1]} : vector<8x256xf32> to vector<8x64xf32>
    %91 = math.tanh %90 : vector<8x64xf32>
    %92 = vector.extract_strided_slice %77 {offsets = [0, 192], sizes = [8, 64], strides = [1, 1]} : vector<8x256xf32> to vector<8x64xf32>
    %93 = arith.negf %92 : vector<8x64xf32>
    %94 = math.exp %93 : vector<8x64xf32>
    %cst_33 = arith.constant 1.000000e+00 : f32
    %95 = vector.broadcast %cst_33 : f32 to vector<8x64xf32>
    %96 = arith.addf %95, %94 : vector<8x64xf32>
    %97 = arith.divf %95, %96 : vector<8x64xf32>
    %98 = arith.mulf %89, %7 : vector<8x64xf32>
    %99 = arith.mulf %83, %91 : vector<8x64xf32>
    %100 = arith.addf %98, %99 : vector<8x64xf32>
    %101 = math.tanh %100 : vector<8x64xf32>
    %102 = arith.mulf %97, %101 : vector<8x64xf32>
    %103 = arith.truncf %67 : vector<8x64xf32> to vector<8x64xbf16>
    %c0_34 = arith.constant 0 : index
    %c0_35 = arith.constant 0 : index
    %104 = vector.load %arg2[%c0_34, %c0_35] : memref<64x256xbf16, #tpu.memory_space<vmem>>, vector<64x256xbf16>
    %cst_36 = arith.constant dense<0.000000e+00> : vector<8x256xf32>
    %105 = tpu.matmul %103, %104, %cst_36 {dimension_numbers = #tpu.dot_dimension_numbers<[1], [0], [0], [1], [0, 0, 1, 1], [], []>} : vector<8x64xbf16>, vector<64x256xbf16>, vector<8x256xf32> -> vector<8x256xf32>
    %c16 = arith.constant 16 : index
    %c0_37 = arith.constant 0 : index
    %106 = vector.load %arg19[%c16, %c0_37] : memref<64x256xf32, #tpu.memory_space<vmem>>, vector<8x256xf32>
    %107 = arith.addf %106, %105 : vector<8x256xf32>
    %108 = vector.extract_strided_slice %107 {offsets = [0, 0], sizes = [8, 64], strides = [1, 1]} : vector<8x256xf32> to vector<8x64xf32>
    %109 = arith.negf %108 : vector<8x64xf32>
    %110 = math.exp %109 : vector<8x64xf32>
    %cst_38 = arith.constant 1.000000e+00 : f32
    %111 = vector.broadcast %cst_38 : f32 to vector<8x64xf32>
    %112 = arith.addf %111, %110 : vector<8x64xf32>
    %113 = arith.divf %111, %112 : vector<8x64xf32>
    %114 = vector.extract_strided_slice %107 {offsets = [0, 64], sizes = [8, 64], strides = [1, 1]} : vector<8x256xf32> to vector<8x64xf32>
    %115 = arith.negf %114 : vector<8x64xf32>
    %116 = math.exp %115 : vector<8x64xf32>
    %cst_39 = arith.constant 1.000000e+00 : f32
    %117 = vector.broadcast %cst_39 : f32 to vector<8x64xf32>
    %118 = arith.addf %117, %116 : vector<8x64xf32>
    %119 = arith.divf %117, %118 : vector<8x64xf32>
    %120 = vector.extract_strided_slice %107 {offsets = [0, 128], sizes = [8, 64], strides = [1, 1]} : vector<8x256xf32> to vector<8x64xf32>
    %121 = math.tanh %120 : vector<8x64xf32>
    %122 = vector.extract_strided_slice %107 {offsets = [0, 192], sizes = [8, 64], strides = [1, 1]} : vector<8x256xf32> to vector<8x64xf32>
    %123 = arith.negf %122 : vector<8x64xf32>
    %124 = math.exp %123 : vector<8x64xf32>
    %cst_40 = arith.constant 1.000000e+00 : f32
    %125 = vector.broadcast %cst_40 : f32 to vector<8x64xf32>
    %126 = arith.addf %125, %124 : vector<8x64xf32>
    %127 = arith.divf %125, %126 : vector<8x64xf32>
    %128 = arith.mulf %119, %65 : vector<8x64xf32>
    %129 = arith.mulf %113, %121 : vector<8x64xf32>
    %130 = arith.addf %128, %129 : vector<8x64xf32>
    %131 = math.tanh %130 : vector<8x64xf32>
    %132 = arith.mulf %127, %131 : vector<8x64xf32>
    %133 = arith.truncf %102 : vector<8x64xf32> to vector<8x64xbf16>
    %c0_41 = arith.constant 0 : index
    %c0_42 = arith.constant 0 : index
    %134 = vector.load %arg5[%c0_41, %c0_42] : memref<64x256xbf16, #tpu.memory_space<vmem>>, vector<64x256xbf16>
    %cst_43 = arith.constant dense<0.000000e+00> : vector<8x256xf32>
    %135 = tpu.matmul %133, %134, %cst_43 {dimension_numbers = #tpu.dot_dimension_numbers<[1], [0], [0], [1], [0, 0, 1, 1], [], []>} : vector<8x64xbf16>, vector<64x256xbf16>, vector<8x256xf32> -> vector<8x256xf32>
    %136 = arith.truncf %67 : vector<8x64xf32> to vector<8x64xbf16>
    %c0_44 = arith.constant 0 : index
    %c0_45 = arith.constant 0 : index
    %137 = vector.load %arg4[%c0_44, %c0_45] : memref<64x256xbf16, #tpu.memory_space<vmem>>, vector<64x256xbf16>
    %cst_46 = arith.constant dense<0.000000e+00> : vector<8x256xf32>
    %138 = tpu.matmul %136, %137, %cst_46 {dimension_numbers = #tpu.dot_dimension_numbers<[1], [0], [0], [1], [0, 0, 1, 1], [], []>} : vector<8x64xbf16>, vector<64x256xbf16>, vector<8x256xf32> -> vector<8x256xf32>
    %139 = arith.addf %138, %135 : vector<8x256xf32>
    %c0_47 = arith.constant 0 : index
    %c0_48 = arith.constant 0 : index
    %140 = vector.load %arg6[%c0_47, %c0_48] : memref<1x256xf32, #tpu.memory_space<vmem>>, vector<1x256xf32>
    %141 = vector.broadcast %140 : vector<1x256xf32> to vector<8x256xf32>
    %142 = arith.addf %139, %141 : vector<8x256xf32>
    %143 = vector.extract_strided_slice %142 {offsets = [0, 0], sizes = [8, 64], strides = [1, 1]} : vector<8x256xf32> to vector<8x64xf32>
    %144 = arith.negf %143 : vector<8x64xf32>
    %145 = math.exp %144 : vector<8x64xf32>
    %cst_49 = arith.constant 1.000000e+00 : f32
    %146 = vector.broadcast %cst_49 : f32 to vector<8x64xf32>
    %147 = arith.addf %146, %145 : vector<8x64xf32>
    %148 = arith.divf %146, %147 : vector<8x64xf32>
    %149 = vector.extract_strided_slice %142 {offsets = [0, 64], sizes = [8, 64], strides = [1, 1]} : vector<8x256xf32> to vector<8x64xf32>
    %150 = arith.negf %149 : vector<8x64xf32>
    %151 = math.exp %150 : vector<8x64xf32>
    %cst_50 = arith.constant 1.000000e+00 : f32
    %152 = vector.broadcast %cst_50 : f32 to vector<8x64xf32>
    %153 = arith.addf %152, %151 : vector<8x64xf32>
    %154 = arith.divf %152, %153 : vector<8x64xf32>
    %155 = vector.extract_strided_slice %142 {offsets = [0, 128], sizes = [8, 64], strides = [1, 1]} : vector<8x256xf32> to vector<8x64xf32>
    %156 = math.tanh %155 : vector<8x64xf32>
    %157 = vector.extract_strided_slice %142 {offsets = [0, 192], sizes = [8, 64], strides = [1, 1]} : vector<8x256xf32> to vector<8x64xf32>
    %158 = arith.negf %157 : vector<8x64xf32>
    %159 = math.exp %158 : vector<8x64xf32>
    %cst_51 = arith.constant 1.000000e+00 : f32
    %160 = vector.broadcast %cst_51 : f32 to vector<8x64xf32>
    %161 = arith.addf %160, %159 : vector<8x64xf32>
    %162 = arith.divf %160, %161 : vector<8x64xf32>
    %163 = arith.mulf %154, %100 : vector<8x64xf32>
    %164 = arith.mulf %148, %156 : vector<8x64xf32>
    %165 = arith.addf %163, %164 : vector<8x64xf32>
    %166 = math.tanh %165 : vector<8x64xf32>
    %167 = arith.mulf %162, %166 : vector<8x64xf32>
    %168 = arith.truncf %7 : vector<8x64xf32> to vector<8x64xbf16>
    %c0_52 = arith.constant 0 : index
    %c0_53 = arith.constant 0 : index
    %169 = vector.load %arg8[%c0_52, %c0_53] : memref<64x256xbf16, #tpu.memory_space<vmem>>, vector<64x256xbf16>
    %cst_54 = arith.constant dense<0.000000e+00> : vector<8x256xf32>
    %170 = tpu.matmul %168, %169, %cst_54 {dimension_numbers = #tpu.dot_dimension_numbers<[1], [0], [0], [1], [0, 0, 1, 1], [], []>} : vector<8x64xbf16>, vector<64x256xbf16>, vector<8x256xf32> -> vector<8x256xf32>
    %171 = arith.truncf %102 : vector<8x64xf32> to vector<8x64xbf16>
    %c0_55 = arith.constant 0 : index
    %c0_56 = arith.constant 0 : index
    %172 = vector.load %arg7[%c0_55, %c0_56] : memref<64x256xbf16, #tpu.memory_space<vmem>>, vector<64x256xbf16>
    %cst_57 = arith.constant dense<0.000000e+00> : vector<8x256xf32>
    %173 = tpu.matmul %171, %172, %cst_57 {dimension_numbers = #tpu.dot_dimension_numbers<[1], [0], [0], [1], [0, 0, 1, 1], [], []>} : vector<8x64xbf16>, vector<64x256xbf16>, vector<8x256xf32> -> vector<8x256xf32>
    %174 = arith.addf %173, %170 : vector<8x256xf32>
    %c0_58 = arith.constant 0 : index
    %c0_59 = arith.constant 0 : index
    %175 = vector.load %arg9[%c0_58, %c0_59] : memref<1x256xf32, #tpu.memory_space<vmem>>, vector<1x256xf32>
    %176 = vector.broadcast %175 : vector<1x256xf32> to vector<8x256xf32>
    %177 = arith.addf %174, %176 : vector<8x256xf32>
    %178 = vector.extract_strided_slice %177 {offsets = [0, 0], sizes = [8, 64], strides = [1, 1]} : vector<8x256xf32> to vector<8x64xf32>
    %179 = arith.negf %178 : vector<8x64xf32>
    %180 = math.exp %179 : vector<8x64xf32>
    %cst_60 = arith.constant 1.000000e+00 : f32
    %181 = vector.broadcast %cst_60 : f32 to vector<8x64xf32>
    %182 = arith.addf %181, %180 : vector<8x64xf32>
    %183 = arith.divf %181, %182 : vector<8x64xf32>
    %184 = vector.extract_strided_slice %177 {offsets = [0, 64], sizes = [8, 64], strides = [1, 1]} : vector<8x256xf32> to vector<8x64xf32>
    %185 = arith.negf %184 : vector<8x64xf32>
    %186 = math.exp %185 : vector<8x64xf32>
    %cst_61 = arith.constant 1.000000e+00 : f32
    %187 = vector.broadcast %cst_61 : f32 to vector<8x64xf32>
    %188 = arith.addf %187, %186 : vector<8x64xf32>
    %189 = arith.divf %187, %188 : vector<8x64xf32>
    %190 = vector.extract_strided_slice %177 {offsets = [0, 128], sizes = [8, 64], strides = [1, 1]} : vector<8x256xf32> to vector<8x64xf32>
    %191 = math.tanh %190 : vector<8x64xf32>
    %192 = vector.extract_strided_slice %177 {offsets = [0, 192], sizes = [8, 64], strides = [1, 1]} : vector<8x256xf32> to vector<8x64xf32>
    %193 = arith.negf %192 : vector<8x64xf32>
    %194 = math.exp %193 : vector<8x64xf32>
    %cst_62 = arith.constant 1.000000e+00 : f32
    %195 = vector.broadcast %cst_62 : f32 to vector<8x64xf32>
    %196 = arith.addf %195, %194 : vector<8x64xf32>
    %197 = arith.divf %195, %196 : vector<8x64xf32>
    %198 = arith.mulf %189, %7 : vector<8x64xf32>
    %199 = arith.mulf %183, %191 : vector<8x64xf32>
    %200 = arith.addf %198, %199 : vector<8x64xf32>
    %201 = math.tanh %200 : vector<8x64xf32>
    %202 = arith.mulf %197, %201 : vector<8x64xf32>
    %203 = arith.truncf %132 : vector<8x64xf32> to vector<8x64xbf16>
    %c0_63 = arith.constant 0 : index
    %c0_64 = arith.constant 0 : index
    %204 = vector.load %arg2[%c0_63, %c0_64] : memref<64x256xbf16, #tpu.memory_space<vmem>>, vector<64x256xbf16>
    %cst_65 = arith.constant dense<0.000000e+00> : vector<8x256xf32>
    %205 = tpu.matmul %203, %204, %cst_65 {dimension_numbers = #tpu.dot_dimension_numbers<[1], [0], [0], [1], [0, 0, 1, 1], [], []>} : vector<8x64xbf16>, vector<64x256xbf16>, vector<8x256xf32> -> vector<8x256xf32>
    %c24 = arith.constant 24 : index
    %c0_66 = arith.constant 0 : index
    %206 = vector.load %arg19[%c24, %c0_66] : memref<64x256xf32, #tpu.memory_space<vmem>>, vector<8x256xf32>
    %207 = arith.addf %206, %205 : vector<8x256xf32>
    %208 = vector.extract_strided_slice %207 {offsets = [0, 0], sizes = [8, 64], strides = [1, 1]} : vector<8x256xf32> to vector<8x64xf32>
    %209 = arith.negf %208 : vector<8x64xf32>
    %210 = math.exp %209 : vector<8x64xf32>
    %cst_67 = arith.constant 1.000000e+00 : f32
    %211 = vector.broadcast %cst_67 : f32 to vector<8x64xf32>
    %212 = arith.addf %211, %210 : vector<8x64xf32>
    %213 = arith.divf %211, %212 : vector<8x64xf32>
    %214 = vector.extract_strided_slice %207 {offsets = [0, 64], sizes = [8, 64], strides = [1, 1]} : vector<8x256xf32> to vector<8x64xf32>
    %215 = arith.negf %214 : vector<8x64xf32>
    %216 = math.exp %215 : vector<8x64xf32>
    %cst_68 = arith.constant 1.000000e+00 : f32
    %217 = vector.broadcast %cst_68 : f32 to vector<8x64xf32>
    %218 = arith.addf %217, %216 : vector<8x64xf32>
    %219 = arith.divf %217, %218 : vector<8x64xf32>
    %220 = vector.extract_strided_slice %207 {offsets = [0, 128], sizes = [8, 64], strides = [1, 1]} : vector<8x256xf32> to vector<8x64xf32>
    %221 = math.tanh %220 : vector<8x64xf32>
    %222 = vector.extract_strided_slice %207 {offsets = [0, 192], sizes = [8, 64], strides = [1, 1]} : vector<8x256xf32> to vector<8x64xf32>
    %223 = arith.negf %222 : vector<8x64xf32>
    %224 = math.exp %223 : vector<8x64xf32>
    %cst_69 = arith.constant 1.000000e+00 : f32
    %225 = vector.broadcast %cst_69 : f32 to vector<8x64xf32>
    %226 = arith.addf %225, %224 : vector<8x64xf32>
    %227 = arith.divf %225, %226 : vector<8x64xf32>
    %228 = arith.mulf %219, %130 : vector<8x64xf32>
    %229 = arith.mulf %213, %221 : vector<8x64xf32>
    %230 = arith.addf %228, %229 : vector<8x64xf32>
    %231 = math.tanh %230 : vector<8x64xf32>
    %232 = arith.mulf %227, %231 : vector<8x64xf32>
    %233 = arith.truncf %167 : vector<8x64xf32> to vector<8x64xbf16>
    %c0_70 = arith.constant 0 : index
    %c0_71 = arith.constant 0 : index
    %234 = vector.load %arg5[%c0_70, %c0_71] : memref<64x256xbf16, #tpu.memory_space<vmem>>, vector<64x256xbf16>
    %cst_72 = arith.constant dense<0.000000e+00> : vector<8x256xf32>
    %235 = tpu.matmul %233, %234, %cst_72 {dimension_numbers = #tpu.dot_dimension_numbers<[1], [0], [0], [1], [0, 0, 1, 1], [], []>} : vector<8x64xbf16>, vector<64x256xbf16>, vector<8x256xf32> -> vector<8x256xf32>
    %236 = arith.truncf %132 : vector<8x64xf32> to vector<8x64xbf16>
    %c0_73 = arith.constant 0 : index
    %c0_74 = arith.constant 0 : index
    %237 = vector.load %arg4[%c0_73, %c0_74] : memref<64x256xbf16, #tpu.memory_space<vmem>>, vector<64x256xbf16>
    %cst_75 = arith.constant dense<0.000000e+00> : vector<8x256xf32>
    %238 = tpu.matmul %236, %237, %cst_75 {dimension_numbers = #tpu.dot_dimension_numbers<[1], [0], [0], [1], [0, 0, 1, 1], [], []>} : vector<8x64xbf16>, vector<64x256xbf16>, vector<8x256xf32> -> vector<8x256xf32>
    %239 = arith.addf %238, %235 : vector<8x256xf32>
    %c0_76 = arith.constant 0 : index
    %c0_77 = arith.constant 0 : index
    %240 = vector.load %arg6[%c0_76, %c0_77] : memref<1x256xf32, #tpu.memory_space<vmem>>, vector<1x256xf32>
    %241 = vector.broadcast %240 : vector<1x256xf32> to vector<8x256xf32>
    %242 = arith.addf %239, %241 : vector<8x256xf32>
    %243 = vector.extract_strided_slice %242 {offsets = [0, 0], sizes = [8, 64], strides = [1, 1]} : vector<8x256xf32> to vector<8x64xf32>
    %244 = arith.negf %243 : vector<8x64xf32>
    %245 = math.exp %244 : vector<8x64xf32>
    %cst_78 = arith.constant 1.000000e+00 : f32
    %246 = vector.broadcast %cst_78 : f32 to vector<8x64xf32>
    %247 = arith.addf %246, %245 : vector<8x64xf32>
    %248 = arith.divf %246, %247 : vector<8x64xf32>
    %249 = vector.extract_strided_slice %242 {offsets = [0, 64], sizes = [8, 64], strides = [1, 1]} : vector<8x256xf32> to vector<8x64xf32>
    %250 = arith.negf %249 : vector<8x64xf32>
    %251 = math.exp %250 : vector<8x64xf32>
    %cst_79 = arith.constant 1.000000e+00 : f32
    %252 = vector.broadcast %cst_79 : f32 to vector<8x64xf32>
    %253 = arith.addf %252, %251 : vector<8x64xf32>
    %254 = arith.divf %252, %253 : vector<8x64xf32>
    %255 = vector.extract_strided_slice %242 {offsets = [0, 128], sizes = [8, 64], strides = [1, 1]} : vector<8x256xf32> to vector<8x64xf32>
    %256 = math.tanh %255 : vector<8x64xf32>
    %257 = vector.extract_strided_slice %242 {offsets = [0, 192], sizes = [8, 64], strides = [1, 1]} : vector<8x256xf32> to vector<8x64xf32>
    %258 = arith.negf %257 : vector<8x64xf32>
    %259 = math.exp %258 : vector<8x64xf32>
    %cst_80 = arith.constant 1.000000e+00 : f32
    %260 = vector.broadcast %cst_80 : f32 to vector<8x64xf32>
    %261 = arith.addf %260, %259 : vector<8x64xf32>
    %262 = arith.divf %260, %261 : vector<8x64xf32>
    %263 = arith.mulf %254, %165 : vector<8x64xf32>
    %264 = arith.mulf %248, %256 : vector<8x64xf32>
    %265 = arith.addf %263, %264 : vector<8x64xf32>
    %266 = math.tanh %265 : vector<8x64xf32>
    %267 = arith.mulf %262, %266 : vector<8x64xf32>
    %268 = arith.truncf %202 : vector<8x64xf32> to vector<8x64xbf16>
    %c0_81 = arith.constant 0 : index
    %c0_82 = arith.constant 0 : index
    %269 = vector.load %arg8[%c0_81, %c0_82] : memref<64x256xbf16, #tpu.memory_space<vmem>>, vector<64x256xbf16>
    %cst_83 = arith.constant dense<0.000000e+00> : vector<8x256xf32>
    %270 = tpu.matmul %268, %269, %cst_83 {dimension_numbers = #tpu.dot_dimension_numbers<[1], [0], [0], [1], [0, 0, 1, 1], [], []>} : vector<8x64xbf16>, vector<64x256xbf16>, vector<8x256xf32> -> vector<8x256xf32>
    %271 = arith.truncf %167 : vector<8x64xf32> to vector<8x64xbf16>
    %c0_84 = arith.constant 0 : index
    %c0_85 = arith.constant 0 : index
    %272 = vector.load %arg7[%c0_84, %c0_85] : memref<64x256xbf16, #tpu.memory_space<vmem>>, vector<64x256xbf16>
    %cst_86 = arith.constant dense<0.000000e+00> : vector<8x256xf32>
    %273 = tpu.matmul %271, %272, %cst_86 {dimension_numbers = #tpu.dot_dimension_numbers<[1], [0], [0], [1], [0, 0, 1, 1], [], []>} : vector<8x64xbf16>, vector<64x256xbf16>, vector<8x256xf32> -> vector<8x256xf32>
    %274 = arith.addf %273, %270 : vector<8x256xf32>
    %c0_87 = arith.constant 0 : index
    %c0_88 = arith.constant 0 : index
    %275 = vector.load %arg9[%c0_87, %c0_88] : memref<1x256xf32, #tpu.memory_space<vmem>>, vector<1x256xf32>
    %276 = vector.broadcast %275 : vector<1x256xf32> to vector<8x256xf32>
    %277 = arith.addf %274, %276 : vector<8x256xf32>
    %278 = vector.extract_strided_slice %277 {offsets = [0, 0], sizes = [8, 64], strides = [1, 1]} : vector<8x256xf32> to vector<8x64xf32>
    %279 = arith.negf %278 : vector<8x64xf32>
    %280 = math.exp %279 : vector<8x64xf32>
    %cst_89 = arith.constant 1.000000e+00 : f32
    %281 = vector.broadcast %cst_89 : f32 to vector<8x64xf32>
    %282 = arith.addf %281, %280 : vector<8x64xf32>
    %283 = arith.divf %281, %282 : vector<8x64xf32>
    %284 = vector.extract_strided_slice %277 {offsets = [0, 64], sizes = [8, 64], strides = [1, 1]} : vector<8x256xf32> to vector<8x64xf32>
    %285 = arith.negf %284 : vector<8x64xf32>
    %286 = math.exp %285 : vector<8x64xf32>
    %cst_90 = arith.constant 1.000000e+00 : f32
    %287 = vector.broadcast %cst_90 : f32 to vector<8x64xf32>
    %288 = arith.addf %287, %286 : vector<8x64xf32>
    %289 = arith.divf %287, %288 : vector<8x64xf32>
    %290 = vector.extract_strided_slice %277 {offsets = [0, 128], sizes = [8, 64], strides = [1, 1]} : vector<8x256xf32> to vector<8x64xf32>
    %291 = math.tanh %290 : vector<8x64xf32>
    %292 = vector.extract_strided_slice %277 {offsets = [0, 192], sizes = [8, 64], strides = [1, 1]} : vector<8x256xf32> to vector<8x64xf32>
    %293 = arith.negf %292 : vector<8x64xf32>
    %294 = math.exp %293 : vector<8x64xf32>
    %cst_91 = arith.constant 1.000000e+00 : f32
    %295 = vector.broadcast %cst_91 : f32 to vector<8x64xf32>
    %296 = arith.addf %295, %294 : vector<8x64xf32>
    %297 = arith.divf %295, %296 : vector<8x64xf32>
    %298 = arith.mulf %289, %200 : vector<8x64xf32>
    %299 = arith.mulf %283, %291 : vector<8x64xf32>
    %300 = arith.addf %298, %299 : vector<8x64xf32>
    %301 = math.tanh %300 : vector<8x64xf32>
    %302 = arith.mulf %297, %301 : vector<8x64xf32>
    %303 = arith.truncf %232 : vector<8x64xf32> to vector<8x64xbf16>
    %c0_92 = arith.constant 0 : index
    %c0_93 = arith.constant 0 : index
    %304 = vector.load %arg2[%c0_92, %c0_93] : memref<64x256xbf16, #tpu.memory_space<vmem>>, vector<64x256xbf16>
    %cst_94 = arith.constant dense<0.000000e+00> : vector<8x256xf32>
    %305 = tpu.matmul %303, %304, %cst_94 {dimension_numbers = #tpu.dot_dimension_numbers<[1], [0], [0], [1], [0, 0, 1, 1], [], []>} : vector<8x64xbf16>, vector<64x256xbf16>, vector<8x256xf32> -> vector<8x256xf32>
    %c32 = arith.constant 32 : index
    %c0_95 = arith.constant 0 : index
    %306 = vector.load %arg19[%c32, %c0_95] : memref<64x256xf32, #tpu.memory_space<vmem>>, vector<8x256xf32>
    %307 = arith.addf %306, %305 : vector<8x256xf32>
    %308 = vector.extract_strided_slice %307 {offsets = [0, 0], sizes = [8, 64], strides = [1, 1]} : vector<8x256xf32> to vector<8x64xf32>
    %309 = arith.negf %308 : vector<8x64xf32>
    %310 = math.exp %309 : vector<8x64xf32>
    %cst_96 = arith.constant 1.000000e+00 : f32
    %311 = vector.broadcast %cst_96 : f32 to vector<8x64xf32>
    %312 = arith.addf %311, %310 : vector<8x64xf32>
    %313 = arith.divf %311, %312 : vector<8x64xf32>
    %314 = vector.extract_strided_slice %307 {offsets = [0, 64], sizes = [8, 64], strides = [1, 1]} : vector<8x256xf32> to vector<8x64xf32>
    %315 = arith.negf %314 : vector<8x64xf32>
    %316 = math.exp %315 : vector<8x64xf32>
    %cst_97 = arith.constant 1.000000e+00 : f32
    %317 = vector.broadcast %cst_97 : f32 to vector<8x64xf32>
    %318 = arith.addf %317, %316 : vector<8x64xf32>
    %319 = arith.divf %317, %318 : vector<8x64xf32>
    %320 = vector.extract_strided_slice %307 {offsets = [0, 128], sizes = [8, 64], strides = [1, 1]} : vector<8x256xf32> to vector<8x64xf32>
    %321 = math.tanh %320 : vector<8x64xf32>
    %322 = vector.extract_strided_slice %307 {offsets = [0, 192], sizes = [8, 64], strides = [1, 1]} : vector<8x256xf32> to vector<8x64xf32>
    %323 = arith.negf %322 : vector<8x64xf32>
    %324 = math.exp %323 : vector<8x64xf32>
    %cst_98 = arith.constant 1.000000e+00 : f32
    %325 = vector.broadcast %cst_98 : f32 to vector<8x64xf32>
    %326 = arith.addf %325, %324 : vector<8x64xf32>
    %327 = arith.divf %325, %326 : vector<8x64xf32>
    %328 = arith.mulf %319, %230 : vector<8x64xf32>
    %329 = arith.mulf %313, %321 : vector<8x64xf32>
    %330 = arith.addf %328, %329 : vector<8x64xf32>
    %331 = math.tanh %330 : vector<8x64xf32>
    %332 = arith.mulf %327, %331 : vector<8x64xf32>
    %333 = arith.truncf %267 : vector<8x64xf32> to vector<8x64xbf16>
    %c0_99 = arith.constant 0 : index
    %c0_100 = arith.constant 0 : index
    %334 = vector.load %arg5[%c0_99, %c0_100] : memref<64x256xbf16, #tpu.memory_space<vmem>>, vector<64x256xbf16>
    %cst_101 = arith.constant dense<0.000000e+00> : vector<8x256xf32>
    %335 = tpu.matmul %333, %334, %cst_101 {dimension_numbers = #tpu.dot_dimension_numbers<[1], [0], [0], [1], [0, 0, 1, 1], [], []>} : vector<8x64xbf16>, vector<64x256xbf16>, vector<8x256xf32> -> vector<8x256xf32>
    %336 = arith.truncf %232 : vector<8x64xf32> to vector<8x64xbf16>
    %c0_102 = arith.constant 0 : index
    %c0_103 = arith.constant 0 : index
    %337 = vector.load %arg4[%c0_102, %c0_103] : memref<64x256xbf16, #tpu.memory_space<vmem>>, vector<64x256xbf16>
    %cst_104 = arith.constant dense<0.000000e+00> : vector<8x256xf32>
    %338 = tpu.matmul %336, %337, %cst_104 {dimension_numbers = #tpu.dot_dimension_numbers<[1], [0], [0], [1], [0, 0, 1, 1], [], []>} : vector<8x64xbf16>, vector<64x256xbf16>, vector<8x256xf32> -> vector<8x256xf32>
    %339 = arith.addf %338, %335 : vector<8x256xf32>
    %c0_105 = arith.constant 0 : index
    %c0_106 = arith.constant 0 : index
    %340 = vector.load %arg6[%c0_105, %c0_106] : memref<1x256xf32, #tpu.memory_space<vmem>>, vector<1x256xf32>
    %341 = vector.broadcast %340 : vector<1x256xf32> to vector<8x256xf32>
    %342 = arith.addf %339, %341 : vector<8x256xf32>
    %343 = vector.extract_strided_slice %342 {offsets = [0, 0], sizes = [8, 64], strides = [1, 1]} : vector<8x256xf32> to vector<8x64xf32>
    %344 = arith.negf %343 : vector<8x64xf32>
    %345 = math.exp %344 : vector<8x64xf32>
    %cst_107 = arith.constant 1.000000e+00 : f32
    %346 = vector.broadcast %cst_107 : f32 to vector<8x64xf32>
    %347 = arith.addf %346, %345 : vector<8x64xf32>
    %348 = arith.divf %346, %347 : vector<8x64xf32>
    %349 = vector.extract_strided_slice %342 {offsets = [0, 64], sizes = [8, 64], strides = [1, 1]} : vector<8x256xf32> to vector<8x64xf32>
    %350 = arith.negf %349 : vector<8x64xf32>
    %351 = math.exp %350 : vector<8x64xf32>
    %cst_108 = arith.constant 1.000000e+00 : f32
    %352 = vector.broadcast %cst_108 : f32 to vector<8x64xf32>
    %353 = arith.addf %352, %351 : vector<8x64xf32>
    %354 = arith.divf %352, %353 : vector<8x64xf32>
    %355 = vector.extract_strided_slice %342 {offsets = [0, 128], sizes = [8, 64], strides = [1, 1]} : vector<8x256xf32> to vector<8x64xf32>
    %356 = math.tanh %355 : vector<8x64xf32>
    %357 = vector.extract_strided_slice %342 {offsets = [0, 192], sizes = [8, 64], strides = [1, 1]} : vector<8x256xf32> to vector<8x64xf32>
    %358 = arith.negf %357 : vector<8x64xf32>
    %359 = math.exp %358 : vector<8x64xf32>
    %cst_109 = arith.constant 1.000000e+00 : f32
    %360 = vector.broadcast %cst_109 : f32 to vector<8x64xf32>
    %361 = arith.addf %360, %359 : vector<8x64xf32>
    %362 = arith.divf %360, %361 : vector<8x64xf32>
    %363 = arith.mulf %354, %265 : vector<8x64xf32>
    %364 = arith.mulf %348, %356 : vector<8x64xf32>
    %365 = arith.addf %363, %364 : vector<8x64xf32>
    %366 = math.tanh %365 : vector<8x64xf32>
    %367 = arith.mulf %362, %366 : vector<8x64xf32>
    %368 = arith.truncf %302 : vector<8x64xf32> to vector<8x64xbf16>
    %c0_110 = arith.constant 0 : index
    %c0_111 = arith.constant 0 : index
    %369 = vector.load %arg8[%c0_110, %c0_111] : memref<64x256xbf16, #tpu.memory_space<vmem>>, vector<64x256xbf16>
    %cst_112 = arith.constant dense<0.000000e+00> : vector<8x256xf32>
    %370 = tpu.matmul %368, %369, %cst_112 {dimension_numbers = #tpu.dot_dimension_numbers<[1], [0], [0], [1], [0, 0, 1, 1], [], []>} : vector<8x64xbf16>, vector<64x256xbf16>, vector<8x256xf32> -> vector<8x256xf32>
    %371 = arith.truncf %267 : vector<8x64xf32> to vector<8x64xbf16>
    %c0_113 = arith.constant 0 : index
    %c0_114 = arith.constant 0 : index
    %372 = vector.load %arg7[%c0_113, %c0_114] : memref<64x256xbf16, #tpu.memory_space<vmem>>, vector<64x256xbf16>
    %cst_115 = arith.constant dense<0.000000e+00> : vector<8x256xf32>
    %373 = tpu.matmul %371, %372, %cst_115 {dimension_numbers = #tpu.dot_dimension_numbers<[1], [0], [0], [1], [0, 0, 1, 1], [], []>} : vector<8x64xbf16>, vector<64x256xbf16>, vector<8x256xf32> -> vector<8x256xf32>
    %374 = arith.addf %373, %370 : vector<8x256xf32>
    %c0_116 = arith.constant 0 : index
    %c0_117 = arith.constant 0 : index
    %375 = vector.load %arg9[%c0_116, %c0_117] : memref<1x256xf32, #tpu.memory_space<vmem>>, vector<1x256xf32>
    %376 = vector.broadcast %375 : vector<1x256xf32> to vector<8x256xf32>
    %377 = arith.addf %374, %376 : vector<8x256xf32>
    %378 = vector.extract_strided_slice %377 {offsets = [0, 0], sizes = [8, 64], strides = [1, 1]} : vector<8x256xf32> to vector<8x64xf32>
    %379 = arith.negf %378 : vector<8x64xf32>
    %380 = math.exp %379 : vector<8x64xf32>
    %cst_118 = arith.constant 1.000000e+00 : f32
    %381 = vector.broadcast %cst_118 : f32 to vector<8x64xf32>
    %382 = arith.addf %381, %380 : vector<8x64xf32>
    %383 = arith.divf %381, %382 : vector<8x64xf32>
    %384 = vector.extract_strided_slice %377 {offsets = [0, 64], sizes = [8, 64], strides = [1, 1]} : vector<8x256xf32> to vector<8x64xf32>
    %385 = arith.negf %384 : vector<8x64xf32>
    %386 = math.exp %385 : vector<8x64xf32>
    %cst_119 = arith.constant 1.000000e+00 : f32
    %387 = vector.broadcast %cst_119 : f32 to vector<8x64xf32>
    %388 = arith.addf %387, %386 : vector<8x64xf32>
    %389 = arith.divf %387, %388 : vector<8x64xf32>
    %390 = vector.extract_strided_slice %377 {offsets = [0, 128], sizes = [8, 64], strides = [1, 1]} : vector<8x256xf32> to vector<8x64xf32>
    %391 = math.tanh %390 : vector<8x64xf32>
    %392 = vector.extract_strided_slice %377 {offsets = [0, 192], sizes = [8, 64], strides = [1, 1]} : vector<8x256xf32> to vector<8x64xf32>
    %393 = arith.negf %392 : vector<8x64xf32>
    %394 = math.exp %393 : vector<8x64xf32>
    %cst_120 = arith.constant 1.000000e+00 : f32
    %395 = vector.broadcast %cst_120 : f32 to vector<8x64xf32>
    %396 = arith.addf %395, %394 : vector<8x64xf32>
    %397 = arith.divf %395, %396 : vector<8x64xf32>
    %398 = arith.mulf %389, %300 : vector<8x64xf32>
    %399 = arith.mulf %383, %391 : vector<8x64xf32>
    %400 = arith.addf %398, %399 : vector<8x64xf32>
    %401 = math.tanh %400 : vector<8x64xf32>
    %402 = arith.mulf %397, %401 : vector<8x64xf32>
    %403 = arith.truncf %332 : vector<8x64xf32> to vector<8x64xbf16>
    %c0_121 = arith.constant 0 : index
    %c0_122 = arith.constant 0 : index
    %404 = vector.load %arg2[%c0_121, %c0_122] : memref<64x256xbf16, #tpu.memory_space<vmem>>, vector<64x256xbf16>
    %cst_123 = arith.constant dense<0.000000e+00> : vector<8x256xf32>
    %405 = tpu.matmul %403, %404, %cst_123 {dimension_numbers = #tpu.dot_dimension_numbers<[1], [0], [0], [1], [0, 0, 1, 1], [], []>} : vector<8x64xbf16>, vector<64x256xbf16>, vector<8x256xf32> -> vector<8x256xf32>
    %c40 = arith.constant 40 : index
    %c0_124 = arith.constant 0 : index
    %406 = vector.load %arg19[%c40, %c0_124] : memref<64x256xf32, #tpu.memory_space<vmem>>, vector<8x256xf32>
    %407 = arith.addf %406, %405 : vector<8x256xf32>
    %408 = vector.extract_strided_slice %407 {offsets = [0, 0], sizes = [8, 64], strides = [1, 1]} : vector<8x256xf32> to vector<8x64xf32>
    %409 = arith.negf %408 : vector<8x64xf32>
    %410 = math.exp %409 : vector<8x64xf32>
    %cst_125 = arith.constant 1.000000e+00 : f32
    %411 = vector.broadcast %cst_125 : f32 to vector<8x64xf32>
    %412 = arith.addf %411, %410 : vector<8x64xf32>
    %413 = arith.divf %411, %412 : vector<8x64xf32>
    %414 = vector.extract_strided_slice %407 {offsets = [0, 64], sizes = [8, 64], strides = [1, 1]} : vector<8x256xf32> to vector<8x64xf32>
    %415 = arith.negf %414 : vector<8x64xf32>
    %416 = math.exp %415 : vector<8x64xf32>
    %cst_126 = arith.constant 1.000000e+00 : f32
    %417 = vector.broadcast %cst_126 : f32 to vector<8x64xf32>
    %418 = arith.addf %417, %416 : vector<8x64xf32>
    %419 = arith.divf %417, %418 : vector<8x64xf32>
    %420 = vector.extract_strided_slice %407 {offsets = [0, 128], sizes = [8, 64], strides = [1, 1]} : vector<8x256xf32> to vector<8x64xf32>
    %421 = math.tanh %420 : vector<8x64xf32>
    %422 = vector.extract_strided_slice %407 {offsets = [0, 192], sizes = [8, 64], strides = [1, 1]} : vector<8x256xf32> to vector<8x64xf32>
    %423 = arith.negf %422 : vector<8x64xf32>
    %424 = math.exp %423 : vector<8x64xf32>
    %cst_127 = arith.constant 1.000000e+00 : f32
    %425 = vector.broadcast %cst_127 : f32 to vector<8x64xf32>
    %426 = arith.addf %425, %424 : vector<8x64xf32>
    %427 = arith.divf %425, %426 : vector<8x64xf32>
    %428 = arith.mulf %419, %330 : vector<8x64xf32>
    %429 = arith.mulf %413, %421 : vector<8x64xf32>
    %430 = arith.addf %428, %429 : vector<8x64xf32>
    %431 = math.tanh %430 : vector<8x64xf32>
    %432 = arith.mulf %427, %431 : vector<8x64xf32>
    %433 = arith.truncf %367 : vector<8x64xf32> to vector<8x64xbf16>
    %c0_128 = arith.constant 0 : index
    %c0_129 = arith.constant 0 : index
    %434 = vector.load %arg5[%c0_128, %c0_129] : memref<64x256xbf16, #tpu.memory_space<vmem>>, vector<64x256xbf16>
    %cst_130 = arith.constant dense<0.000000e+00> : vector<8x256xf32>
    %435 = tpu.matmul %433, %434, %cst_130 {dimension_numbers = #tpu.dot_dimension_numbers<[1], [0], [0], [1], [0, 0, 1, 1], [], []>} : vector<8x64xbf16>, vector<64x256xbf16>, vector<8x256xf32> -> vector<8x256xf32>
    %436 = arith.truncf %332 : vector<8x64xf32> to vector<8x64xbf16>
    %c0_131 = arith.constant 0 : index
    %c0_132 = arith.constant 0 : index
    %437 = vector.load %arg4[%c0_131, %c0_132] : memref<64x256xbf16, #tpu.memory_space<vmem>>, vector<64x256xbf16>
    %cst_133 = arith.constant dense<0.000000e+00> : vector<8x256xf32>
    %438 = tpu.matmul %436, %437, %cst_133 {dimension_numbers = #tpu.dot_dimension_numbers<[1], [0], [0], [1], [0, 0, 1, 1], [], []>} : vector<8x64xbf16>, vector<64x256xbf16>, vector<8x256xf32> -> vector<8x256xf32>
    %439 = arith.addf %438, %435 : vector<8x256xf32>
    %c0_134 = arith.constant 0 : index
    %c0_135 = arith.constant 0 : index
    %440 = vector.load %arg6[%c0_134, %c0_135] : memref<1x256xf32, #tpu.memory_space<vmem>>, vector<1x256xf32>
    %441 = vector.broadcast %440 : vector<1x256xf32> to vector<8x256xf32>
    %442 = arith.addf %439, %441 : vector<8x256xf32>
    %443 = vector.extract_strided_slice %442 {offsets = [0, 0], sizes = [8, 64], strides = [1, 1]} : vector<8x256xf32> to vector<8x64xf32>
    %444 = arith.negf %443 : vector<8x64xf32>
    %445 = math.exp %444 : vector<8x64xf32>
    %cst_136 = arith.constant 1.000000e+00 : f32
    %446 = vector.broadcast %cst_136 : f32 to vector<8x64xf32>
    %447 = arith.addf %446, %445 : vector<8x64xf32>
    %448 = arith.divf %446, %447 : vector<8x64xf32>
    %449 = vector.extract_strided_slice %442 {offsets = [0, 64], sizes = [8, 64], strides = [1, 1]} : vector<8x256xf32> to vector<8x64xf32>
    %450 = arith.negf %449 : vector<8x64xf32>
    %451 = math.exp %450 : vector<8x64xf32>
    %cst_137 = arith.constant 1.000000e+00 : f32
    %452 = vector.broadcast %cst_137 : f32 to vector<8x64xf32>
    %453 = arith.addf %452, %451 : vector<8x64xf32>
    %454 = arith.divf %452, %453 : vector<8x64xf32>
    %455 = vector.extract_strided_slice %442 {offsets = [0, 128], sizes = [8, 64], strides = [1, 1]} : vector<8x256xf32> to vector<8x64xf32>
    %456 = math.tanh %455 : vector<8x64xf32>
    %457 = vector.extract_strided_slice %442 {offsets = [0, 192], sizes = [8, 64], strides = [1, 1]} : vector<8x256xf32> to vector<8x64xf32>
    %458 = arith.negf %457 : vector<8x64xf32>
    %459 = math.exp %458 : vector<8x64xf32>
    %cst_138 = arith.constant 1.000000e+00 : f32
    %460 = vector.broadcast %cst_138 : f32 to vector<8x64xf32>
    %461 = arith.addf %460, %459 : vector<8x64xf32>
    %462 = arith.divf %460, %461 : vector<8x64xf32>
    %463 = arith.mulf %454, %365 : vector<8x64xf32>
    %464 = arith.mulf %448, %456 : vector<8x64xf32>
    %465 = arith.addf %463, %464 : vector<8x64xf32>
    %466 = math.tanh %465 : vector<8x64xf32>
    %467 = arith.mulf %462, %466 : vector<8x64xf32>
    %468 = arith.truncf %402 : vector<8x64xf32> to vector<8x64xbf16>
    %c0_139 = arith.constant 0 : index
    %c0_140 = arith.constant 0 : index
    %469 = vector.load %arg8[%c0_139, %c0_140] : memref<64x256xbf16, #tpu.memory_space<vmem>>, vector<64x256xbf16>
    %cst_141 = arith.constant dense<0.000000e+00> : vector<8x256xf32>
    %470 = tpu.matmul %468, %469, %cst_141 {dimension_numbers = #tpu.dot_dimension_numbers<[1], [0], [0], [1], [0, 0, 1, 1], [], []>} : vector<8x64xbf16>, vector<64x256xbf16>, vector<8x256xf32> -> vector<8x256xf32>
    %471 = arith.truncf %367 : vector<8x64xf32> to vector<8x64xbf16>
    %c0_142 = arith.constant 0 : index
    %c0_143 = arith.constant 0 : index
    %472 = vector.load %arg7[%c0_142, %c0_143] : memref<64x256xbf16, #tpu.memory_space<vmem>>, vector<64x256xbf16>
    %cst_144 = arith.constant dense<0.000000e+00> : vector<8x256xf32>
    %473 = tpu.matmul %471, %472, %cst_144 {dimension_numbers = #tpu.dot_dimension_numbers<[1], [0], [0], [1], [0, 0, 1, 1], [], []>} : vector<8x64xbf16>, vector<64x256xbf16>, vector<8x256xf32> -> vector<8x256xf32>
    %474 = arith.addf %473, %470 : vector<8x256xf32>
    %c0_145 = arith.constant 0 : index
    %c0_146 = arith.constant 0 : index
    %475 = vector.load %arg9[%c0_145, %c0_146] : memref<1x256xf32, #tpu.memory_space<vmem>>, vector<1x256xf32>
    %476 = vector.broadcast %475 : vector<1x256xf32> to vector<8x256xf32>
    %477 = arith.addf %474, %476 : vector<8x256xf32>
    %478 = vector.extract_strided_slice %477 {offsets = [0, 0], sizes = [8, 64], strides = [1, 1]} : vector<8x256xf32> to vector<8x64xf32>
    %479 = arith.negf %478 : vector<8x64xf32>
    %480 = math.exp %479 : vector<8x64xf32>
    %cst_147 = arith.constant 1.000000e+00 : f32
    %481 = vector.broadcast %cst_147 : f32 to vector<8x64xf32>
    %482 = arith.addf %481, %480 : vector<8x64xf32>
    %483 = arith.divf %481, %482 : vector<8x64xf32>
    %484 = vector.extract_strided_slice %477 {offsets = [0, 64], sizes = [8, 64], strides = [1, 1]} : vector<8x256xf32> to vector<8x64xf32>
    %485 = arith.negf %484 : vector<8x64xf32>
    %486 = math.exp %485 : vector<8x64xf32>
    %cst_148 = arith.constant 1.000000e+00 : f32
    %487 = vector.broadcast %cst_148 : f32 to vector<8x64xf32>
    %488 = arith.addf %487, %486 : vector<8x64xf32>
    %489 = arith.divf %487, %488 : vector<8x64xf32>
    %490 = vector.extract_strided_slice %477 {offsets = [0, 128], sizes = [8, 64], strides = [1, 1]} : vector<8x256xf32> to vector<8x64xf32>
    %491 = math.tanh %490 : vector<8x64xf32>
    %492 = vector.extract_strided_slice %477 {offsets = [0, 192], sizes = [8, 64], strides = [1, 1]} : vector<8x256xf32> to vector<8x64xf32>
    %493 = arith.negf %492 : vector<8x64xf32>
    %494 = math.exp %493 : vector<8x64xf32>
    %cst_149 = arith.constant 1.000000e+00 : f32
    %495 = vector.broadcast %cst_149 : f32 to vector<8x64xf32>
    %496 = arith.addf %495, %494 : vector<8x64xf32>
    %497 = arith.divf %495, %496 : vector<8x64xf32>
    %498 = arith.mulf %489, %400 : vector<8x64xf32>
    %499 = arith.mulf %483, %491 : vector<8x64xf32>
    %500 = arith.addf %498, %499 : vector<8x64xf32>
    %501 = math.tanh %500 : vector<8x64xf32>
    %502 = arith.mulf %497, %501 : vector<8x64xf32>
    %503 = arith.truncf %432 : vector<8x64xf32> to vector<8x64xbf16>
    %c0_150 = arith.constant 0 : index
    %c0_151 = arith.constant 0 : index
    %504 = vector.load %arg2[%c0_150, %c0_151] : memref<64x256xbf16, #tpu.memory_space<vmem>>, vector<64x256xbf16>
    %cst_152 = arith.constant dense<0.000000e+00> : vector<8x256xf32>
    %505 = tpu.matmul %503, %504, %cst_152 {dimension_numbers = #tpu.dot_dimension_numbers<[1], [0], [0], [1], [0, 0, 1, 1], [], []>} : vector<8x64xbf16>, vector<64x256xbf16>, vector<8x256xf32> -> vector<8x256xf32>
    %c48 = arith.constant 48 : index
    %c0_153 = arith.constant 0 : index
    %506 = vector.load %arg19[%c48, %c0_153] : memref<64x256xf32, #tpu.memory_space<vmem>>, vector<8x256xf32>
    %507 = arith.addf %506, %505 : vector<8x256xf32>
    %508 = vector.extract_strided_slice %507 {offsets = [0, 0], sizes = [8, 64], strides = [1, 1]} : vector<8x256xf32> to vector<8x64xf32>
    %509 = arith.negf %508 : vector<8x64xf32>
    %510 = math.exp %509 : vector<8x64xf32>
    %cst_154 = arith.constant 1.000000e+00 : f32
    %511 = vector.broadcast %cst_154 : f32 to vector<8x64xf32>
    %512 = arith.addf %511, %510 : vector<8x64xf32>
    %513 = arith.divf %511, %512 : vector<8x64xf32>
    %514 = vector.extract_strided_slice %507 {offsets = [0, 64], sizes = [8, 64], strides = [1, 1]} : vector<8x256xf32> to vector<8x64xf32>
    %515 = arith.negf %514 : vector<8x64xf32>
    %516 = math.exp %515 : vector<8x64xf32>
    %cst_155 = arith.constant 1.000000e+00 : f32
    %517 = vector.broadcast %cst_155 : f32 to vector<8x64xf32>
    %518 = arith.addf %517, %516 : vector<8x64xf32>
    %519 = arith.divf %517, %518 : vector<8x64xf32>
    %520 = vector.extract_strided_slice %507 {offsets = [0, 128], sizes = [8, 64], strides = [1, 1]} : vector<8x256xf32> to vector<8x64xf32>
    %521 = math.tanh %520 : vector<8x64xf32>
    %522 = vector.extract_strided_slice %507 {offsets = [0, 192], sizes = [8, 64], strides = [1, 1]} : vector<8x256xf32> to vector<8x64xf32>
    %523 = arith.negf %522 : vector<8x64xf32>
    %524 = math.exp %523 : vector<8x64xf32>
    %cst_156 = arith.constant 1.000000e+00 : f32
    %525 = vector.broadcast %cst_156 : f32 to vector<8x64xf32>
    %526 = arith.addf %525, %524 : vector<8x64xf32>
    %527 = arith.divf %525, %526 : vector<8x64xf32>
    %528 = arith.mulf %519, %430 : vector<8x64xf32>
    %529 = arith.mulf %513, %521 : vector<8x64xf32>
    %530 = arith.addf %528, %529 : vector<8x64xf32>
    %531 = math.tanh %530 : vector<8x64xf32>
    %532 = arith.mulf %527, %531 : vector<8x64xf32>
    %533 = arith.truncf %467 : vector<8x64xf32> to vector<8x64xbf16>
    %c0_157 = arith.constant 0 : index
    %c0_158 = arith.constant 0 : index
    %534 = vector.load %arg5[%c0_157, %c0_158] : memref<64x256xbf16, #tpu.memory_space<vmem>>, vector<64x256xbf16>
    %cst_159 = arith.constant dense<0.000000e+00> : vector<8x256xf32>
    %535 = tpu.matmul %533, %534, %cst_159 {dimension_numbers = #tpu.dot_dimension_numbers<[1], [0], [0], [1], [0, 0, 1, 1], [], []>} : vector<8x64xbf16>, vector<64x256xbf16>, vector<8x256xf32> -> vector<8x256xf32>
    %536 = arith.truncf %432 : vector<8x64xf32> to vector<8x64xbf16>
    %c0_160 = arith.constant 0 : index
    %c0_161 = arith.constant 0 : index
    %537 = vector.load %arg4[%c0_160, %c0_161] : memref<64x256xbf16, #tpu.memory_space<vmem>>, vector<64x256xbf16>
    %cst_162 = arith.constant dense<0.000000e+00> : vector<8x256xf32>
    %538 = tpu.matmul %536, %537, %cst_162 {dimension_numbers = #tpu.dot_dimension_numbers<[1], [0], [0], [1], [0, 0, 1, 1], [], []>} : vector<8x64xbf16>, vector<64x256xbf16>, vector<8x256xf32> -> vector<8x256xf32>
    %539 = arith.addf %538, %535 : vector<8x256xf32>
    %c0_163 = arith.constant 0 : index
    %c0_164 = arith.constant 0 : index
    %540 = vector.load %arg6[%c0_163, %c0_164] : memref<1x256xf32, #tpu.memory_space<vmem>>, vector<1x256xf32>
    %541 = vector.broadcast %540 : vector<1x256xf32> to vector<8x256xf32>
    %542 = arith.addf %539, %541 : vector<8x256xf32>
    %543 = vector.extract_strided_slice %542 {offsets = [0, 0], sizes = [8, 64], strides = [1, 1]} : vector<8x256xf32> to vector<8x64xf32>
    %544 = arith.negf %543 : vector<8x64xf32>
    %545 = math.exp %544 : vector<8x64xf32>
    %cst_165 = arith.constant 1.000000e+00 : f32
    %546 = vector.broadcast %cst_165 : f32 to vector<8x64xf32>
    %547 = arith.addf %546, %545 : vector<8x64xf32>
    %548 = arith.divf %546, %547 : vector<8x64xf32>
    %549 = vector.extract_strided_slice %542 {offsets = [0, 64], sizes = [8, 64], strides = [1, 1]} : vector<8x256xf32> to vector<8x64xf32>
    %550 = arith.negf %549 : vector<8x64xf32>
    %551 = math.exp %550 : vector<8x64xf32>
    %cst_166 = arith.constant 1.000000e+00 : f32
    %552 = vector.broadcast %cst_166 : f32 to vector<8x64xf32>
    %553 = arith.addf %552, %551 : vector<8x64xf32>
    %554 = arith.divf %552, %553 : vector<8x64xf32>
    %555 = vector.extract_strided_slice %542 {offsets = [0, 128], sizes = [8, 64], strides = [1, 1]} : vector<8x256xf32> to vector<8x64xf32>
    %556 = math.tanh %555 : vector<8x64xf32>
    %557 = vector.extract_strided_slice %542 {offsets = [0, 192], sizes = [8, 64], strides = [1, 1]} : vector<8x256xf32> to vector<8x64xf32>
    %558 = arith.negf %557 : vector<8x64xf32>
    %559 = math.exp %558 : vector<8x64xf32>
    %cst_167 = arith.constant 1.000000e+00 : f32
    %560 = vector.broadcast %cst_167 : f32 to vector<8x64xf32>
    %561 = arith.addf %560, %559 : vector<8x64xf32>
    %562 = arith.divf %560, %561 : vector<8x64xf32>
    %563 = arith.mulf %554, %465 : vector<8x64xf32>
    %564 = arith.mulf %548, %556 : vector<8x64xf32>
    %565 = arith.addf %563, %564 : vector<8x64xf32>
    %566 = math.tanh %565 : vector<8x64xf32>
    %567 = arith.mulf %562, %566 : vector<8x64xf32>
    %568 = arith.truncf %502 : vector<8x64xf32> to vector<8x64xbf16>
    %c0_168 = arith.constant 0 : index
    %c0_169 = arith.constant 0 : index
    %569 = vector.load %arg8[%c0_168, %c0_169] : memref<64x256xbf16, #tpu.memory_space<vmem>>, vector<64x256xbf16>
    %cst_170 = arith.constant dense<0.000000e+00> : vector<8x256xf32>
    %570 = tpu.matmul %568, %569, %cst_170 {dimension_numbers = #tpu.dot_dimension_numbers<[1], [0], [0], [1], [0, 0, 1, 1], [], []>} : vector<8x64xbf16>, vector<64x256xbf16>, vector<8x256xf32> -> vector<8x256xf32>
    %571 = arith.truncf %467 : vector<8x64xf32> to vector<8x64xbf16>
    %c0_171 = arith.constant 0 : index
    %c0_172 = arith.constant 0 : index
    %572 = vector.load %arg7[%c0_171, %c0_172] : memref<64x256xbf16, #tpu.memory_space<vmem>>, vector<64x256xbf16>
    %cst_173 = arith.constant dense<0.000000e+00> : vector<8x256xf32>
    %573 = tpu.matmul %571, %572, %cst_173 {dimension_numbers = #tpu.dot_dimension_numbers<[1], [0], [0], [1], [0, 0, 1, 1], [], []>} : vector<8x64xbf16>, vector<64x256xbf16>, vector<8x256xf32> -> vector<8x256xf32>
    %574 = arith.addf %573, %570 : vector<8x256xf32>
    %c0_174 = arith.constant 0 : index
    %c0_175 = arith.constant 0 : index
    %575 = vector.load %arg9[%c0_174, %c0_175] : memref<1x256xf32, #tpu.memory_space<vmem>>, vector<1x256xf32>
    %576 = vector.broadcast %575 : vector<1x256xf32> to vector<8x256xf32>
    %577 = arith.addf %574, %576 : vector<8x256xf32>
    %578 = vector.extract_strided_slice %577 {offsets = [0, 0], sizes = [8, 64], strides = [1, 1]} : vector<8x256xf32> to vector<8x64xf32>
    %579 = arith.negf %578 : vector<8x64xf32>
    %580 = math.exp %579 : vector<8x64xf32>
    %cst_176 = arith.constant 1.000000e+00 : f32
    %581 = vector.broadcast %cst_176 : f32 to vector<8x64xf32>
    %582 = arith.addf %581, %580 : vector<8x64xf32>
    %583 = arith.divf %581, %582 : vector<8x64xf32>
    %584 = vector.extract_strided_slice %577 {offsets = [0, 64], sizes = [8, 64], strides = [1, 1]} : vector<8x256xf32> to vector<8x64xf32>
    %585 = arith.negf %584 : vector<8x64xf32>
    %586 = math.exp %585 : vector<8x64xf32>
    %cst_177 = arith.constant 1.000000e+00 : f32
    %587 = vector.broadcast %cst_177 : f32 to vector<8x64xf32>
    %588 = arith.addf %587, %586 : vector<8x64xf32>
    %589 = arith.divf %587, %588 : vector<8x64xf32>
    %590 = vector.extract_strided_slice %577 {offsets = [0, 128], sizes = [8, 64], strides = [1, 1]} : vector<8x256xf32> to vector<8x64xf32>
    %591 = math.tanh %590 : vector<8x64xf32>
    %592 = vector.extract_strided_slice %577 {offsets = [0, 192], sizes = [8, 64], strides = [1, 1]} : vector<8x256xf32> to vector<8x64xf32>
    %593 = arith.negf %592 : vector<8x64xf32>
    %594 = math.exp %593 : vector<8x64xf32>
    %cst_178 = arith.constant 1.000000e+00 : f32
    %595 = vector.broadcast %cst_178 : f32 to vector<8x64xf32>
    %596 = arith.addf %595, %594 : vector<8x64xf32>
    %597 = arith.divf %595, %596 : vector<8x64xf32>
    %598 = arith.mulf %589, %500 : vector<8x64xf32>
    %599 = arith.mulf %583, %591 : vector<8x64xf32>
    %600 = arith.addf %598, %599 : vector<8x64xf32>
    %601 = math.tanh %600 : vector<8x64xf32>
    %602 = arith.mulf %597, %601 : vector<8x64xf32>
    %603 = arith.truncf %532 : vector<8x64xf32> to vector<8x64xbf16>
    %c0_179 = arith.constant 0 : index
    %c0_180 = arith.constant 0 : index
    %604 = vector.load %arg2[%c0_179, %c0_180] : memref<64x256xbf16, #tpu.memory_space<vmem>>, vector<64x256xbf16>
    %cst_181 = arith.constant dense<0.000000e+00> : vector<8x256xf32>
    %605 = tpu.matmul %603, %604, %cst_181 {dimension_numbers = #tpu.dot_dimension_numbers<[1], [0], [0], [1], [0, 0, 1, 1], [], []>} : vector<8x64xbf16>, vector<64x256xbf16>, vector<8x256xf32> -> vector<8x256xf32>
    %c56 = arith.constant 56 : index
    %c0_182 = arith.constant 0 : index
    %606 = vector.load %arg19[%c56, %c0_182] : memref<64x256xf32, #tpu.memory_space<vmem>>, vector<8x256xf32>
    %607 = arith.addf %606, %605 : vector<8x256xf32>
    %608 = vector.extract_strided_slice %607 {offsets = [0, 0], sizes = [8, 64], strides = [1, 1]} : vector<8x256xf32> to vector<8x64xf32>
    %609 = arith.negf %608 : vector<8x64xf32>
    %610 = math.exp %609 : vector<8x64xf32>
    %cst_183 = arith.constant 1.000000e+00 : f32
    %611 = vector.broadcast %cst_183 : f32 to vector<8x64xf32>
    %612 = arith.addf %611, %610 : vector<8x64xf32>
    %613 = arith.divf %611, %612 : vector<8x64xf32>
    %614 = vector.extract_strided_slice %607 {offsets = [0, 64], sizes = [8, 64], strides = [1, 1]} : vector<8x256xf32> to vector<8x64xf32>
    %615 = arith.negf %614 : vector<8x64xf32>
    %616 = math.exp %615 : vector<8x64xf32>
    %cst_184 = arith.constant 1.000000e+00 : f32
    %617 = vector.broadcast %cst_184 : f32 to vector<8x64xf32>
    %618 = arith.addf %617, %616 : vector<8x64xf32>
    %619 = arith.divf %617, %618 : vector<8x64xf32>
    %620 = vector.extract_strided_slice %607 {offsets = [0, 128], sizes = [8, 64], strides = [1, 1]} : vector<8x256xf32> to vector<8x64xf32>
    %621 = math.tanh %620 : vector<8x64xf32>
    %622 = vector.extract_strided_slice %607 {offsets = [0, 192], sizes = [8, 64], strides = [1, 1]} : vector<8x256xf32> to vector<8x64xf32>
    %623 = arith.negf %622 : vector<8x64xf32>
    %624 = math.exp %623 : vector<8x64xf32>
    %cst_185 = arith.constant 1.000000e+00 : f32
    %625 = vector.broadcast %cst_185 : f32 to vector<8x64xf32>
    %626 = arith.addf %625, %624 : vector<8x64xf32>
    %627 = arith.divf %625, %626 : vector<8x64xf32>
    %628 = arith.mulf %619, %530 : vector<8x64xf32>
    %629 = arith.mulf %613, %621 : vector<8x64xf32>
    %630 = arith.addf %628, %629 : vector<8x64xf32>
    %631 = math.tanh %630 : vector<8x64xf32>
    %632 = arith.mulf %627, %631 : vector<8x64xf32>
    %633 = arith.truncf %567 : vector<8x64xf32> to vector<8x64xbf16>
    %c0_186 = arith.constant 0 : index
    %c0_187 = arith.constant 0 : index
    %634 = vector.load %arg5[%c0_186, %c0_187] : memref<64x256xbf16, #tpu.memory_space<vmem>>, vector<64x256xbf16>
    %cst_188 = arith.constant dense<0.000000e+00> : vector<8x256xf32>
    %635 = tpu.matmul %633, %634, %cst_188 {dimension_numbers = #tpu.dot_dimension_numbers<[1], [0], [0], [1], [0, 0, 1, 1], [], []>} : vector<8x64xbf16>, vector<64x256xbf16>, vector<8x256xf32> -> vector<8x256xf32>
    %636 = arith.truncf %532 : vector<8x64xf32> to vector<8x64xbf16>
    %c0_189 = arith.constant 0 : index
    %c0_190 = arith.constant 0 : index
    %637 = vector.load %arg4[%c0_189, %c0_190] : memref<64x256xbf16, #tpu.memory_space<vmem>>, vector<64x256xbf16>
    %cst_191 = arith.constant dense<0.000000e+00> : vector<8x256xf32>
    %638 = tpu.matmul %636, %637, %cst_191 {dimension_numbers = #tpu.dot_dimension_numbers<[1], [0], [0], [1], [0, 0, 1, 1], [], []>} : vector<8x64xbf16>, vector<64x256xbf16>, vector<8x256xf32> -> vector<8x256xf32>
    %639 = arith.addf %638, %635 : vector<8x256xf32>
    %c0_192 = arith.constant 0 : index
    %c0_193 = arith.constant 0 : index
    %640 = vector.load %arg6[%c0_192, %c0_193] : memref<1x256xf32, #tpu.memory_space<vmem>>, vector<1x256xf32>
    %641 = vector.broadcast %640 : vector<1x256xf32> to vector<8x256xf32>
    %642 = arith.addf %639, %641 : vector<8x256xf32>
    %643 = vector.extract_strided_slice %642 {offsets = [0, 0], sizes = [8, 64], strides = [1, 1]} : vector<8x256xf32> to vector<8x64xf32>
    %644 = arith.negf %643 : vector<8x64xf32>
    %645 = math.exp %644 : vector<8x64xf32>
    %cst_194 = arith.constant 1.000000e+00 : f32
    %646 = vector.broadcast %cst_194 : f32 to vector<8x64xf32>
    %647 = arith.addf %646, %645 : vector<8x64xf32>
    %648 = arith.divf %646, %647 : vector<8x64xf32>
    %649 = vector.extract_strided_slice %642 {offsets = [0, 64], sizes = [8, 64], strides = [1, 1]} : vector<8x256xf32> to vector<8x64xf32>
    %650 = arith.negf %649 : vector<8x64xf32>
    %651 = math.exp %650 : vector<8x64xf32>
    %cst_195 = arith.constant 1.000000e+00 : f32
    %652 = vector.broadcast %cst_195 : f32 to vector<8x64xf32>
    %653 = arith.addf %652, %651 : vector<8x64xf32>
    %654 = arith.divf %652, %653 : vector<8x64xf32>
    %655 = vector.extract_strided_slice %642 {offsets = [0, 128], sizes = [8, 64], strides = [1, 1]} : vector<8x256xf32> to vector<8x64xf32>
    %656 = math.tanh %655 : vector<8x64xf32>
    %657 = vector.extract_strided_slice %642 {offsets = [0, 192], sizes = [8, 64], strides = [1, 1]} : vector<8x256xf32> to vector<8x64xf32>
    %658 = arith.negf %657 : vector<8x64xf32>
    %659 = math.exp %658 : vector<8x64xf32>
    %cst_196 = arith.constant 1.000000e+00 : f32
    %660 = vector.broadcast %cst_196 : f32 to vector<8x64xf32>
    %661 = arith.addf %660, %659 : vector<8x64xf32>
    %662 = arith.divf %660, %661 : vector<8x64xf32>
    %663 = arith.mulf %654, %565 : vector<8x64xf32>
    %664 = arith.mulf %648, %656 : vector<8x64xf32>
    %665 = arith.addf %663, %664 : vector<8x64xf32>
    %666 = math.tanh %665 : vector<8x64xf32>
    %667 = arith.mulf %662, %666 : vector<8x64xf32>
    %668 = arith.truncf %602 : vector<8x64xf32> to vector<8x64xbf16>
    %c0_197 = arith.constant 0 : index
    %c0_198 = arith.constant 0 : index
    %669 = vector.load %arg8[%c0_197, %c0_198] : memref<64x256xbf16, #tpu.memory_space<vmem>>, vector<64x256xbf16>
    %cst_199 = arith.constant dense<0.000000e+00> : vector<8x256xf32>
    %670 = tpu.matmul %668, %669, %cst_199 {dimension_numbers = #tpu.dot_dimension_numbers<[1], [0], [0], [1], [0, 0, 1, 1], [], []>} : vector<8x64xbf16>, vector<64x256xbf16>, vector<8x256xf32> -> vector<8x256xf32>
    %671 = arith.truncf %567 : vector<8x64xf32> to vector<8x64xbf16>
    %c0_200 = arith.constant 0 : index
    %c0_201 = arith.constant 0 : index
    %672 = vector.load %arg7[%c0_200, %c0_201] : memref<64x256xbf16, #tpu.memory_space<vmem>>, vector<64x256xbf16>
    %cst_202 = arith.constant dense<0.000000e+00> : vector<8x256xf32>
    %673 = tpu.matmul %671, %672, %cst_202 {dimension_numbers = #tpu.dot_dimension_numbers<[1], [0], [0], [1], [0, 0, 1, 1], [], []>} : vector<8x64xbf16>, vector<64x256xbf16>, vector<8x256xf32> -> vector<8x256xf32>
    %674 = arith.addf %673, %670 : vector<8x256xf32>
    %c0_203 = arith.constant 0 : index
    %c0_204 = arith.constant 0 : index
    %675 = vector.load %arg9[%c0_203, %c0_204] : memref<1x256xf32, #tpu.memory_space<vmem>>, vector<1x256xf32>
    %676 = vector.broadcast %675 : vector<1x256xf32> to vector<8x256xf32>
    %677 = arith.addf %674, %676 : vector<8x256xf32>
    %678 = vector.extract_strided_slice %677 {offsets = [0, 0], sizes = [8, 64], strides = [1, 1]} : vector<8x256xf32> to vector<8x64xf32>
    %679 = arith.negf %678 : vector<8x64xf32>
    %680 = math.exp %679 : vector<8x64xf32>
    %cst_205 = arith.constant 1.000000e+00 : f32
    %681 = vector.broadcast %cst_205 : f32 to vector<8x64xf32>
    %682 = arith.addf %681, %680 : vector<8x64xf32>
    %683 = arith.divf %681, %682 : vector<8x64xf32>
    %684 = vector.extract_strided_slice %677 {offsets = [0, 64], sizes = [8, 64], strides = [1, 1]} : vector<8x256xf32> to vector<8x64xf32>
    %685 = arith.negf %684 : vector<8x64xf32>
    %686 = math.exp %685 : vector<8x64xf32>
    %cst_206 = arith.constant 1.000000e+00 : f32
    %687 = vector.broadcast %cst_206 : f32 to vector<8x64xf32>
    %688 = arith.addf %687, %686 : vector<8x64xf32>
    %689 = arith.divf %687, %688 : vector<8x64xf32>
    %690 = vector.extract_strided_slice %677 {offsets = [0, 128], sizes = [8, 64], strides = [1, 1]} : vector<8x256xf32> to vector<8x64xf32>
    %691 = math.tanh %690 : vector<8x64xf32>
    %692 = vector.extract_strided_slice %677 {offsets = [0, 192], sizes = [8, 64], strides = [1, 1]} : vector<8x256xf32> to vector<8x64xf32>
    %693 = arith.negf %692 : vector<8x64xf32>
    %694 = math.exp %693 : vector<8x64xf32>
    %cst_207 = arith.constant 1.000000e+00 : f32
    %695 = vector.broadcast %cst_207 : f32 to vector<8x64xf32>
    %696 = arith.addf %695, %694 : vector<8x64xf32>
    %697 = arith.divf %695, %696 : vector<8x64xf32>
    %698 = arith.mulf %689, %600 : vector<8x64xf32>
    %699 = arith.mulf %683, %691 : vector<8x64xf32>
    %700 = arith.addf %698, %699 : vector<8x64xf32>
    %701 = math.tanh %700 : vector<8x64xf32>
    %702 = arith.mulf %697, %701 : vector<8x64xf32>
    %703 = arith.truncf %667 : vector<8x64xf32> to vector<8x64xbf16>
    %c0_208 = arith.constant 0 : index
    %c0_209 = arith.constant 0 : index
    %704 = vector.load %arg5[%c0_208, %c0_209] : memref<64x256xbf16, #tpu.memory_space<vmem>>, vector<64x256xbf16>
    %cst_210 = arith.constant dense<0.000000e+00> : vector<8x256xf32>
    %705 = tpu.matmul %703, %704, %cst_210 {dimension_numbers = #tpu.dot_dimension_numbers<[1], [0], [0], [1], [0, 0, 1, 1], [], []>} : vector<8x64xbf16>, vector<64x256xbf16>, vector<8x256xf32> -> vector<8x256xf32>
    %706 = arith.truncf %632 : vector<8x64xf32> to vector<8x64xbf16>
    %c0_211 = arith.constant 0 : index
    %c0_212 = arith.constant 0 : index
    %707 = vector.load %arg4[%c0_211, %c0_212] : memref<64x256xbf16, #tpu.memory_space<vmem>>, vector<64x256xbf16>
    %cst_213 = arith.constant dense<0.000000e+00> : vector<8x256xf32>
    %708 = tpu.matmul %706, %707, %cst_213 {dimension_numbers = #tpu.dot_dimension_numbers<[1], [0], [0], [1], [0, 0, 1, 1], [], []>} : vector<8x64xbf16>, vector<64x256xbf16>, vector<8x256xf32> -> vector<8x256xf32>
    %709 = arith.addf %708, %705 : vector<8x256xf32>
    %c0_214 = arith.constant 0 : index
    %c0_215 = arith.constant 0 : index
    %710 = vector.load %arg6[%c0_214, %c0_215] : memref<1x256xf32, #tpu.memory_space<vmem>>, vector<1x256xf32>
    %711 = vector.broadcast %710 : vector<1x256xf32> to vector<8x256xf32>
    %712 = arith.addf %709, %711 : vector<8x256xf32>
    %713 = vector.extract_strided_slice %712 {offsets = [0, 0], sizes = [8, 64], strides = [1, 1]} : vector<8x256xf32> to vector<8x64xf32>
    %714 = arith.negf %713 : vector<8x64xf32>
    %715 = math.exp %714 : vector<8x64xf32>
    %cst_216 = arith.constant 1.000000e+00 : f32
    %716 = vector.broadcast %cst_216 : f32 to vector<8x64xf32>
    %717 = arith.addf %716, %715 : vector<8x64xf32>
    %718 = arith.divf %716, %717 : vector<8x64xf32>
    %719 = vector.extract_strided_slice %712 {offsets = [0, 64], sizes = [8, 64], strides = [1, 1]} : vector<8x256xf32> to vector<8x64xf32>
    %720 = arith.negf %719 : vector<8x64xf32>
    %721 = math.exp %720 : vector<8x64xf32>
    %cst_217 = arith.constant 1.000000e+00 : f32
    %722 = vector.broadcast %cst_217 : f32 to vector<8x64xf32>
    %723 = arith.addf %722, %721 : vector<8x64xf32>
    %724 = arith.divf %722, %723 : vector<8x64xf32>
    %725 = vector.extract_strided_slice %712 {offsets = [0, 128], sizes = [8, 64], strides = [1, 1]} : vector<8x256xf32> to vector<8x64xf32>
    %726 = math.tanh %725 : vector<8x64xf32>
    %727 = vector.extract_strided_slice %712 {offsets = [0, 192], sizes = [8, 64], strides = [1, 1]} : vector<8x256xf32> to vector<8x64xf32>
    %728 = arith.negf %727 : vector<8x64xf32>
    %729 = math.exp %728 : vector<8x64xf32>
    %cst_218 = arith.constant 1.000000e+00 : f32
    %730 = vector.broadcast %cst_218 : f32 to vector<8x64xf32>
    %731 = arith.addf %730, %729 : vector<8x64xf32>
    %732 = arith.divf %730, %731 : vector<8x64xf32>
    %733 = arith.mulf %724, %665 : vector<8x64xf32>
    %734 = arith.mulf %718, %726 : vector<8x64xf32>
    %735 = arith.addf %733, %734 : vector<8x64xf32>
    %736 = math.tanh %735 : vector<8x64xf32>
    %737 = arith.mulf %732, %736 : vector<8x64xf32>
    %738 = arith.truncf %702 : vector<8x64xf32> to vector<8x64xbf16>
    %c0_219 = arith.constant 0 : index
    %c0_220 = arith.constant 0 : index
    %739 = vector.load %arg8[%c0_219, %c0_220] : memref<64x256xbf16, #tpu.memory_space<vmem>>, vector<64x256xbf16>
    %cst_221 = arith.constant dense<0.000000e+00> : vector<8x256xf32>
    %740 = tpu.matmul %738, %739, %cst_221 {dimension_numbers = #tpu.dot_dimension_numbers<[1], [0], [0], [1], [0, 0, 1, 1], [], []>} : vector<8x64xbf16>, vector<64x256xbf16>, vector<8x256xf32> -> vector<8x256xf32>
    %741 = arith.truncf %667 : vector<8x64xf32> to vector<8x64xbf16>
    %c0_222 = arith.constant 0 : index
    %c0_223 = arith.constant 0 : index
    %742 = vector.load %arg7[%c0_222, %c0_223] : memref<64x256xbf16, #tpu.memory_space<vmem>>, vector<64x256xbf16>
    %cst_224 = arith.constant dense<0.000000e+00> : vector<8x256xf32>
    %743 = tpu.matmul %741, %742, %cst_224 {dimension_numbers = #tpu.dot_dimension_numbers<[1], [0], [0], [1], [0, 0, 1, 1], [], []>} : vector<8x64xbf16>, vector<64x256xbf16>, vector<8x256xf32> -> vector<8x256xf32>
    %744 = arith.addf %743, %740 : vector<8x256xf32>
    %c0_225 = arith.constant 0 : index
    %c0_226 = arith.constant 0 : index
    %745 = vector.load %arg9[%c0_225, %c0_226] : memref<1x256xf32, #tpu.memory_space<vmem>>, vector<1x256xf32>
    %746 = vector.broadcast %745 : vector<1x256xf32> to vector<8x256xf32>
    %747 = arith.addf %744, %746 : vector<8x256xf32>
    %748 = vector.extract_strided_slice %747 {offsets = [0, 0], sizes = [8, 64], strides = [1, 1]} : vector<8x256xf32> to vector<8x64xf32>
    %749 = arith.negf %748 : vector<8x64xf32>
    %750 = math.exp %749 : vector<8x64xf32>
    %cst_227 = arith.constant 1.000000e+00 : f32
    %751 = vector.broadcast %cst_227 : f32 to vector<8x64xf32>
    %752 = arith.addf %751, %750 : vector<8x64xf32>
    %753 = arith.divf %751, %752 : vector<8x64xf32>
    %754 = vector.extract_strided_slice %747 {offsets = [0, 64], sizes = [8, 64], strides = [1, 1]} : vector<8x256xf32> to vector<8x64xf32>
    %755 = arith.negf %754 : vector<8x64xf32>
    %756 = math.exp %755 : vector<8x64xf32>
    %cst_228 = arith.constant 1.000000e+00 : f32
    %757 = vector.broadcast %cst_228 : f32 to vector<8x64xf32>
    %758 = arith.addf %757, %756 : vector<8x64xf32>
    %759 = arith.divf %757, %758 : vector<8x64xf32>
    %760 = vector.extract_strided_slice %747 {offsets = [0, 128], sizes = [8, 64], strides = [1, 1]} : vector<8x256xf32> to vector<8x64xf32>
    %761 = math.tanh %760 : vector<8x64xf32>
    %762 = vector.extract_strided_slice %747 {offsets = [0, 192], sizes = [8, 64], strides = [1, 1]} : vector<8x256xf32> to vector<8x64xf32>
    %763 = arith.negf %762 : vector<8x64xf32>
    %764 = math.exp %763 : vector<8x64xf32>
    %cst_229 = arith.constant 1.000000e+00 : f32
    %765 = vector.broadcast %cst_229 : f32 to vector<8x64xf32>
    %766 = arith.addf %765, %764 : vector<8x64xf32>
    %767 = arith.divf %765, %766 : vector<8x64xf32>
    %768 = arith.mulf %759, %700 : vector<8x64xf32>
    %769 = arith.mulf %753, %761 : vector<8x64xf32>
    %770 = arith.addf %768, %769 : vector<8x64xf32>
    %771 = math.tanh %770 : vector<8x64xf32>
    %772 = arith.mulf %767, %771 : vector<8x64xf32>
    %773 = arith.truncf %772 : vector<8x64xf32> to vector<8x64xbf16>
    %c0_230 = arith.constant 0 : index
    %c0_231 = arith.constant 0 : index
    %774 = vector.load %arg8[%c0_230, %c0_231] : memref<64x256xbf16, #tpu.memory_space<vmem>>, vector<64x256xbf16>
    %cst_232 = arith.constant dense<0.000000e+00> : vector<8x256xf32>
    %775 = tpu.matmul %773, %774, %cst_232 {dimension_numbers = #tpu.dot_dimension_numbers<[1], [0], [0], [1], [0, 0, 1, 1], [], []>} : vector<8x64xbf16>, vector<64x256xbf16>, vector<8x256xf32> -> vector<8x256xf32>
    %776 = arith.truncf %737 : vector<8x64xf32> to vector<8x64xbf16>
    %c0_233 = arith.constant 0 : index
    %c0_234 = arith.constant 0 : index
    %777 = vector.load %arg7[%c0_233, %c0_234] : memref<64x256xbf16, #tpu.memory_space<vmem>>, vector<64x256xbf16>
    %cst_235 = arith.constant dense<0.000000e+00> : vector<8x256xf32>
    %778 = tpu.matmul %776, %777, %cst_235 {dimension_numbers = #tpu.dot_dimension_numbers<[1], [0], [0], [1], [0, 0, 1, 1], [], []>} : vector<8x64xbf16>, vector<64x256xbf16>, vector<8x256xf32> -> vector<8x256xf32>
    %779 = arith.addf %778, %775 : vector<8x256xf32>
    %c0_236 = arith.constant 0 : index
    %c0_237 = arith.constant 0 : index
    %780 = vector.load %arg9[%c0_236, %c0_237] : memref<1x256xf32, #tpu.memory_space<vmem>>, vector<1x256xf32>
    %781 = vector.broadcast %780 : vector<1x256xf32> to vector<8x256xf32>
    %782 = arith.addf %779, %781 : vector<8x256xf32>
    %783 = vector.extract_strided_slice %782 {offsets = [0, 0], sizes = [8, 64], strides = [1, 1]} : vector<8x256xf32> to vector<8x64xf32>
    %784 = arith.negf %783 : vector<8x64xf32>
    %785 = math.exp %784 : vector<8x64xf32>
    %cst_238 = arith.constant 1.000000e+00 : f32
    %786 = vector.broadcast %cst_238 : f32 to vector<8x64xf32>
    %787 = arith.addf %786, %785 : vector<8x64xf32>
    %788 = arith.divf %786, %787 : vector<8x64xf32>
    %789 = vector.extract_strided_slice %782 {offsets = [0, 64], sizes = [8, 64], strides = [1, 1]} : vector<8x256xf32> to vector<8x64xf32>
    %790 = arith.negf %789 : vector<8x64xf32>
    %791 = math.exp %790 : vector<8x64xf32>
    %cst_239 = arith.constant 1.000000e+00 : f32
    %792 = vector.broadcast %cst_239 : f32 to vector<8x64xf32>
    %793 = arith.addf %792, %791 : vector<8x64xf32>
    %794 = arith.divf %792, %793 : vector<8x64xf32>
    %795 = vector.extract_strided_slice %782 {offsets = [0, 128], sizes = [8, 64], strides = [1, 1]} : vector<8x256xf32> to vector<8x64xf32>
    %796 = math.tanh %795 : vector<8x64xf32>
    %797 = vector.extract_strided_slice %782 {offsets = [0, 192], sizes = [8, 64], strides = [1, 1]} : vector<8x256xf32> to vector<8x64xf32>
    %798 = arith.negf %797 : vector<8x64xf32>
    %799 = math.exp %798 : vector<8x64xf32>
    %cst_240 = arith.constant 1.000000e+00 : f32
    %800 = vector.broadcast %cst_240 : f32 to vector<8x64xf32>
    %801 = arith.addf %800, %799 : vector<8x64xf32>
    %802 = arith.divf %800, %801 : vector<8x64xf32>
    %803 = arith.mulf %794, %770 : vector<8x64xf32>
    %804 = arith.mulf %788, %796 : vector<8x64xf32>
    %805 = arith.addf %803, %804 : vector<8x64xf32>
    %806 = math.tanh %805 : vector<8x64xf32>
    %807 = arith.mulf %802, %806 : vector<8x64xf32>
    %808 = arith.truncf %807 : vector<8x64xf32> to vector<8x64xbf16>
    %c0_241 = arith.constant 0 : index
    %c0_242 = arith.constant 0 : index
    %809 = vector.load %arg10[%c0_241, %c0_242] : memref<64x128xbf16, #tpu.memory_space<vmem>>, vector<64x128xbf16>
    %cst_243 = arith.constant dense<0.000000e+00> : vector<8x128xf32>
    %810 = tpu.matmul %808, %809, %cst_243 {dimension_numbers = #tpu.dot_dimension_numbers<[1], [0], [0], [1], [0, 0, 1, 1], [], []>} : vector<8x64xbf16>, vector<64x128xbf16>, vector<8x128xf32> -> vector<8x128xf32>
    %c0_244 = arith.constant 0 : index
    %c0_245 = arith.constant 0 : index
    %811 = vector.load %arg11[%c0_244, %c0_245] : memref<1x128xf32, #tpu.memory_space<vmem>>, vector<1x128xf32>
    %812 = vector.broadcast %811 : vector<1x128xf32> to vector<8x128xf32>
    %813 = arith.addf %810, %812 : vector<8x128xf32>
    %cst_246 = arith.constant 0.000000e+00 : f32
    %814 = vector.broadcast %cst_246 : f32 to vector<8x128xf32>
    %815 = arith.maximumf %813, %814 : vector<8x128xf32>
    %816 = arith.truncf %815 : vector<8x128xf32> to vector<8x128xbf16>
    %c0_247 = arith.constant 0 : index
    %c0_248 = arith.constant 0 : index
    %817 = vector.load %arg12[%c0_247, %c0_248] : memref<128x128xbf16, #tpu.memory_space<vmem>>, vector<128x128xbf16>
    %cst_249 = arith.constant dense<0.000000e+00> : vector<8x128xf32>
    %818 = tpu.matmul %816, %817, %cst_249 {dimension_numbers = #tpu.dot_dimension_numbers<[1], [0], [0], [1], [0, 0, 1, 1], [], []>} : vector<8x128xbf16>, vector<128x128xbf16>, vector<8x128xf32> -> vector<8x128xf32>
    %c0_250 = arith.constant 0 : index
    %c0_251 = arith.constant 0 : index
    %819 = vector.load %arg13[%c0_250, %c0_251] : memref<1x128xf32, #tpu.memory_space<vmem>>, vector<1x128xf32>
    %820 = vector.broadcast %819 : vector<1x128xf32> to vector<8x128xf32>
    %821 = arith.addf %818, %820 : vector<8x128xf32>
    %cst_252 = arith.constant 0.000000e+00 : f32
    %822 = vector.broadcast %cst_252 : f32 to vector<8x128xf32>
    %823 = arith.maximumf %821, %822 : vector<8x128xf32>
    %824 = arith.truncf %823 : vector<8x128xf32> to vector<8x128xbf16>
    %c0_253 = arith.constant 0 : index
    %c0_254 = arith.constant 0 : index
    %825 = vector.load %arg14[%c0_253, %c0_254] : memref<128x128xbf16, #tpu.memory_space<vmem>>, vector<128x128xbf16>
    %cst_255 = arith.constant dense<0.000000e+00> : vector<8x128xf32>
    %826 = tpu.matmul %824, %825, %cst_255 {dimension_numbers = #tpu.dot_dimension_numbers<[1], [0], [0], [1], [0, 0, 1, 1], [], []>} : vector<8x128xbf16>, vector<128x128xbf16>, vector<8x128xf32> -> vector<8x128xf32>
    %c0_256 = arith.constant 0 : index
    %c0_257 = arith.constant 0 : index
    %827 = vector.load %arg15[%c0_256, %c0_257] : memref<1x128xf32, #tpu.memory_space<vmem>>, vector<1x128xf32>
    %828 = vector.broadcast %827 : vector<1x128xf32> to vector<8x128xf32>
    %829 = arith.addf %826, %828 : vector<8x128xf32>
    %cst_258 = arith.constant 0.000000e+00 : f32
    %830 = vector.broadcast %cst_258 : f32 to vector<8x128xf32>
    %831 = arith.maximumf %829, %830 : vector<8x128xf32>
    %832 = arith.truncf %831 : vector<8x128xf32> to vector<8x128xbf16>
    %c0_259 = arith.constant 0 : index
    %c0_260 = arith.constant 0 : index
    %833 = vector.load %arg16[%c0_259, %c0_260] : memref<128x128xbf16, #tpu.memory_space<vmem>>, vector<128x128xbf16>
    %cst_261 = arith.constant dense<0.000000e+00> : vector<8x128xf32>
    %834 = tpu.matmul %832, %833, %cst_261 {dimension_numbers = #tpu.dot_dimension_numbers<[1], [0], [0], [1], [0, 0, 1, 1], [], []>} : vector<8x128xbf16>, vector<128x128xbf16>, vector<8x128xf32> -> vector<8x128xf32>
    %c0_262 = arith.constant 0 : index
    %c0_263 = arith.constant 0 : index
    %835 = vector.load %arg17[%c0_262, %c0_263] : memref<1x128xf32, #tpu.memory_space<vmem>>, vector<1x128xf32>
    %836 = vector.broadcast %835 : vector<1x128xf32> to vector<8x128xf32>
    %837 = arith.addf %834, %836 : vector<8x128xf32>
    %c0_264 = arith.constant 0 : index
    %c0_265 = arith.constant 0 : index
    %838 = vector.load %arg18[%c0_264, %c0_265] : memref<8x128xf32, #tpu.memory_space<vmem>>, vector<8x128xf32>
    tpu.vector_store %arg18[%c0_264, %c0_265], %837 {strides = array<i32>} : memref<8x128xf32, #tpu.memory_space<vmem>>, vector<8x128xf32>,
    return
  }
}

</mosaic_0001>

<llo_original>
// kernel: lstm_model_forward.1
$region0: #{lstm_model_forward.1}
  #allocation0 [shape = 'u32[]', space=smem, size = 0x4, offset = 0x4, fixed_abs, tag = 'smem constant byte address 0x4 - core index']
  #allocation1 [shape = 'u32[144,128]{1,0:T(1,128)}', space=vmem, size = 0x12000, scoped, tag = 'internal scratch']
  #allocation2 [shape = 'f32[64,256]{1,0:T(8,128)}', space=vmem, size = 0x10000, scoped, tag = 'scratch operand']
  %s0 = inlined_call_operand.vmem [shape: bf16[64,24], index: 0, kind: input, shape index: {}]
  %s1 = inlined_call_operand.hbm [shape: bf16[24,256], index: 1, kind: input, shape index: {}]
  %s2 = inlined_call_operand.vmem [shape: bf16[64,256], index: 2, kind: input, shape index: {}]
  %s3 = inlined_call_operand.hbm [shape: f32[1,256], index: 3, kind: input, shape index: {}]
  %s4 = inlined_call_operand.hbm [shape: bf16[64,256], index: 4, kind: input, shape index: {}]
  %s5 = inlined_call_operand.hbm [shape: bf16[64,256], index: 5, kind: input, shape index: {}]
  %s6 = inlined_call_operand.hbm [shape: f32[1,256], index: 6, kind: input, shape index: {}]
  %s7 = inlined_call_operand.hbm [shape: bf16[64,256], index: 7, kind: input, shape index: {}]
  %s8 = inlined_call_operand.hbm [shape: bf16[64,256], index: 8, kind: input, shape index: {}]
  %s9 = inlined_call_operand.hbm [shape: f32[1,256], index: 9, kind: input, shape index: {}]
  %s10 = inlined_call_operand.hbm [shape: bf16[64,128], index: 10, kind: input, shape index: {}]
  %s11 = inlined_call_operand.hbm [shape: f32[1,128], index: 11, kind: input, shape index: {}]
  %s12 = inlined_call_operand.hbm [shape: bf16[128,128], index: 12, kind: input, shape index: {}]
  %s13 = inlined_call_operand.hbm [shape: f32[1,128], index: 13, kind: input, shape index: {}]
  %s14 = inlined_call_operand.vmem [shape: bf16[128,128], index: 14, kind: input, shape index: {}]
  %s15 = inlined_call_operand.hbm [shape: f32[1,128], index: 15, kind: input, shape index: {}]
  %s16 = inlined_call_operand.hbm [shape: bf16[128,128], index: 16, kind: input, shape index: {}]
  %s17 = inlined_call_operand.hbm [shape: f32[1,128], index: 17, kind: input, shape index: {}]
  %s18 = inlined_call_operand.vmem [shape: f32[8,128], index: 18, kind: output, shape index: {}]
  %s19 = sld [smem:[#allocation0]]
  $region142: #{lstm_model_forward.1} parent=0
    _
  %s21 = ssub.s32 1, %s19
  %s22 = scalar_select 0, %s21, %s19
  $region1: #{lstm_model_forward.1} parent=0
    #allocation3 [shape = 'u8[12288]{0}', space=vmem, size = 0x3000, scoped, tag = 'input window, operand 1, single buffered']
    #allocation4 [shape = 's32[1]{0}', space=sflag, size = 0x4, scoped, tag = 'scoped memory for lstm_model_forward.1']
    #allocation5 [shape = 'u8[1024]{0}', space=vmem, size = 0x400, scoped, tag = 'input window, operand 3, single buffered']
    #allocation6 [shape = 's32[1]{0}', space=sflag, size = 0x4, scoped, tag = 'scoped memory for lstm_model_forward.1']
    #allocation7 [shape = 'u8[32768]{0}', space=vmem, size = 0x8000, scoped, tag = 'input window, operand 4, single buffered']
    #allocation8 [shape = 'u8[32768]{0}', space=vmem, size = 0x8000, scoped, tag = 'input window, operand 5, single buffered']
    #allocation9 [shape = 's32[1]{0}', space=sflag, size = 0x4, scoped, tag = 'scoped memory for lstm_model_forward.1']
    #allocation10 [shape = 'u8[1024]{0}', space=vmem, size = 0x400, scoped, tag = 'input window, operand 6, single buffered']
    #allocation11 [shape = 'u8[32768]{0}', space=vmem, size = 0x8000, scoped, tag = 'input window, operand 7, single buffered']
    #allocation12 [shape = 's32[1]{0}', space=sflag, size = 0x4, scoped, tag = 'scoped memory for lstm_model_forward.1']
    #allocation13 [shape = 'u8[32768]{0}', space=vmem, size = 0x8000, scoped, tag = 'input window, operand 8, single buffered']
    #allocation14 [shape = 'u8[1024]{0}', space=vmem, size = 0x400, scoped, tag = 'input window, operand 9, single buffered']
    #allocation15 [shape = 's32[1]{0}', space=sflag, size = 0x4, scoped, tag = 'scoped memory for lstm_model_forward.1']
    #allocation16 [shape = 'u8[16384]{0}', space=vmem, size = 0x4000, scoped, tag = 'input window, operand 10, single buffered']
    #allocation17 [shape = 'u8[512]{0}', space=vmem, size = 0x400, scoped, tag = 'input window, operand 11, single buffered']
    #allocation18 [shape = 's32[1]{0}', space=sflag, size = 0x4, scoped, tag = 'scoped memory for lstm_model_forward.1']
    #allocation19 [shape = 'u8[32768]{0}', space=vmem, size = 0x8000, scoped, tag = 'input window, operand 12, single buffered']
    #allocation20 [shape = 'u8[512]{0}', space=vmem, size = 0x400, scoped, tag = 'input window, operand 13, single buffered']
    #allocation21 [shape = 's32[1]{0}', space=sflag, size = 0x4, scoped, tag = 'scoped memory for lstm_model_forward.1']
    #allocation22 [shape = 'u8[512]{0}', space=vmem, size = 0x400, scoped, tag = 'input window, operand 15, single buffered']
    #allocation23 [shape = 'u8[32768]{0}', space=vmem, size = 0x8000, scoped, tag = 'input window, operand 16, single buffered']
    #allocation24 [shape = 's32[1]{0}', space=sflag, size = 0x4, scoped, tag = 'scoped memory for lstm_model_forward.1']
    #allocation25 [shape = 'u8[512]{0}', space=vmem, size = 0x400, scoped, tag = 'input window, operand 17, single buffered']
    %23 = vsyncpa [#allocation4], 0
    %24 = vsyncpa [#allocation6], 0
    %25 = vsyncpa [#allocation9], 0
    %26 = vsyncpa [#allocation12], 0
    %27 = vsyncpa [#allocation15], 0
    %28 = vsyncpa [#allocation18], 0
    %29 = vsyncpa [#allocation21], 0
    %30 = vsyncpa [#allocation24], 0
    // Predicated region
    $region2: #{lstm_model_forward.1} parent=1 // pred_check
      _
    $region3: #{lstm_model_forward.1} parent=1 // pred_check_branch
      %32 = sbr.rel (0) target = $region5
    $region4: #{lstm_model_forward.1} parent=1 // pred_region
      _
    $region5: #{lstm_model_forward.1} parent=1 // pred_fallthru
      _
    // Predicated region
    $region6: #{lstm_model_forward.1} parent=1 // pred_check
      _
    $region7: #{lstm_model_forward.1} parent=1 // pred_check_branch
      %34 = sbr.rel (0) target = $region9
    $region8: #{lstm_model_forward.1} parent=1 // pred_region
      %s36 = ssub.s32 384, 384
      %37 = vsyncadd [#allocation4], %s36
      %s38 = sshll.u32 [#allocation3], 4
      %s39 = int_to_ptr.vmem [resolvable:$true] %s38
      %44 = dma.hbm_to_vmem [thread:$0]  %s1, 384, %s39, [#allocation4], 128, 128, 8
    $region9: #{lstm_model_forward.1} parent=1 // pred_fallthru
      _
    // Predicated region
    $region10: #{lstm_model_forward.1} parent=1 // pred_check
      _
    $region11: #{lstm_model_forward.1} parent=1 // pred_check_branch
      %46 = sbr.rel (0) target = $region13
    $region12: #{lstm_model_forward.1} parent=1 // pred_region
      _
    $region13: #{lstm_model_forward.1} parent=1 // pred_fallthru
      _
    // Predicated region
    $region14: #{lstm_model_forward.1} parent=1 // pred_check
      _
    $region15: #{lstm_model_forward.1} parent=1 // pred_check_branch
      %48 = sbr.rel (0) target = $region17
    $region16: #{lstm_model_forward.1} parent=1 // pred_region
      %s50 = ssub.s32 32, 32
      %51 = vsyncadd [#allocation6], %s50
      %s53 = sshll.u32 [#allocation5], 4
      %s54 = int_to_ptr.vmem [resolvable:$true] %s53
      %56 = dma.hbm_to_vmem [thread:$0]  %s3, 32, %s54, [#allocation6]
    $region17: #{lstm_model_forward.1} parent=1 // pred_fallthru
      _
    // Predicated region
    $region18: #{lstm_model_forward.1} parent=1 // pred_check
      _
    $region19: #{lstm_model_forward.1} parent=1 // pred_check_branch
      %58 = sbr.rel (0) target = $region21
    $region20: #{lstm_model_forward.1} parent=1 // pred_region
      %s60 = ssub.s32 1024, 1024
      %61 = vsyncadd [#allocation6], %s60
      %s62 = sshll.u32 [#allocation7], 4
      %s63 = int_to_ptr.vmem [resolvable:$true] %s62
      %68 = dma.hbm_to_vmem [thread:$0]  %s4, 1024, %s63, [#allocation6], 128, 128, 8
    $region21: #{lstm_model_forward.1} parent=1 // pred_fallthru
      _
    // Predicated region
    $region22: #{lstm_model_forward.1} parent=1 // pred_check
      _
    $region23: #{lstm_model_forward.1} parent=1 // pred_check_branch
      %70 = sbr.rel (0) target = $region25
    $region24: #{lstm_model_forward.1} parent=1 // pred_region
      %s72 = ssub.s32 1024, 1024
      %73 = vsyncadd [#allocation9], %s72
      %s74 = sshll.u32 [#allocation8], 4
      %s75 = int_to_ptr.vmem [resolvable:$true] %s74
      %80 = dma.hbm_to_vmem [thread:$0]  %s5, 1024, %s75, [#allocation9], 128, 128, 8
    $region25: #{lstm_model_forward.1} parent=1 // pred_fallthru
      _
    // Predicated region
    $region26: #{lstm_model_forward.1} parent=1 // pred_check
      _
    $region27: #{lstm_model_forward.1} parent=1 // pred_check_branch
      %82 = sbr.rel (0) target = $region29
    $region28: #{lstm_model_forward.1} parent=1 // pred_region
      %s84 = ssub.s32 32, 32
      %85 = vsyncadd [#allocation9], %s84
      %s87 = sshll.u32 [#allocation10], 4
      %s88 = int_to_ptr.vmem [resolvable:$true] %s87
      %90 = dma.hbm_to_vmem [thread:$0]  %s6, 32, %s88, [#allocation9]
    $region29: #{lstm_model_forward.1} parent=1 // pred_fallthru
      _
    // Predicated region
    $region30: #{lstm_model_forward.1} parent=1 // pred_check
      _
    $region31: #{lstm_model_forward.1} parent=1 // pred_check_branch
      %92 = sbr.rel (0) target = $region33
    $region32: #{lstm_model_forward.1} parent=1 // pred_region
      %s94 = ssub.s32 1024, 1024
      %95 = vsyncadd [#allocation12], %s94
      %s96 = sshll.u32 [#allocation11], 4
      %s97 = int_to_ptr.vmem [resolvable:$true] %s96
      %102 = dma.hbm_to_vmem [thread:$0]  %s7, 1024, %s97, [#allocation12], 128, 128, 8
    $region33: #{lstm_model_forward.1} parent=1 // pred_fallthru
      _
    // Predicated region
    $region34: #{lstm_model_forward.1} parent=1 // pred_check
      _
    $region35: #{lstm_model_forward.1} parent=1 // pred_check_branch
      %104 = sbr.rel (0) target = $region37
    $region36: #{lstm_model_forward.1} parent=1 // pred_region
      %s106 = ssub.s32 1024, 1024
      %107 = vsyncadd [#allocation12], %s106
      %s108 = sshll.u32 [#allocation13], 4
      %s109 = int_to_ptr.vmem [resolvable:$true] %s108
      %114 = dma.hbm_to_vmem [thread:$0]  %s8, 1024, %s109, [#allocation12], 128, 128, 8
    $region37: #{lstm_model_forward.1} parent=1 // pred_fallthru
      _
    // Predicated region
    $region38: #{lstm_model_forward.1} parent=1 // pred_check
      _
    $region39: #{lstm_model_forward.1} parent=1 // pred_check_branch
      %116 = sbr.rel (0) target = $region41
    $region40: #{lstm_model_forward.1} parent=1 // pred_region
      %s118 = ssub.s32 32, 32
      %119 = vsyncadd [#allocation15], %s118
      %s121 = sshll.u32 [#allocation14], 4
      %s122 = int_to_ptr.vmem [resolvable:$true] %s121
      %124 = dma.hbm_to_vmem [thread:$0]  %s9, 32, %s122, [#allocation15]
    $region41: #{lstm_model_forward.1} parent=1 // pred_fallthru
      _
    // Predicated region
    $region42: #{lstm_model_forward.1} parent=1 // pred_check
      _
    $region43: #{lstm_model_forward.1} parent=1 // pred_check_branch
      %126 = sbr.rel (0) target = $region45
    $region44: #{lstm_model_forward.1} parent=1 // pred_region
      %s128 = ssub.s32 512, 512
      %129 = vsyncadd [#allocation15], %s128
      %s130 = sshll.u32 [#allocation16], 4
      %s131 = int_to_ptr.vmem [resolvable:$true] %s130
      %136 = dma.hbm_to_vmem [thread:$0]  %s10, 512, %s131, [#allocation15], 64, 64, 4
    $region45: #{lstm_model_forward.1} parent=1 // pred_fallthru
      _
    // Predicated region
    $region46: #{lstm_model_forward.1} parent=1 // pred_check
      _
    $region47: #{lstm_model_forward.1} parent=1 // pred_check_branch
      %138 = sbr.rel (0) target = $region49
    $region48: #{lstm_model_forward.1} parent=1 // pred_region
      %s140 = ssub.s32 16, 16
      %141 = vsyncadd [#allocation18], %s140
      %s143 = sshll.u32 [#allocation17], 4
      %s144 = int_to_ptr.vmem [resolvable:$true] %s143
      %146 = dma.hbm_to_vmem [thread:$0]  %s11, 16, %s144, [#allocation18]
    $region49: #{lstm_model_forward.1} parent=1 // pred_fallthru
      _
    // Predicated region
    $region50: #{lstm_model_forward.1} parent=1 // pred_check
      _
    $region51: #{lstm_model_forward.1} parent=1 // pred_check_branch
      %148 = sbr.rel (0) target = $region53
    $region52: #{lstm_model_forward.1} parent=1 // pred_region
      %s150 = ssub.s32 1024, 1024
      %151 = vsyncadd [#allocation18], %s150
      %s152 = sshll.u32 [#allocation19], 4
      %s153 = int_to_ptr.vmem [resolvable:$true] %s152
      %158 = dma.hbm_to_vmem [thread:$0]  %s12, 1024, %s153, [#allocation18], 64, 64, 4
    $region53: #{lstm_model_forward.1} parent=1 // pred_fallthru
      _
    // Predicated region
    $region54: #{lstm_model_forward.1} parent=1 // pred_check
      _
    $region55: #{lstm_model_forward.1} parent=1 // pred_check_branch
      %160 = sbr.rel (0) target = $region57
    $region56: #{lstm_model_forward.1} parent=1 // pred_region
      %s162 = ssub.s32 16, 16
      %163 = vsyncadd [#allocation21], %s162
      %s165 = sshll.u32 [#allocation20], 4
      %s166 = int_to_ptr.vmem [resolvable:$true] %s165
      %168 = dma.hbm_to_vmem [thread:$0]  %s13, 16, %s166, [#allocation21]
    $region57: #{lstm_model_forward.1} parent=1 // pred_fallthru
      _
    // Predicated region
    $region58: #{lstm_model_forward.1} parent=1 // pred_check
      _
    $region59: #{lstm_model_forward.1} parent=1 // pred_check_branch
      %170 = sbr.rel (0) target = $region61
    $region60: #{lstm_model_forward.1} parent=1 // pred_region
      _
    $region61: #{lstm_model_forward.1} parent=1 // pred_fallthru
      _
    // Predicated region
    $region62: #{lstm_model_forward.1} parent=1 // pred_check
      _
    $region63: #{lstm_model_forward.1} parent=1 // pred_check_branch
      %172 = sbr.rel (0) target = $region65
    $region64: #{lstm_model_forward.1} parent=1 // pred_region
      %s174 = ssub.s32 16, 16
      %175 = vsyncadd [#allocation21], %s174
      %s177 = sshll.u32 [#allocation22], 4
      %s178 = int_to_ptr.vmem [resolvable:$true] %s177
      %180 = dma.hbm_to_vmem [thread:$0]  %s15, 16, %s178, [#allocation21]
    $region65: #{lstm_model_forward.1} parent=1 // pred_fallthru
      _
    // Predicated region
    $region66: #{lstm_model_forward.1} parent=1 // pred_check
      _
    $region67: #{lstm_model_forward.1} parent=1 // pred_check_branch
      %182 = sbr.rel (0) target = $region69
    $region68: #{lstm_model_forward.1} parent=1 // pred_region
      %s184 = ssub.s32 1024, 1024
      %185 = vsyncadd [#allocation24], %s184
      %s186 = sshll.u32 [#allocation23], 4
      %s187 = int_to_ptr.vmem [resolvable:$true] %s186
      %192 = dma.hbm_to_vmem [thread:$0]  %s16, 1024, %s187, [#allocation24], 64, 64, 4
    $region69: #{lstm_model_forward.1} parent=1 // pred_fallthru
      _
    // Predicated region
    $region70: #{lstm_model_forward.1} parent=1 // pred_check
      _
    $region71: #{lstm_model_forward.1} parent=1 // pred_check_branch
      %194 = sbr.rel (0) target = $region73
    $region72: #{lstm_model_forward.1} parent=1 // pred_region
      %s196 = ssub.s32 16, 16
      %197 = vsyncadd [#allocation24], %s196
      %s199 = sshll.u32 [#allocation25], 4
      %s200 = int_to_ptr.vmem [resolvable:$true] %s199
      %202 = dma.hbm_to_vmem [thread:$0]  %s17, 16, %s200, [#allocation24]
    $region73: #{lstm_model_forward.1} parent=1 // pred_fallthru
      _
    // Predicated region
    $region74: #{lstm_model_forward.1} parent=1 // pred_check
      _
    $region75: #{lstm_model_forward.1} parent=1 // pred_check_branch
      %204 = sbr.rel (0) target = $region77
    $region76: #{lstm_model_forward.1} parent=1 // pred_region
      %205 = dma.done [#allocation4], 384
    $region77: #{lstm_model_forward.1} parent=1 // pred_fallthru
      _
    // Predicated region
    $region78: #{lstm_model_forward.1} parent=1 // pred_check
      _
    $region79: #{lstm_model_forward.1} parent=1 // pred_check_branch
      %207 = sbr.rel (0) target = $region81
    $region80: #{lstm_model_forward.1} parent=1 // pred_region
      %208 = dma.done [#allocation6], 32
    $region81: #{lstm_model_forward.1} parent=1 // pred_fallthru
      _
    // Predicated region
    $region82: #{lstm_model_forward.1} parent=1 // pred_check
      _
    $region83: #{lstm_model_forward.1} parent=1 // pred_check_branch
      %210 = sbr.rel (0) target = $region85
    $region84: #{lstm_model_forward.1} parent=1 // pred_region
      %211 = dma.done [#allocation6], 1024
    $region85: #{lstm_model_forward.1} parent=1 // pred_fallthru
      _
    // Predicated region
    $region86: #{lstm_model_forward.1} parent=1 // pred_check
      _
    $region87: #{lstm_model_forward.1} parent=1 // pred_check_branch
      %213 = sbr.rel (0) target = $region89
    $region88: #{lstm_model_forward.1} parent=1 // pred_region
      %214 = dma.done [#allocation9], 1024
    $region89: #{lstm_model_forward.1} parent=1 // pred_fallthru
      _
    // Predicated region
    $region90: #{lstm_model_forward.1} parent=1 // pred_check
      _
    $region91: #{lstm_model_forward.1} parent=1 // pred_check_branch
      %216 = sbr.rel (0) target = $region93
    $region92: #{lstm_model_forward.1} parent=1 // pred_region
      %217 = dma.done [#allocation9], 32
    $region93: #{lstm_model_forward.1} parent=1 // pred_fallthru
      _
    // Predicated region
    $region94: #{lstm_model_forward.1} parent=1 // pred_check
      _
    $region95: #{lstm_model_forward.1} parent=1 // pred_check_branch
      %219 = sbr.rel (0) target = $region97
    $region96: #{lstm_model_forward.1} parent=1 // pred_region
      %220 = dma.done [#allocation12], 1024
    $region97: #{lstm_model_forward.1} parent=1 // pred_fallthru
      _
    // Predicated region
    $region98: #{lstm_model_forward.1} parent=1 // pred_check
      _
    $region99: #{lstm_model_forward.1} parent=1 // pred_check_branch
      %222 = sbr.rel (0) target = $region101
    $region100: #{lstm_model_forward.1} parent=1 // pred_region
      %223 = dma.done [#allocation12], 1024
    $region101: #{lstm_model_forward.1} parent=1 // pred_fallthru
      _
    // Predicated region
    $region102: #{lstm_model_forward.1} parent=1 // pred_check
      _
    $region103: #{lstm_model_forward.1} parent=1 // pred_check_branch
      %225 = sbr.rel (0) target = $region105
    $region104: #{lstm_model_forward.1} parent=1 // pred_region
      %226 = dma.done [#allocation15], 32
    $region105: #{lstm_model_forward.1} parent=1 // pred_fallthru
      _
    // Predicated region
    $region106: #{lstm_model_forward.1} parent=1 // pred_check
      _
    $region107: #{lstm_model_forward.1} parent=1 // pred_check_branch
      %228 = sbr.rel (0) target = $region109
    $region108: #{lstm_model_forward.1} parent=1 // pred_region
      %229 = dma.done [#allocation15], 512
    $region109: #{lstm_model_forward.1} parent=1 // pred_fallthru
      _
    // Predicated region
    $region110: #{lstm_model_forward.1} parent=1 // pred_check
      _
    $region111: #{lstm_model_forward.1} parent=1 // pred_check_branch
      %231 = sbr.rel (0) target = $region113
    $region112: #{lstm_model_forward.1} parent=1 // pred_region
      %232 = dma.done [#allocation18], 16
    $region113: #{lstm_model_forward.1} parent=1 // pred_fallthru
      _
    // Predicated region
    $region114: #{lstm_model_forward.1} parent=1 // pred_check
      _
    $region115: #{lstm_model_forward.1} parent=1 // pred_check_branch
      %234 = sbr.rel (0) target = $region117
    $region116: #{lstm_model_forward.1} parent=1 // pred_region
      %235 = dma.done [#allocation18], 1024
    $region117: #{lstm_model_forward.1} parent=1 // pred_fallthru
      _
    // Predicated region
    $region118: #{lstm_model_forward.1} parent=1 // pred_check
      _
    $region119: #{lstm_model_forward.1} parent=1 // pred_check_branch
      %237 = sbr.rel (0) target = $region121
    $region120: #{lstm_model_forward.1} parent=1 // pred_region
      %238 = dma.done [#allocation21], 16
    $region121: #{lstm_model_forward.1} parent=1 // pred_fallthru
      _
    // Predicated region
    $region122: #{lstm_model_forward.1} parent=1 // pred_check
      _
    $region123: #{lstm_model_forward.1} parent=1 // pred_check_branch
      %240 = sbr.rel (0) target = $region125
    $region124: #{lstm_model_forward.1} parent=1 // pred_region
      %241 = dma.done [#allocation21], 16
    $region125: #{lstm_model_forward.1} parent=1 // pred_fallthru
      _
    // Predicated region
    $region126: #{lstm_model_forward.1} parent=1 // pred_check
      _
    $region127: #{lstm_model_forward.1} parent=1 // pred_check_branch
      %243 = sbr.rel (0) target = $region129
    $region128: #{lstm_model_forward.1} parent=1 // pred_region
      %244 = dma.done [#allocation24], 1024
    $region129: #{lstm_model_forward.1} parent=1 // pred_fallthru
      _
    // Predicated region
    $region130: #{lstm_model_forward.1} parent=1 // pred_check
      _
    $region131: #{lstm_model_forward.1} parent=1 // pred_check_branch
      %246 = sbr.rel (0) target = $region133
    $region132: #{lstm_model_forward.1} parent=1 // pred_region
      %247 = dma.done [#allocation24], 16
    $region133: #{lstm_model_forward.1} parent=1 // pred_fallthru
      _
    %v249 = vld [vmem:[%s0] sm:$0xf]
    %v250 = vld [vmem:[%s0 + $0x4] sm:$0xf]
    %v251 = vld [vmem:[%s0 + $0x8] sm:$0xf]
    %v252 = vld [vmem:[%s0 + $0xc] sm:$0xf]
    %v253 = vld [vmem:[%s0 + $0x10] sm:$0xf]
    %v254 = vld [vmem:[%s0 + $0x14] sm:$0xf]
    %v255 = vld [vmem:[%s0 + $0x18] sm:$0xf]
    %v256 = vld [vmem:[%s0 + $0x1c] sm:$0xf]
    %v257 = vld [vmem:[#allocation3] sm:$0xff]
    %v258 = vld [vmem:[#allocation3 + $0x8] sm:$0xff]
    %v259 = vld [vmem:[#allocation3 + $0x10] sm:$0xff]
    %v260 = vld [vmem:[#allocation5] sm:$0x3]
    %v262 = vlaneseq
    %v263 = vshrl.u32 %v262, 7
    %v264 = vsub.s32 0, %v263
    %v265 = vrot.slane %v260, %v264
    %v266 = vlaneseq
    %v267 = vshrl.u32 %v266, 7
    %v268 = vsub.s32 1, %v267
    %v269 = vrot.slane %v260, %v268
    %v280 = vunpack.c.l.b16 %v249
    %v281 = vunpack.c.l.b16 %v250
    %v282 = vunpack.c.l.b16 %v251
    %v283 = vunpack.c.l.b16 %v252
    %v284 = vunpack.c.l.b16 %v253
    %v285 = vunpack.c.l.b16 %v254
    %v286 = vunpack.c.l.b16 %v255
    %v287 = vunpack.c.l.b16 %v256
    %v288 = vpack.c.b16 %v281, %v280
    %v289 = vpack.c.b16 %v283, %v282
    %v290 = vpack.c.b16 %v285, %v284
    %v291 = vpack.c.b16 %v287, %v286
    %v295 = vunpack.c.l.b16 %v257
    %v296 = vunpack.c.h.b16 %v257
    %v297 = vunpack.c.l.b16 %v258
    %v298 = vunpack.c.h.b16 %v258
    %v299 = vunpack.c.l.b16 %v259
    %v300 = vunpack.c.h.b16 %v259
    %v301 = vpack.c.b16 %v297, %v295
    %v302 = vpack.c.b16 %v298, %v296
    %v303 = vpack.c.b16 %v299, %v299
    %v304 = vpack.c.b16 %v300, %v300
    %vm307 = vcmask 195584
    %v309 = vsel %vm307, %v288, 0
    %v312 = vsel %vm307, %v289, 0
    %v315 = vsel %vm307, %v290, 0
    %v318 = vsel %vm307, %v291, 0
    %vm320 = vcmask 1043456
    %v322 = vsel %vm320, %v303, 0
    %v325 = vsel %vm320, %v304, 0
    %327 = vmatprep.subr.bf16.mxu0 %v302
    %328 = vmatpush1.bf16.msra.mxu0 %v301
    %329 = vmatprep.subr.bf16.mxu0 %v325
    %330 = vmatpush1.bf16.msra.mxu0 %v322
    %331 = vmatprep.subr.bf16.mxu0 0
    %332 = vmatpush1.bf16.msra.mxu0 0
    %333 = vmatprep.subr.bf16.mxu0 0
    %334 = vmatpush1.bf16.msra.mxu0 0
    %335 = vmatprep.subr.bf16.mxu0 0
    %336 = vmatpush1.bf16.msra.mxu0 0
    %337 = vmatprep.subr.bf16.mxu0 0
    %338 = vmatpush1.bf16.msra.mxu0 0
    %339 = vmatprep.subr.bf16.mxu0 0
    %340 = vmatpush1.bf16.msra.mxu0 0
    %341 = vmatprep.subr.bf16.mxu0 0
    %342 = vmatpush1.bf16.msra.mxu0 0
    %343 = vmatprep.subr.bf16.mxu0 0
    %344 = vmatpush1.bf16.msra.mxu0 0
    %345 = vmatprep.subr.bf16.mxu0 0
    %346 = vmatpush1.bf16.msra.mxu0 0
    %347 = vmatprep.subr.bf16.mxu0 0
    %348 = vmatpush1.bf16.msra.mxu0 0
    %349 = vmatprep.subr.bf16.mxu0 0
    %350 = vmatpush1.bf16.msra.mxu0 0
    %351 = vmatprep.subr.bf16.mxu0 0
    %352 = vmatpush1.bf16.msra.mxu0 0
    %353 = vmatprep.subr.bf16.mxu0 0
    %354 = vmatpush1.bf16.msra.mxu0 0
    %355 = vmatprep.subr.bf16.mxu0 0
    %356 = vmatpush1.bf16.msra.mxu0 0
    %357 = vmatprep.subr.bf16.mxu0 0
    %358 = vmatpush1.bf16.msra.mxu0 0
    %359 = vmatprep.mubr.bf16.mxu0 0
    %360 = vmatmul.mubr.bf16.gmra.mrb[0].mxu0 %v309
    %v361 = vpop.f32.mrb[0].mxu0
    %v362 = vadd.f32 %v265, %v361
    %v363 = vpop.f32.mrb[0].mxu0
    %v364 = vadd.f32 %v269, %v363
    %v365 = vpop.f32.mrb[0].mxu0
    %v366 = vadd.f32 %v265, %v365
    %v367 = vpop.f32.mrb[0].mxu0
    %v368 = vadd.f32 %v269, %v367
    %369 = vmatprep.mubr.bf16.mxu0 0
    %370 = vmatmul.mubr.bf16.gmra.mrb[0].mxu0 %v312
    %v371 = vpop.f32.mrb[0].mxu0
    %v372 = vadd.f32 %v265, %v371
    %v373 = vpop.f32.mrb[0].mxu0
    %v374 = vadd.f32 %v269, %v373
    %v375 = vpop.f32.mrb[0].mxu0
    %v376 = vadd.f32 %v265, %v375
    %v377 = vpop.f32.mrb[0].mxu0
    %v378 = vadd.f32 %v269, %v377
    %379 = vmatprep.mubr.bf16.mxu0 0
    %380 = vmatmul.mubr.bf16.gmra.mrb[0].mxu0 %v315
    %v381 = vpop.f32.mrb[0].mxu0
    %v382 = vadd.f32 %v265, %v381
    %v383 = vpop.f32.mrb[0].mxu0
    %v384 = vadd.f32 %v269, %v383
    %v385 = vpop.f32.mrb[0].mxu0
    %v386 = vadd.f32 %v265, %v385
    %v387 = vpop.f32.mrb[0].mxu0
    %v388 = vadd.f32 %v269, %v387
    %389 = vmatprep.mubr.bf16.mxu0 0
    %390 = vmatmul.mubr.bf16.gmra.mrb[0].mxu0 %v318
    %v391 = vpop.f32.mrb[0].mxu0
    %v392 = vadd.f32 %v265, %v391
    %v393 = vpop.f32.mrb[0].mxu0
    %v394 = vadd.f32 %v269, %v393
    %v395 = vpop.f32.mrb[0].mxu0
    %v396 = vadd.f32 %v265, %v395
    %v397 = vpop.f32.mrb[0].mxu0
    %v398 = vadd.f32 %v269, %v397
    %399 = vdwg.mxu0
    %400 = vst [vmem:[#allocation2] sm:$0xff] %v362
    %401 = vst [vmem:[#allocation2 + $0x8] sm:$0xff] %v364
    %402 = vst [vmem:[#allocation2 + $0x10] sm:$0xff] %v366
    %403 = vst [vmem:[#allocation2 + $0x18] sm:$0xff] %v368
    %404 = vst [vmem:[#allocation2 + $0x20] sm:$0xff] %v372
    %405 = vst [vmem:[#allocation2 + $0x28] sm:$0xff] %v374
    %406 = vst [vmem:[#allocation2 + $0x30] sm:$0xff] %v376
    %407 = vst [vmem:[#allocation2 + $0x38] sm:$0xff] %v378
    %408 = vst [vmem:[#allocation2 + $0x40] sm:$0xff] %v382
    %409 = vst [vmem:[#allocation2 + $0x48] sm:$0xff] %v384
    %410 = vst [vmem:[#allocation2 + $0x50] sm:$0xff] %v386
    %411 = vst [vmem:[#allocation2 + $0x58] sm:$0xff] %v388
    %412 = vst [vmem:[#allocation2 + $0x60] sm:$0xff] %v392
    %413 = vst [vmem:[#allocation2 + $0x68] sm:$0xff] %v394
    %414 = vst [vmem:[#allocation2 + $0x70] sm:$0xff] %v396
    %415 = vst [vmem:[#allocation2 + $0x78] sm:$0xff] %v398
    %v416 = vld [vmem:[%s2] sm:$0xff]
    %v417 = vld [vmem:[%s2 + $0x8] sm:$0xff]
    %v418 = vld [vmem:[%s2 + $0x10] sm:$0xff]
    %v419 = vld [vmem:[%s2 + $0x18] sm:$0xff]
    %v420 = vld [vmem:[%s2 + $0x20] sm:$0xff]
    %v421 = vld [vmem:[%s2 + $0x28] sm:$0xff]
    %v422 = vld [vmem:[%s2 + $0x30] sm:$0xff]
    %v423 = vld [vmem:[%s2 + $0x38] sm:$0xff]
    %v432 = vunpack.c.l.b16 %v416
    %v433 = vunpack.c.h.b16 %v416
    %v434 = vunpack.c.l.b16 %v417
    %v435 = vunpack.c.h.b16 %v417
    %v436 = vunpack.c.l.b16 %v418
    %v437 = vunpack.c.h.b16 %v418
    %v438 = vunpack.c.l.b16 %v419
    %v439 = vunpack.c.h.b16 %v419
    %v440 = vunpack.c.l.b16 %v420
    %v441 = vunpack.c.h.b16 %v420
    %v442 = vunpack.c.l.b16 %v421
    %v443 = vunpack.c.h.b16 %v421
    %v444 = vunpack.c.l.b16 %v422
    %v445 = vunpack.c.h.b16 %v422
    %v446 = vunpack.c.l.b16 %v423
    %v447 = vunpack.c.h.b16 %v423
    %v448 = vpack.c.b16 %v434, %v432
    %v449 = vpack.c.b16 %v435, %v433
    %v450 = vpack.c.b16 %v438, %v436
    %v451 = vpack.c.b16 %v439, %v437
    %v452 = vpack.c.b16 %v442, %v440
    %v453 = vpack.c.b16 %v443, %v441
    %v454 = vpack.c.b16 %v446, %v444
    %v455 = vpack.c.b16 %v447, %v445
    %vm464 = vcmask 523264
    %v466 = vsel %vm464, 0, 0
    %468 = vmatprep.subr.bf16.mxu0 %v449
    %469 = vmatpush1.bf16.msra.mxu0 %v448
    %470 = vmatprep.subr.bf16.mxu0 %v451
    %471 = vmatpush1.bf16.msra.mxu0 %v450
    %472 = vmatprep.subr.bf16.mxu0 %v453
    %473 = vmatpush1.bf16.msra.mxu0 %v452
    %474 = vmatprep.subr.bf16.mxu0 %v455
    %475 = vmatpush1.bf16.msra.mxu0 %v454
    %476 = vmatprep.subr.bf16.mxu0 0
    %477 = vmatpush1.bf16.msra.mxu0 0
    %478 = vmatprep.subr.bf16.mxu0 0
    %479 = vmatpush1.bf16.msra.mxu0 0
    %480 = vmatprep.subr.bf16.mxu0 0
    %481 = vmatpush1.bf16.msra.mxu0 0
    %482 = vmatprep.subr.bf16.mxu0 0
    %483 = vmatpush1.bf16.msra.mxu0 0
    %484 = vmatprep.subr.bf16.mxu0 0
    %485 = vmatpush1.bf16.msra.mxu0 0
    %486 = vmatprep.subr.bf16.mxu0 0
    %487 = vmatpush1.bf16.msra.mxu0 0
    %488 = vmatprep.subr.bf16.mxu0 0
    %489 = vmatpush1.bf16.msra.mxu0 0
    %490 = vmatprep.subr.bf16.mxu0 0
    %491 = vmatpush1.bf16.msra.mxu0 0
    %492 = vmatprep.subr.bf16.mxu0 0
    %493 = vmatpush1.bf16.msra.mxu0 0
    %494 = vmatprep.subr.bf16.mxu0 0
    %495 = vmatpush1.bf16.msra.mxu0 0
    %496 = vmatprep.subr.bf16.mxu0 0
    %497 = vmatpush1.bf16.msra.mxu0 0
    %498 = vmatprep.subr.bf16.mxu0 0
    %499 = vmatpush1.bf16.msra.mxu0 0
    %500 = vmatprep.mubr.bf16.mxu0 0
    %501 = vmatmul.mubr.bf16.gmra.mrb[0].mxu0 %v466
    %v502 = vpop.f32.mrb[0].mxu0
    %v503 = vadd.f32 0.0, %v502
    %v504 = vpop.f32.mrb[0].mxu0
    %v505 = vadd.f32 0.0, %v504
    %v506 = vpop.f32.mrb[0].mxu0
    %v507 = vpop.f32.mrb[0].mxu0
    %508 = vdwg.mxu0
    %v509 = vld [vmem:[#allocation2] sm:$0xff]
    %v510 = vld [vmem:[#allocation2 + $0x8] sm:$0xff]
    %v511 = vadd.f32 %v509, %v503
    %v512 = vadd.f32 %v510, %v505
    %v513 = vxor.u32 %v511, 2147483648
    %v514 = vmul.f32 %v513, 1.442695
    %v515 = vpow.pop %v514
    %v516 = vadd.f32 %v515, 1.0
    %v517 = vrcp.pop %v516
    %v518 = vmul.f32 1.0, %v517
    %v519 = vtanh.pop %v512
    %v520 = vxor.u32 %v512, 2147483648
    %v521 = vmul.f32 %v520, 1.442695
    %v522 = vpow.pop %v521
    %v523 = vadd.f32 %v522, 1.0
    %v524 = vrcp.pop %v523
    %v525 = vmul.f32 1.0, %v524
    %v526 = vmul.f32 %v518, 0.0
    %v527 = vmul.f32 %v518, %v519
    %529 = vrot.lane.b32.xlu0 %v527, 64
    %v530 = vpop.permute.xlu0 %529
    %v532 = vadd.f32 %v526, %v530
    %v533 = vtanh.pop %v532
    %v534 = vmul.f32 %v525, %v533
    %v535 = vpack.c.bf16 %v534, %v534
    %537 = vrot.lane.b32.xlu0 %v535, 64
    %v538 = vpop.permute.xlu0 %537
    %v540 = vsel %vm464, %v538, 0
    %542 = vmatprep.subr.bf16.mxu0 %v449
    %543 = vmatpush1.bf16.msra.mxu0 %v448
    %544 = vmatprep.subr.bf16.mxu0 %v451
    %545 = vmatpush1.bf16.msra.mxu0 %v450
    %546 = vmatprep.subr.bf16.mxu0 %v453
    %547 = vmatpush1.bf16.msra.mxu0 %v452
    %548 = vmatprep.subr.bf16.mxu0 %v455
    %549 = vmatpush1.bf16.msra.mxu0 %v454
    %550 = vmatprep.subr.bf16.mxu0 0
    %551 = vmatpush1.bf16.msra.mxu0 0
    %552 = vmatprep.subr.bf16.mxu0 0
    %553 = vmatpush1.bf16.msra.mxu0 0
    %554 = vmatprep.subr.bf16.mxu0 0
    %555 = vmatpush1.bf16.msra.mxu0 0
    %556 = vmatprep.subr.bf16.mxu0 0
    %557 = vmatpush1.bf16.msra.mxu0 0
    %558 = vmatprep.subr.bf16.mxu0 0
    %559 = vmatpush1.bf16.msra.mxu0 0
    %560 = vmatprep.subr.bf16.mxu0 0
    %561 = vmatpush1.bf16.msra.mxu0 0
    %562 = vmatprep.subr.bf16.mxu0 0
    %563 = vmatpush1.bf16.msra.mxu0 0
    %564 = vmatprep.subr.bf16.mxu0 0
    %565 = vmatpush1.bf16.msra.mxu0 0
    %566 = vmatprep.subr.bf16.mxu0 0
    %567 = vmatpush1.bf16.msra.mxu0 0
    %568 = vmatprep.subr.bf16.mxu0 0
    %569 = vmatpush1.bf16.msra.mxu0 0
    %570 = vmatprep.subr.bf16.mxu0 0
    %571 = vmatpush1.bf16.msra.mxu0 0
    %572 = vmatprep.subr.bf16.mxu0 0
    %573 = vmatpush1.bf16.msra.mxu0 0
    %574 = vmatprep.mubr.bf16.mxu0 0
    %575 = vmatmul.mubr.bf16.gmra.mrb[0].mxu0 %v540
    %v576 = vpop.f32.mrb[0].mxu0
    %v577 = vadd.f32 0.0, %v576
    %v578 = vpop.f32.mrb[0].mxu0
    %v579 = vadd.f32 0.0, %v578
    %v580 = vpop.f32.mrb[0].mxu0
    %v581 = vpop.f32.mrb[0].mxu0
    %582 = vdwg.mxu0
    %v583 = vld [vmem:[#allocation2 + $0x10] sm:$0xff]
    %v584 = vld [vmem:[#allocation2 + $0x18] sm:$0xff]
    %v585 = vadd.f32 %v583, %v577
    %v586 = vadd.f32 %v584, %v579
    %v587 = vxor.u32 %v585, 2147483648
    %v588 = vmul.f32 %v587, 1.442695
    %v589 = vpow.pop %v588
    %v590 = vadd.f32 %v589, 1.0
    %v591 = vrcp.pop %v590
    %v592 = vmul.f32 1.0, %v591
    %v593 = vtanh.pop %v586
    %v594 = vxor.u32 %v586, 2147483648
    %v595 = vmul.f32 %v594, 1.442695
    %v596 = vpow.pop %v595
    %v597 = vadd.f32 %v596, 1.0
    %v598 = vrcp.pop %v597
    %v599 = vmul.f32 1.0, %v598
    %v600 = vmul.f32 %v592, %v532
    %v601 = vmul.f32 %v592, %v593
    %603 = vrot.lane.b32.xlu0 %v601, 64
    %v604 = vpop.permute.xlu0 %603
    %v606 = vadd.f32 %v600, %v604
    %v607 = vtanh.pop %v606
    %v608 = vmul.f32 %v599, %v607
    %v609 = vld [vmem:[#allocation8] sm:$0xff]
    %v610 = vld [vmem:[#allocation8 + $0x8] sm:$0xff]
    %v611 = vld [vmem:[#allocation8 + $0x10] sm:$0xff]
    %v612 = vld [vmem:[#allocation8 + $0x18] sm:$0xff]
    %v613 = vld [vmem:[#allocation8 + $0x20] sm:$0xff]
    %v614 = vld [vmem:[#allocation8 + $0x28] sm:$0xff]
    %v615 = vld [vmem:[#allocation8 + $0x30] sm:$0xff]
    %v616 = vld [vmem:[#allocation8 + $0x38] sm:$0xff]
    %v625 = vunpack.c.l.b16 %v609
    %v626 = vunpack.c.h.b16 %v609
    %v627 = vunpack.c.l.b16 %v610
    %v628 = vunpack.c.h.b16 %v610
    %v629 = vunpack.c.l.b16 %v611
    %v630 = vunpack.c.h.b16 %v611
    %v631 = vunpack.c.l.b16 %v612
    %v632 = vunpack.c.h.b16 %v612
    %v633 = vunpack.c.l.b16 %v613
    %v634 = vunpack.c.h.b16 %v613
    %v635 = vunpack.c.l.b16 %v614
    %v636 = vunpack.c.h.b16 %v614
    %v637 = vunpack.c.l.b16 %v615
    %v638 = vunpack.c.h.b16 %v615
    %v639 = vunpack.c.l.b16 %v616
    %v640 = vunpack.c.h.b16 %v616
    %v641 = vpack.c.b16 %v627, %v625
    %v642 = vpack.c.b16 %v628, %v626
    %v643 = vpack.c.b16 %v631, %v629
    %v644 = vpack.c.b16 %v632, %v630
    %v645 = vpack.c.b16 %v635, %v633
    %v646 = vpack.c.b16 %v636, %v634
    %v647 = vpack.c.b16 %v639, %v637
    %v648 = vpack.c.b16 %v640, %v638
    %657 = vmatprep.subr.bf16.mxu0 %v642
    %658 = vmatpush1.bf16.msra.mxu0 %v641
    %659 = vmatprep.subr.bf16.mxu0 %v644
    %660 = vmatpush1.bf16.msra.mxu0 %v643
    %661 = vmatprep.subr.bf16.mxu0 %v646
    %662 = vmatpush1.bf16.msra.mxu0 %v645
    %663 = vmatprep.subr.bf16.mxu0 %v648
    %664 = vmatpush1.bf16.msra.mxu0 %v647
    %665 = vmatprep.subr.bf16.mxu0 0
    %666 = vmatpush1.bf16.msra.mxu0 0
    %667 = vmatprep.subr.bf16.mxu0 0
    %668 = vmatpush1.bf16.msra.mxu0 0
    %669 = vmatprep.subr.bf16.mxu0 0
    %670 = vmatpush1.bf16.msra.mxu0 0
    %671 = vmatprep.subr.bf16.mxu0 0
    %672 = vmatpush1.bf16.msra.mxu0 0
    %673 = vmatprep.subr.bf16.mxu0 0
    %674 = vmatpush1.bf16.msra.mxu0 0
    %675 = vmatprep.subr.bf16.mxu0 0
    %676 = vmatpush1.bf16.msra.mxu0 0
    %677 = vmatprep.subr.bf16.mxu0 0
    %678 = vmatpush1.bf16.msra.mxu0 0
    %679 = vmatprep.subr.bf16.mxu0 0
    %680 = vmatpush1.bf16.msra.mxu0 0
    %681 = vmatprep.subr.bf16.mxu0 0
    %682 = vmatpush1.bf16.msra.mxu0 0
    %683 = vmatprep.subr.bf16.mxu0 0
    %684 = vmatpush1.bf16.msra.mxu0 0
    %685 = vmatprep.subr.bf16.mxu0 0
    %686 = vmatpush1.bf16.msra.mxu0 0
    %687 = vmatprep.subr.bf16.mxu0 0
    %688 = vmatpush1.bf16.msra.mxu0 0
    %689 = vmatprep.mubr.bf16.mxu0 0
    %690 = vmatmul.mubr.bf16.gmra.mrb[0].mxu0 %v466
    %v691 = vpop.f32.mrb[0].mxu0
    %v692 = vadd.f32 0.0, %v691
    %v693 = vpop.f32.mrb[0].mxu0
    %v694 = vadd.f32 0.0, %v693
    %v695 = vpop.f32.mrb[0].mxu0
    %v696 = vpop.f32.mrb[0].mxu0
    %697 = vdwg.mxu0
    %v698 = vld [vmem:[#allocation7] sm:$0xff]
    %v699 = vld [vmem:[#allocation7 + $0x8] sm:$0xff]
    %v700 = vld [vmem:[#allocation7 + $0x10] sm:$0xff]
    %v701 = vld [vmem:[#allocation7 + $0x18] sm:$0xff]
    %v702 = vld [vmem:[#allocation7 + $0x20] sm:$0xff]
    %v703 = vld [vmem:[#allocation7 + $0x28] sm:$0xff]
    %v704 = vld [vmem:[#allocation7 + $0x30] sm:$0xff]
    %v705 = vld [vmem:[#allocation7 + $0x38] sm:$0xff]
    %v714 = vunpack.c.l.b16 %v698
    %v715 = vunpack.c.h.b16 %v698
    %v716 = vunpack.c.l.b16 %v699
    %v717 = vunpack.c.h.b16 %v699
    %v718 = vunpack.c.l.b16 %v700
    %v719 = vunpack.c.h.b16 %v700
    %v720 = vunpack.c.l.b16 %v701
    %v721 = vunpack.c.h.b16 %v701
    %v722 = vunpack.c.l.b16 %v702
    %v723 = vunpack.c.h.b16 %v702
    %v724 = vunpack.c.l.b16 %v703
    %v725 = vunpack.c.h.b16 %v703
    %v726 = vunpack.c.l.b16 %v704
    %v727 = vunpack.c.h.b16 %v704
    %v728 = vunpack.c.l.b16 %v705
    %v729 = vunpack.c.h.b16 %v705
    %v730 = vpack.c.b16 %v716, %v714
    %v731 = vpack.c.b16 %v717, %v715
    %v732 = vpack.c.b16 %v720, %v718
    %v733 = vpack.c.b16 %v721, %v719
    %v734 = vpack.c.b16 %v724, %v722
    %v735 = vpack.c.b16 %v725, %v723
    %v736 = vpack.c.b16 %v728, %v726
    %v737 = vpack.c.b16 %v729, %v727
    %746 = vmatprep.subr.bf16.mxu0 %v731
    %747 = vmatpush1.bf16.msra.mxu0 %v730
    %748 = vmatprep.subr.bf16.mxu0 %v733
    %749 = vmatpush1.bf16.msra.mxu0 %v732
    %750 = vmatprep.subr.bf16.mxu0 %v735
    %751 = vmatpush1.bf16.msra.mxu0 %v734
    %752 = vmatprep.subr.bf16.mxu0 %v737
    %753 = vmatpush1.bf16.msra.mxu0 %v736
    %754 = vmatprep.subr.bf16.mxu0 0
    %755 = vmatpush1.bf16.msra.mxu0 0
    %756 = vmatprep.subr.bf16.mxu0 0
    %757 = vmatpush1.bf16.msra.mxu0 0
    %758 = vmatprep.subr.bf16.mxu0 0
    %759 = vmatpush1.bf16.msra.mxu0 0
    %760 = vmatprep.subr.bf16.mxu0 0
    %761 = vmatpush1.bf16.msra.mxu0 0
    %762 = vmatprep.subr.bf16.mxu0 0
    %763 = vmatpush1.bf16.msra.mxu0 0
    %764 = vmatprep.subr.bf16.mxu0 0
    %765 = vmatpush1.bf16.msra.mxu0 0
    %766 = vmatprep.subr.bf16.mxu0 0
    %767 = vmatpush1.bf16.msra.mxu0 0
    %768 = vmatprep.subr.bf16.mxu0 0
    %769 = vmatpush1.bf16.msra.mxu0 0
    %770 = vmatprep.subr.bf16.mxu0 0
    %771 = vmatpush1.bf16.msra.mxu0 0
    %772 = vmatprep.subr.bf16.mxu0 0
    %773 = vmatpush1.bf16.msra.mxu0 0
    %774 = vmatprep.subr.bf16.mxu0 0
    %775 = vmatpush1.bf16.msra.mxu0 0
    %776 = vmatprep.subr.bf16.mxu0 0
    %777 = vmatpush1.bf16.msra.mxu0 0
    %778 = vmatprep.mubr.bf16.mxu0 0
    %779 = vmatmul.mubr.bf16.gmra.mrb[0].mxu0 %v540
    %v780 = vpop.f32.mrb[0].mxu0
    %v781 = vadd.f32 %v692, %v780
    %v782 = vpop.f32.mrb[0].mxu0
    %v783 = vadd.f32 %v694, %v782
    %v784 = vpop.f32.mrb[0].mxu0
    %v785 = vpop.f32.mrb[0].mxu0
    %786 = vdwg.mxu0
    %v787 = vld [vmem:[#allocation10] sm:$0x3]
    %v789 = vlaneseq
    %v790 = vshrl.u32 %v789, 7
    %v791 = vsub.s32 0, %v790
    %v792 = vrot.slane %v787, %v791
    %v793 = vlaneseq
    %v794 = vshrl.u32 %v793, 7
    %v795 = vsub.s32 1, %v794
    %v796 = vrot.slane %v787, %v795
    %v799 = vadd.f32 %v781, %v792
    %v800 = vadd.f32 %v783, %v796
    %v801 = vxor.u32 %v799, 2147483648
    %v802 = vmul.f32 %v801, 1.442695
    %v803 = vpow.pop %v802
    %v804 = vadd.f32 %v803, 1.0
    %v805 = vrcp.pop %v804
    %v806 = vmul.f32 1.0, %v805
    %v807 = vtanh.pop %v800
    %v808 = vxor.u32 %v800, 2147483648
    %v809 = vmul.f32 %v808, 1.442695
    %v810 = vpow.pop %v809
    %v811 = vadd.f32 %v810, 1.0
    %v812 = vrcp.pop %v811
    %v813 = vmul.f32 1.0, %v812
    %v814 = vmul.f32 %v806, 0.0
    %v815 = vmul.f32 %v806, %v807
    %817 = vrot.lane.b32.xlu0 %v815, 64
    %v818 = vpop.permute.xlu0 %817
    %v820 = vadd.f32 %v814, %v818
    %v821 = vtanh.pop %v820
    %v822 = vmul.f32 %v813, %v821
    %v823 = vpack.c.bf16 %v608, %v608
    %825 = vrot.lane.b32.xlu0 %v823, 64
    %v826 = vpop.permute.xlu0 %825
    %v828 = vsel %vm464, %v826, 0
    %830 = vmatprep.subr.bf16.mxu0 %v449
    %831 = vmatpush1.bf16.msra.mxu0 %v448
    %832 = vmatprep.subr.bf16.mxu0 %v451
    %833 = vmatpush1.bf16.msra.mxu0 %v450
    %834 = vmatprep.subr.bf16.mxu0 %v453
    %835 = vmatpush1.bf16.msra.mxu0 %v452
    %836 = vmatprep.subr.bf16.mxu0 %v455
    %837 = vmatpush1.bf16.msra.mxu0 %v454
    %838 = vmatprep.subr.bf16.mxu0 0
    %839 = vmatpush1.bf16.msra.mxu0 0
    %840 = vmatprep.subr.bf16.mxu0 0
    %841 = vmatpush1.bf16.msra.mxu0 0
    %842 = vmatprep.subr.bf16.mxu0 0
    %843 = vmatpush1.bf16.msra.mxu0 0
    %844 = vmatprep.subr.bf16.mxu0 0
    %845 = vmatpush1.bf16.msra.mxu0 0
    %846 = vmatprep.subr.bf16.mxu0 0
    %847 = vmatpush1.bf16.msra.mxu0 0
    %848 = vmatprep.subr.bf16.mxu0 0
    %849 = vmatpush1.bf16.msra.mxu0 0
    %850 = vmatprep.subr.bf16.mxu0 0
    %851 = vmatpush1.bf16.msra.mxu0 0
    %852 = vmatprep.subr.bf16.mxu0 0
    %853 = vmatpush1.bf16.msra.mxu0 0
    %854 = vmatprep.subr.bf16.mxu0 0
    %855 = vmatpush1.bf16.msra.mxu0 0
    %856 = vmatprep.subr.bf16.mxu0 0
    %857 = vmatpush1.bf16.msra.mxu0 0
    %858 = vmatprep.subr.bf16.mxu0 0
    %859 = vmatpush1.bf16.msra.mxu0 0
    %860 = vmatprep.subr.bf16.mxu0 0
    %861 = vmatpush1.bf16.msra.mxu0 0
    %862 = vmatprep.mubr.bf16.mxu0 0
    %863 = vmatmul.mubr.bf16.gmra.mrb[0].mxu0 %v828
    %v864 = vpop.f32.mrb[0].mxu0
    %v865 = vadd.f32 0.0, %v864
    %v866 = vpop.f32.mrb[0].mxu0
    %v867 = vadd.f32 0.0, %v866
    %v868 = vpop.f32.mrb[0].mxu0
    %v869 = vpop.f32.mrb[0].mxu0
    %870 = vdwg.mxu0
    %v871 = vld [vmem:[#allocation2 + $0x20] sm:$0xff]
    %v872 = vld [vmem:[#allocation2 + $0x28] sm:$0xff]
    %v873 = vadd.f32 %v871, %v865
    %v874 = vadd.f32 %v872, %v867
    %v875 = vxor.u32 %v873, 2147483648
    %v876 = vmul.f32 %v875, 1.442695
    %v877 = vpow.pop %v876
    %v878 = vadd.f32 %v877, 1.0
    %v879 = vrcp.pop %v878
    %v880 = vmul.f32 1.0, %v879
    %v881 = vtanh.pop %v874
    %v882 = vxor.u32 %v874, 2147483648
    %v883 = vmul.f32 %v882, 1.442695
    %v884 = vpow.pop %v883
    %v885 = vadd.f32 %v884, 1.0
    %v886 = vrcp.pop %v885
    %v887 = vmul.f32 1.0, %v886
    %v888 = vmul.f32 %v880, %v606
    %v889 = vmul.f32 %v880, %v881
    %891 = vrot.lane.b32.xlu0 %v889, 64
    %v892 = vpop.permute.xlu0 %891
    %v894 = vadd.f32 %v888, %v892
    %v895 = vtanh.pop %v894
    %v896 = vmul.f32 %v887, %v895
    %v897 = vpack.c.bf16 %v822, %v822
    %899 = vrot.lane.b32.xlu0 %v897, 64
    %v900 = vpop.permute.xlu0 %899
    %v902 = vsel %vm464, %v900, 0
    %904 = vmatprep.subr.bf16.mxu0 %v642
    %905 = vmatpush1.bf16.msra.mxu0 %v641
    %906 = vmatprep.subr.bf16.mxu0 %v644
    %907 = vmatpush1.bf16.msra.mxu0 %v643
    %908 = vmatprep.subr.bf16.mxu0 %v646
    %909 = vmatpush1.bf16.msra.mxu0 %v645
    %910 = vmatprep.subr.bf16.mxu0 %v648
    %911 = vmatpush1.bf16.msra.mxu0 %v647
    %912 = vmatprep.subr.bf16.mxu0 0
    %913 = vmatpush1.bf16.msra.mxu0 0
    %914 = vmatprep.subr.bf16.mxu0 0
    %915 = vmatpush1.bf16.msra.mxu0 0
    %916 = vmatprep.subr.bf16.mxu0 0
    %917 = vmatpush1.bf16.msra.mxu0 0
    %918 = vmatprep.subr.bf16.mxu0 0
    %919 = vmatpush1.bf16.msra.mxu0 0
    %920 = vmatprep.subr.bf16.mxu0 0
    %921 = vmatpush1.bf16.msra.mxu0 0
    %922 = vmatprep.subr.bf16.mxu0 0
    %923 = vmatpush1.bf16.msra.mxu0 0
    %924 = vmatprep.subr.bf16.mxu0 0
    %925 = vmatpush1.bf16.msra.mxu0 0
    %926 = vmatprep.subr.bf16.mxu0 0
    %927 = vmatpush1.bf16.msra.mxu0 0
    %928 = vmatprep.subr.bf16.mxu0 0
    %929 = vmatpush1.bf16.msra.mxu0 0
    %930 = vmatprep.subr.bf16.mxu0 0
    %931 = vmatpush1.bf16.msra.mxu0 0
    %932 = vmatprep.subr.bf16.mxu0 0
    %933 = vmatpush1.bf16.msra.mxu0 0
    %934 = vmatprep.subr.bf16.mxu0 0
    %935 = vmatpush1.bf16.msra.mxu0 0
    %936 = vmatprep.mubr.bf16.mxu0 0
    %937 = vmatmul.mubr.bf16.gmra.mrb[0].mxu0 %v902
    %v938 = vpop.f32.mrb[0].mxu0
    %v939 = vadd.f32 0.0, %v938
    %v940 = vpop.f32.mrb[0].mxu0
    %v941 = vadd.f32 0.0, %v940
    %v942 = vpop.f32.mrb[0].mxu0
    %v943 = vpop.f32.mrb[0].mxu0
    %944 = vdwg.mxu0
    %945 = vmatprep.subr.bf16.mxu0 %v731
    %946 = vmatpush1.bf16.msra.mxu0 %v730
    %947 = vmatprep.subr.bf16.mxu0 %v733
    %948 = vmatpush1.bf16.msra.mxu0 %v732
    %949 = vmatprep.subr.bf16.mxu0 %v735
    %950 = vmatpush1.bf16.msra.mxu0 %v734
    %951 = vmatprep.subr.bf16.mxu0 %v737
    %952 = vmatpush1.bf16.msra.mxu0 %v736
    %953 = vmatprep.subr.bf16.mxu0 0
    %954 = vmatpush1.bf16.msra.mxu0 0
    %955 = vmatprep.subr.bf16.mxu0 0
    %956 = vmatpush1.bf16.msra.mxu0 0
    %957 = vmatprep.subr.bf16.mxu0 0
    %958 = vmatpush1.bf16.msra.mxu0 0
    %959 = vmatprep.subr.bf16.mxu0 0
    %960 = vmatpush1.bf16.msra.mxu0 0
    %961 = vmatprep.subr.bf16.mxu0 0
    %962 = vmatpush1.bf16.msra.mxu0 0
    %963 = vmatprep.subr.bf16.mxu0 0
    %964 = vmatpush1.bf16.msra.mxu0 0
    %965 = vmatprep.subr.bf16.mxu0 0
    %966 = vmatpush1.bf16.msra.mxu0 0
    %967 = vmatprep.subr.bf16.mxu0 0
    %968 = vmatpush1.bf16.msra.mxu0 0
    %969 = vmatprep.subr.bf16.mxu0 0
    %970 = vmatpush1.bf16.msra.mxu0 0
    %971 = vmatprep.subr.bf16.mxu0 0
    %972 = vmatpush1.bf16.msra.mxu0 0
    %973 = vmatprep.subr.bf16.mxu0 0
    %974 = vmatpush1.bf16.msra.mxu0 0
    %975 = vmatprep.subr.bf16.mxu0 0
    %976 = vmatpush1.bf16.msra.mxu0 0
    %977 = vmatprep.mubr.bf16.mxu0 0
    %978 = vmatmul.mubr.bf16.gmra.mrb[0].mxu0 %v828
    %v979 = vpop.f32.mrb[0].mxu0
    %v980 = vadd.f32 %v939, %v979
    %v981 = vpop.f32.mrb[0].mxu0
    %v982 = vadd.f32 %v941, %v981
    %v983 = vpop.f32.mrb[0].mxu0
    %v984 = vpop.f32.mrb[0].mxu0
    %985 = vdwg.mxu0
    %v986 = vadd.f32 %v980, %v792
    %v987 = vadd.f32 %v982, %v796
    %v988 = vxor.u32 %v986, 2147483648
    %v989 = vmul.f32 %v988, 1.442695
    %v990 = vpow.pop %v989
    %v991 = vadd.f32 %v990, 1.0
    %v992 = vrcp.pop %v991
    %v993 = vmul.f32 1.0, %v992
    %v994 = vtanh.pop %v987
    %v995 = vxor.u32 %v987, 2147483648
    %v996 = vmul.f32 %v995, 1.442695
    %v997 = vpow.pop %v996
    %v998 = vadd.f32 %v997, 1.0
    %v999 = vrcp.pop %v998
    %v1000 = vmul.f32 1.0, %v999
    %v1001 = vmul.f32 %v993, %v820
    %v1002 = vmul.f32 %v993, %v994
    %1004 = vrot.lane.b32.xlu0 %v1002, 64
    %v1005 = vpop.permute.xlu0 %1004
    %v1007 = vadd.f32 %v1001, %v1005
    %v1008 = vtanh.pop %v1007
    %v1009 = vmul.f32 %v1000, %v1008
    %v1010 = vld [vmem:[#allocation13] sm:$0xff]
    %v1011 = vld [vmem:[#allocation13 + $0x8] sm:$0xff]
    %v1012 = vld [vmem:[#allocation13 + $0x10] sm:$0xff]
    %v1013 = vld [vmem:[#allocation13 + $0x18] sm:$0xff]
    %v1014 = vld [vmem:[#allocation13 + $0x20] sm:$0xff]
    %v1015 = vld [vmem:[#allocation13 + $0x28] sm:$0xff]
    %v1016 = vld [vmem:[#allocation13 + $0x30] sm:$0xff]
    %v1017 = vld [vmem:[#allocation13 + $0x38] sm:$0xff]
    %v1026 = vunpack.c.l.b16 %v1010
    %v1027 = vunpack.c.h.b16 %v1010
    %v1028 = vunpack.c.l.b16 %v1011
    %v1029 = vunpack.c.h.b16 %v1011
    %v1030 = vunpack.c.l.b16 %v1012
    %v1031 = vunpack.c.h.b16 %v1012
    %v1032 = vunpack.c.l.b16 %v1013
    %v1033 = vunpack.c.h.b16 %v1013
    %v1034 = vunpack.c.l.b16 %v1014
    %v1035 = vunpack.c.h.b16 %v1014
    %v1036 = vunpack.c.l.b16 %v1015
    %v1037 = vunpack.c.h.b16 %v1015
    %v1038 = vunpack.c.l.b16 %v1016
    %v1039 = vunpack.c.h.b16 %v1016
    %v1040 = vunpack.c.l.b16 %v1017
    %v1041 = vunpack.c.h.b16 %v1017
    %v1042 = vpack.c.b16 %v1028, %v1026
    %v1043 = vpack.c.b16 %v1029, %v1027
    %v1044 = vpack.c.b16 %v1032, %v1030
    %v1045 = vpack.c.b16 %v1033, %v1031
    %v1046 = vpack.c.b16 %v1036, %v1034
    %v1047 = vpack.c.b16 %v1037, %v1035
    %v1048 = vpack.c.b16 %v1040, %v1038
    %v1049 = vpack.c.b16 %v1041, %v1039
    %1058 = vmatprep.subr.bf16.mxu0 %v1043
    %1059 = vmatpush1.bf16.msra.mxu0 %v1042
    %1060 = vmatprep.subr.bf16.mxu0 %v1045
    %1061 = vmatpush1.bf16.msra.mxu0 %v1044
    %1062 = vmatprep.subr.bf16.mxu0 %v1047
    %1063 = vmatpush1.bf16.msra.mxu0 %v1046
    %1064 = vmatprep.subr.bf16.mxu0 %v1049
    %1065 = vmatpush1.bf16.msra.mxu0 %v1048
    %1066 = vmatprep.subr.bf16.mxu0 0
    %1067 = vmatpush1.bf16.msra.mxu0 0
    %1068 = vmatprep.subr.bf16.mxu0 0
    %1069 = vmatpush1.bf16.msra.mxu0 0
    %1070 = vmatprep.subr.bf16.mxu0 0
    %1071 = vmatpush1.bf16.msra.mxu0 0
    %1072 = vmatprep.subr.bf16.mxu0 0
    %1073 = vmatpush1.bf16.msra.mxu0 0
    %1074 = vmatprep.subr.bf16.mxu0 0
    %1075 = vmatpush1.bf16.msra.mxu0 0
    %1076 = vmatprep.subr.bf16.mxu0 0
    %1077 = vmatpush1.bf16.msra.mxu0 0
    %1078 = vmatprep.subr.bf16.mxu0 0
    %1079 = vmatpush1.bf16.msra.mxu0 0
    %1080 = vmatprep.subr.bf16.mxu0 0
    %1081 = vmatpush1.bf16.msra.mxu0 0
    %1082 = vmatprep.subr.bf16.mxu0 0
    %1083 = vmatpush1.bf16.msra.mxu0 0
    %1084 = vmatprep.subr.bf16.mxu0 0
    %1085 = vmatpush1.bf16.msra.mxu0 0
    %1086 = vmatprep.subr.bf16.mxu0 0
    %1087 = vmatpush1.bf16.msra.mxu0 0
    %1088 = vmatprep.subr.bf16.mxu0 0
    %1089 = vmatpush1.bf16.msra.mxu0 0
    %1090 = vmatprep.mubr.bf16.mxu0 0
    %1091 = vmatmul.mubr.bf16.gmra.mrb[0].mxu0 %v466
    %v1092 = vpop.f32.mrb[0].mxu0
    %v1093 = vadd.f32 0.0, %v1092
    %v1094 = vpop.f32.mrb[0].mxu0
    %v1095 = vadd.f32 0.0, %v1094
    %v1096 = vpop.f32.mrb[0].mxu0
    %v1097 = vpop.f32.mrb[0].mxu0
    %1098 = vdwg.mxu0
    %v1099 = vld [vmem:[#allocation11] sm:$0xff]
    %v1100 = vld [vmem:[#allocation11 + $0x8] sm:$0xff]
    %v1101 = vld [vmem:[#allocation11 + $0x10] sm:$0xff]
    %v1102 = vld [vmem:[#allocation11 + $0x18] sm:$0xff]
    %v1103 = vld [vmem:[#allocation11 + $0x20] sm:$0xff]
    %v1104 = vld [vmem:[#allocation11 + $0x28] sm:$0xff]
    %v1105 = vld [vmem:[#allocation11 + $0x30] sm:$0xff]
    %v1106 = vld [vmem:[#allocation11 + $0x38] sm:$0xff]
    %v1115 = vunpack.c.l.b16 %v1099
    %v1116 = vunpack.c.h.b16 %v1099
    %v1117 = vunpack.c.l.b16 %v1100
    %v1118 = vunpack.c.h.b16 %v1100
    %v1119 = vunpack.c.l.b16 %v1101
    %v1120 = vunpack.c.h.b16 %v1101
    %v1121 = vunpack.c.l.b16 %v1102
    %v1122 = vunpack.c.h.b16 %v1102
    %v1123 = vunpack.c.l.b16 %v1103
    %v1124 = vunpack.c.h.b16 %v1103
    %v1125 = vunpack.c.l.b16 %v1104
    %v1126 = vunpack.c.h.b16 %v1104
    %v1127 = vunpack.c.l.b16 %v1105
    %v1128 = vunpack.c.h.b16 %v1105
    %v1129 = vunpack.c.l.b16 %v1106
    %v1130 = vunpack.c.h.b16 %v1106
    %v1131 = vpack.c.b16 %v1117, %v1115
    %v1132 = vpack.c.b16 %v1118, %v1116
    %v1133 = vpack.c.b16 %v1121, %v1119
    %v1134 = vpack.c.b16 %v1122, %v1120
    %v1135 = vpack.c.b16 %v1125, %v1123
    %v1136 = vpack.c.b16 %v1126, %v1124
    %v1137 = vpack.c.b16 %v1129, %v1127
    %v1138 = vpack.c.b16 %v1130, %v1128
    %1147 = vmatprep.subr.bf16.mxu0 %v1132
    %1148 = vmatpush1.bf16.msra.mxu0 %v1131
    %1149 = vmatprep.subr.bf16.mxu0 %v1134
    %1150 = vmatpush1.bf16.msra.mxu0 %v1133
    %1151 = vmatprep.subr.bf16.mxu0 %v1136
    %1152 = vmatpush1.bf16.msra.mxu0 %v1135
    %1153 = vmatprep.subr.bf16.mxu0 %v1138
    %1154 = vmatpush1.bf16.msra.mxu0 %v1137
    %1155 = vmatprep.subr.bf16.mxu0 0
    %1156 = vmatpush1.bf16.msra.mxu0 0
    %1157 = vmatprep.subr.bf16.mxu0 0
    %1158 = vmatpush1.bf16.msra.mxu0 0
    %1159 = vmatprep.subr.bf16.mxu0 0
    %1160 = vmatpush1.bf16.msra.mxu0 0
    %1161 = vmatprep.subr.bf16.mxu0 0
    %1162 = vmatpush1.bf16.msra.mxu0 0
    %1163 = vmatprep.subr.bf16.mxu0 0
    %1164 = vmatpush1.bf16.msra.mxu0 0
    %1165 = vmatprep.subr.bf16.mxu0 0
    %1166 = vmatpush1.bf16.msra.mxu0 0
    %1167 = vmatprep.subr.bf16.mxu0 0
    %1168 = vmatpush1.bf16.msra.mxu0 0
    %1169 = vmatprep.subr.bf16.mxu0 0
    %1170 = vmatpush1.bf16.msra.mxu0 0
    %1171 = vmatprep.subr.bf16.mxu0 0
    %1172 = vmatpush1.bf16.msra.mxu0 0
    %1173 = vmatprep.subr.bf16.mxu0 0
    %1174 = vmatpush1.bf16.msra.mxu0 0
    %1175 = vmatprep.subr.bf16.mxu0 0
    %1176 = vmatpush1.bf16.msra.mxu0 0
    %1177 = vmatprep.subr.bf16.mxu0 0
    %1178 = vmatpush1.bf16.msra.mxu0 0
    %1179 = vmatprep.mubr.bf16.mxu0 0
    %1180 = vmatmul.mubr.bf16.gmra.mrb[0].mxu0 %v902
    %v1181 = vpop.f32.mrb[0].mxu0
    %v1182 = vadd.f32 %v1093, %v1181
    %v1183 = vpop.f32.mrb[0].mxu0
    %v1184 = vadd.f32 %v1095, %v1183
    %v1185 = vpop.f32.mrb[0].mxu0
    %v1186 = vpop.f32.mrb[0].mxu0
    %1187 = vdwg.mxu0
    %v1188 = vld [vmem:[#allocation14] sm:$0x3]
    %v1190 = vlaneseq
    %v1191 = vshrl.u32 %v1190, 7
    %v1192 = vsub.s32 0, %v1191
    %v1193 = vrot.slane %v1188, %v1192
    %v1194 = vlaneseq
    %v1195 = vshrl.u32 %v1194, 7
    %v1196 = vsub.s32 1, %v1195
    %v1197 = vrot.slane %v1188, %v1196
    %v1200 = vadd.f32 %v1182, %v1193
    %v1201 = vadd.f32 %v1184, %v1197
    %v1202 = vxor.u32 %v1200, 2147483648
    %v1203 = vmul.f32 %v1202, 1.442695
    %v1204 = vpow.pop %v1203
    %v1205 = vadd.f32 %v1204, 1.0
    %v1206 = vrcp.pop %v1205
    %v1207 = vmul.f32 1.0, %v1206
    %v1208 = vtanh.pop %v1201
    %v1209 = vxor.u32 %v1201, 2147483648
    %v1210 = vmul.f32 %v1209, 1.442695
    %v1211 = vpow.pop %v1210
    %v1212 = vadd.f32 %v1211, 1.0
    %v1213 = vrcp.pop %v1212
    %v1214 = vmul.f32 1.0, %v1213
    %v1215 = vmul.f32 %v1207, 0.0
    %v1216 = vmul.f32 %v1207, %v1208
    %1218 = vrot.lane.b32.xlu0 %v1216, 64
    %v1219 = vpop.permute.xlu0 %1218
    %v1221 = vadd.f32 %v1215, %v1219
    %v1222 = vtanh.pop %v1221
    %v1223 = vmul.f32 %v1214, %v1222
    %v1224 = vpack.c.bf16 %v896, %v896
    %1226 = vrot.lane.b32.xlu0 %v1224, 64
    %v1227 = vpop.permute.xlu0 %1226
    %v1229 = vsel %vm464, %v1227, 0
    %1231 = vmatprep.subr.bf16.mxu0 %v449
    %1232 = vmatpush1.bf16.msra.mxu0 %v448
    %1233 = vmatprep.subr.bf16.mxu0 %v451
    %1234 = vmatpush1.bf16.msra.mxu0 %v450
    %1235 = vmatprep.subr.bf16.mxu0 %v453
    %1236 = vmatpush1.bf16.msra.mxu0 %v452
    %1237 = vmatprep.subr.bf16.mxu0 %v455
    %1238 = vmatpush1.bf16.msra.mxu0 %v454
    %1239 = vmatprep.subr.bf16.mxu0 0
    %1240 = vmatpush1.bf16.msra.mxu0 0
    %1241 = vmatprep.subr.bf16.mxu0 0
    %1242 = vmatpush1.bf16.msra.mxu0 0
    %1243 = vmatprep.subr.bf16.mxu0 0
    %1244 = vmatpush1.bf16.msra.mxu0 0
    %1245 = vmatprep.subr.bf16.mxu0 0
    %1246 = vmatpush1.bf16.msra.mxu0 0
    %1247 = vmatprep.subr.bf16.mxu0 0
    %1248 = vmatpush1.bf16.msra.mxu0 0
    %1249 = vmatprep.subr.bf16.mxu0 0
    %1250 = vmatpush1.bf16.msra.mxu0 0
    %1251 = vmatprep.subr.bf16.mxu0 0
    %1252 = vmatpush1.bf16.msra.mxu0 0
    %1253 = vmatprep.subr.bf16.mxu0 0
    %1254 = vmatpush1.bf16.msra.mxu0 0
    %1255 = vmatprep.subr.bf16.mxu0 0
    %1256 = vmatpush1.bf16.msra.mxu0 0
    %1257 = vmatprep.subr.bf16.mxu0 0
    %1258 = vmatpush1.bf16.msra.mxu0 0
    %1259 = vmatprep.subr.bf16.mxu0 0
    %1260 = vmatpush1.bf16.msra.mxu0 0
    %1261 = vmatprep.subr.bf16.mxu0 0
    %1262 = vmatpush1.bf16.msra.mxu0 0
    %1263 = vmatprep.mubr.bf16.mxu0 0
    %1264 = vmatmul.mubr.bf16.gmra.mrb[0].mxu0 %v1229
    %v1265 = vpop.f32.mrb[0].mxu0
    %v1266 = vadd.f32 0.0, %v1265
    %v1267 = vpop.f32.mrb[0].mxu0
    %v1268 = vadd.f32 0.0, %v1267
    %v1269 = vpop.f32.mrb[0].mxu0
    %v1270 = vpop.f32.mrb[0].mxu0
    %1271 = vdwg.mxu0
    %v1272 = vld [vmem:[#allocation2 + $0x30] sm:$0xff]
    %v1273 = vld [vmem:[#allocation2 + $0x38] sm:$0xff]
    %v1274 = vadd.f32 %v1272, %v1266
    %v1275 = vadd.f32 %v1273, %v1268
    %v1276 = vxor.u32 %v1274, 2147483648
    %v1277 = vmul.f32 %v1276, 1.442695
    %v1278 = vpow.pop %v1277
    %v1279 = vadd.f32 %v1278, 1.0
    %v1280 = vrcp.pop %v1279
    %v1281 = vmul.f32 1.0, %v1280
    %v1282 = vtanh.pop %v1275
    %v1283 = vxor.u32 %v1275, 2147483648
    %v1284 = vmul.f32 %v1283, 1.442695
    %v1285 = vpow.pop %v1284
    %v1286 = vadd.f32 %v1285, 1.0
    %v1287 = vrcp.pop %v1286
    %v1288 = vmul.f32 1.0, %v1287
    %v1289 = vmul.f32 %v1281, %v894
    %v1290 = vmul.f32 %v1281, %v1282
    %1292 = vrot.lane.b32.xlu0 %v1290, 64
    %v1293 = vpop.permute.xlu0 %1292
    %v1295 = vadd.f32 %v1289, %v1293
    %v1296 = vtanh.pop %v1295
    %v1297 = vmul.f32 %v1288, %v1296
    %v1298 = vpack.c.bf16 %v1009, %v1009
    %1300 = vrot.lane.b32.xlu0 %v1298, 64
    %v1301 = vpop.permute.xlu0 %1300
    %v1303 = vsel %vm464, %v1301, 0
    %1305 = vmatprep.subr.bf16.mxu0 %v642
    %1306 = vmatpush1.bf16.msra.mxu0 %v641
    %1307 = vmatprep.subr.bf16.mxu0 %v644
    %1308 = vmatpush1.bf16.msra.mxu0 %v643
    %1309 = vmatprep.subr.bf16.mxu0 %v646
    %1310 = vmatpush1.bf16.msra.mxu0 %v645
    %1311 = vmatprep.subr.bf16.mxu0 %v648
    %1312 = vmatpush1.bf16.msra.mxu0 %v647
    %1313 = vmatprep.subr.bf16.mxu0 0
    %1314 = vmatpush1.bf16.msra.mxu0 0
    %1315 = vmatprep.subr.bf16.mxu0 0
    %1316 = vmatpush1.bf16.msra.mxu0 0
    %1317 = vmatprep.subr.bf16.mxu0 0
    %1318 = vmatpush1.bf16.msra.mxu0 0
    %1319 = vmatprep.subr.bf16.mxu0 0
    %1320 = vmatpush1.bf16.msra.mxu0 0
    %1321 = vmatprep.subr.bf16.mxu0 0
    %1322 = vmatpush1.bf16.msra.mxu0 0
    %1323 = vmatprep.subr.bf16.mxu0 0
    %1324 = vmatpush1.bf16.msra.mxu0 0
    %1325 = vmatprep.subr.bf16.mxu0 0
    %1326 = vmatpush1.bf16.msra.mxu0 0
    %1327 = vmatprep.subr.bf16.mxu0 0
    %1328 = vmatpush1.bf16.msra.mxu0 0
    %1329 = vmatprep.subr.bf16.mxu0 0
    %1330 = vmatpush1.bf16.msra.mxu0 0
    %1331 = vmatprep.subr.bf16.mxu0 0
    %1332 = vmatpush1.bf16.msra.mxu0 0
    %1333 = vmatprep.subr.bf16.mxu0 0
    %1334 = vmatpush1.bf16.msra.mxu0 0
    %1335 = vmatprep.subr.bf16.mxu0 0
    %1336 = vmatpush1.bf16.msra.mxu0 0
    %1337 = vmatprep.mubr.bf16.mxu0 0
    %1338 = vmatmul.mubr.bf16.gmra.mrb[0].mxu0 %v1303
    %v1339 = vpop.f32.mrb[0].mxu0
    %v1340 = vadd.f32 0.0, %v1339
    %v1341 = vpop.f32.mrb[0].mxu0
    %v1342 = vadd.f32 0.0, %v1341
    %v1343 = vpop.f32.mrb[0].mxu0
    %v1344 = vpop.f32.mrb[0].mxu0
    %1345 = vdwg.mxu0
    %1346 = vmatprep.subr.bf16.mxu0 %v731
    %1347 = vmatpush1.bf16.msra.mxu0 %v730
    %1348 = vmatprep.subr.bf16.mxu0 %v733
    %1349 = vmatpush1.bf16.msra.mxu0 %v732
    %1350 = vmatprep.subr.bf16.mxu0 %v735
    %1351 = vmatpush1.bf16.msra.mxu0 %v734
    %1352 = vmatprep.subr.bf16.mxu0 %v737
    %1353 = vmatpush1.bf16.msra.mxu0 %v736
    %1354 = vmatprep.subr.bf16.mxu0 0
    %1355 = vmatpush1.bf16.msra.mxu0 0
    %1356 = vmatprep.subr.bf16.mxu0 0
    %1357 = vmatpush1.bf16.msra.mxu0 0
    %1358 = vmatprep.subr.bf16.mxu0 0
    %1359 = vmatpush1.bf16.msra.mxu0 0
    %1360 = vmatprep.subr.bf16.mxu0 0
    %1361 = vmatpush1.bf16.msra.mxu0 0
    %1362 = vmatprep.subr.bf16.mxu0 0
    %1363 = vmatpush1.bf16.msra.mxu0 0
    %1364 = vmatprep.subr.bf16.mxu0 0
    %1365 = vmatpush1.bf16.msra.mxu0 0
    %1366 = vmatprep.subr.bf16.mxu0 0
    %1367 = vmatpush1.bf16.msra.mxu0 0
    %1368 = vmatprep.subr.bf16.mxu0 0
    %1369 = vmatpush1.bf16.msra.mxu0 0
    %1370 = vmatprep.subr.bf16.mxu0 0
    %1371 = vmatpush1.bf16.msra.mxu0 0
    %1372 = vmatprep.subr.bf16.mxu0 0
    %1373 = vmatpush1.bf16.msra.mxu0 0
    %1374 = vmatprep.subr.bf16.mxu0 0
    %1375 = vmatpush1.bf16.msra.mxu0 0
    %1376 = vmatprep.subr.bf16.mxu0 0
    %1377 = vmatpush1.bf16.msra.mxu0 0
    %1378 = vmatprep.mubr.bf16.mxu0 0
    %1379 = vmatmul.mubr.bf16.gmra.mrb[0].mxu0 %v1229
    %v1380 = vpop.f32.mrb[0].mxu0
    %v1381 = vadd.f32 %v1340, %v1380
    %v1382 = vpop.f32.mrb[0].mxu0
    %v1383 = vadd.f32 %v1342, %v1382
    %v1384 = vpop.f32.mrb[0].mxu0
    %v1385 = vpop.f32.mrb[0].mxu0
    %1386 = vdwg.mxu0
    %v1387 = vadd.f32 %v1381, %v792
    %v1388 = vadd.f32 %v1383, %v796
    %v1389 = vxor.u32 %v1387, 2147483648
    %v1390 = vmul.f32 %v1389, 1.442695
    %v1391 = vpow.pop %v1390
    %v1392 = vadd.f32 %v1391, 1.0
    %v1393 = vrcp.pop %v1392
    %v1394 = vmul.f32 1.0, %v1393
    %v1395 = vtanh.pop %v1388
    %v1396 = vxor.u32 %v1388, 2147483648
    %v1397 = vmul.f32 %v1396, 1.442695
    %v1398 = vpow.pop %v1397
    %v1399 = vadd.f32 %v1398, 1.0
    %v1400 = vrcp.pop %v1399
    %v1401 = vmul.f32 1.0, %v1400
    %v1402 = vmul.f32 %v1394, %v1007
    %v1403 = vmul.f32 %v1394, %v1395
    %1405 = vrot.lane.b32.xlu0 %v1403, 64
    %v1406 = vpop.permute.xlu0 %1405
    %v1408 = vadd.f32 %v1402, %v1406
    %v1409 = vtanh.pop %v1408
    %v1410 = vmul.f32 %v1401, %v1409
    %v1411 = vpack.c.bf16 %v1223, %v1223
    %1413 = vrot.lane.b32.xlu0 %v1411, 64
    %v1414 = vpop.permute.xlu0 %1413
    %v1416 = vsel %vm464, %v1414, 0
    %1418 = vmatprep.subr.bf16.mxu0 %v1043
    %1419 = vmatpush1.bf16.msra.mxu0 %v1042
    %1420 = vmatprep.subr.bf16.mxu0 %v1045
    %1421 = vmatpush1.bf16.msra.mxu0 %v1044
    %1422 = vmatprep.subr.bf16.mxu0 %v1047
    %1423 = vmatpush1.bf16.msra.mxu0 %v1046
    %1424 = vmatprep.subr.bf16.mxu0 %v1049
    %1425 = vmatpush1.bf16.msra.mxu0 %v1048
    %1426 = vmatprep.subr.bf16.mxu0 0
    %1427 = vmatpush1.bf16.msra.mxu0 0
    %1428 = vmatprep.subr.bf16.mxu0 0
    %1429 = vmatpush1.bf16.msra.mxu0 0
    %1430 = vmatprep.subr.bf16.mxu0 0
    %1431 = vmatpush1.bf16.msra.mxu0 0
    %1432 = vmatprep.subr.bf16.mxu0 0
    %1433 = vmatpush1.bf16.msra.mxu0 0
    %1434 = vmatprep.subr.bf16.mxu0 0
    %1435 = vmatpush1.bf16.msra.mxu0 0
    %1436 = vmatprep.subr.bf16.mxu0 0
    %1437 = vmatpush1.bf16.msra.mxu0 0
    %1438 = vmatprep.subr.bf16.mxu0 0
    %1439 = vmatpush1.bf16.msra.mxu0 0
    %1440 = vmatprep.subr.bf16.mxu0 0
    %1441 = vmatpush1.bf16.msra.mxu0 0
    %1442 = vmatprep.subr.bf16.mxu0 0
    %1443 = vmatpush1.bf16.msra.mxu0 0
    %1444 = vmatprep.subr.bf16.mxu0 0
    %1445 = vmatpush1.bf16.msra.mxu0 0
    %1446 = vmatprep.subr.bf16.mxu0 0
    %1447 = vmatpush1.bf16.msra.mxu0 0
    %1448 = vmatprep.subr.bf16.mxu0 0
    %1449 = vmatpush1.bf16.msra.mxu0 0
    %1450 = vmatprep.mubr.bf16.mxu0 0
    %1451 = vmatmul.mubr.bf16.gmra.mrb[0].mxu0 %v1416
    %v1452 = vpop.f32.mrb[0].mxu0
    %v1453 = vadd.f32 0.0, %v1452
    %v1454 = vpop.f32.mrb[0].mxu0
    %v1455 = vadd.f32 0.0, %v1454
    %v1456 = vpop.f32.mrb[0].mxu0
    %v1457 = vpop.f32.mrb[0].mxu0
    %1458 = vdwg.mxu0
    %1459 = vmatprep.subr.bf16.mxu0 %v1132
    %1460 = vmatpush1.bf16.msra.mxu0 %v1131
    %1461 = vmatprep.subr.bf16.mxu0 %v1134
    %1462 = vmatpush1.bf16.msra.mxu0 %v1133
    %1463 = vmatprep.subr.bf16.mxu0 %v1136
    %1464 = vmatpush1.bf16.msra.mxu0 %v1135
    %1465 = vmatprep.subr.bf16.mxu0 %v1138
    %1466 = vmatpush1.bf16.msra.mxu0 %v1137
    %1467 = vmatprep.subr.bf16.mxu0 0
    %1468 = vmatpush1.bf16.msra.mxu0 0
    %1469 = vmatprep.subr.bf16.mxu0 0
    %1470 = vmatpush1.bf16.msra.mxu0 0
    %1471 = vmatprep.subr.bf16.mxu0 0
    %1472 = vmatpush1.bf16.msra.mxu0 0
    %1473 = vmatprep.subr.bf16.mxu0 0
    %1474 = vmatpush1.bf16.msra.mxu0 0
    %1475 = vmatprep.subr.bf16.mxu0 0
    %1476 = vmatpush1.bf16.msra.mxu0 0
    %1477 = vmatprep.subr.bf16.mxu0 0
    %1478 = vmatpush1.bf16.msra.mxu0 0
    %1479 = vmatprep.subr.bf16.mxu0 0
    %1480 = vmatpush1.bf16.msra.mxu0 0
    %1481 = vmatprep.subr.bf16.mxu0 0
    %1482 = vmatpush1.bf16.msra.mxu0 0
    %1483 = vmatprep.subr.bf16.mxu0 0
    %1484 = vmatpush1.bf16.msra.mxu0 0
    %1485 = vmatprep.subr.bf16.mxu0 0
    %1486 = vmatpush1.bf16.msra.mxu0 0
    %1487 = vmatprep.subr.bf16.mxu0 0
    %1488 = vmatpush1.bf16.msra.mxu0 0
    %1489 = vmatprep.subr.bf16.mxu0 0
    %1490 = vmatpush1.bf16.msra.mxu0 0
    %1491 = vmatprep.mubr.bf16.mxu0 0
    %1492 = vmatmul.mubr.bf16.gmra.mrb[0].mxu0 %v1303
    %v1493 = vpop.f32.mrb[0].mxu0
    %v1494 = vadd.f32 %v1453, %v1493
    %v1495 = vpop.f32.mrb[0].mxu0
    %v1496 = vadd.f32 %v1455, %v1495
    %v1497 = vpop.f32.mrb[0].mxu0
    %v1498 = vpop.f32.mrb[0].mxu0
    %1499 = vdwg.mxu0
    %v1500 = vadd.f32 %v1494, %v1193
    %v1501 = vadd.f32 %v1496, %v1197
    %v1502 = vxor.u32 %v1500, 2147483648
    %v1503 = vmul.f32 %v1502, 1.442695
    %v1504 = vpow.pop %v1503
    %v1505 = vadd.f32 %v1504, 1.0
    %v1506 = vrcp.pop %v1505
    %v1507 = vmul.f32 1.0, %v1506
    %v1508 = vtanh.pop %v1501
    %v1509 = vxor.u32 %v1501, 2147483648
    %v1510 = vmul.f32 %v1509, 1.442695
    %v1511 = vpow.pop %v1510
    %v1512 = vadd.f32 %v1511, 1.0
    %v1513 = vrcp.pop %v1512
    %v1514 = vmul.f32 1.0, %v1513
    %v1515 = vmul.f32 %v1507, %v1221
    %v1516 = vmul.f32 %v1507, %v1508
    %1518 = vrot.lane.b32.xlu0 %v1516, 64
    %v1519 = vpop.permute.xlu0 %1518
    %v1521 = vadd.f32 %v1515, %v1519
    %v1522 = vtanh.pop %v1521
    %v1523 = vmul.f32 %v1514, %v1522
    %v1524 = vpack.c.bf16 %v1297, %v1297
    %1526 = vrot.lane.b32.xlu0 %v1524, 64
    %v1527 = vpop.permute.xlu0 %1526
    %v1529 = vsel %vm464, %v1527, 0
    %1531 = vmatprep.subr.bf16.mxu0 %v449
    %1532 = vmatpush1.bf16.msra.mxu0 %v448
    %1533 = vmatprep.subr.bf16.mxu0 %v451
    %1534 = vmatpush1.bf16.msra.mxu0 %v450
    %1535 = vmatprep.subr.bf16.mxu0 %v453
    %1536 = vmatpush1.bf16.msra.mxu0 %v452
    %1537 = vmatprep.subr.bf16.mxu0 %v455
    %1538 = vmatpush1.bf16.msra.mxu0 %v454
    %1539 = vmatprep.subr.bf16.mxu0 0
    %1540 = vmatpush1.bf16.msra.mxu0 0
    %1541 = vmatprep.subr.bf16.mxu0 0
    %1542 = vmatpush1.bf16.msra.mxu0 0
    %1543 = vmatprep.subr.bf16.mxu0 0
    %1544 = vmatpush1.bf16.msra.mxu0 0
    %1545 = vmatprep.subr.bf16.mxu0 0
    %1546 = vmatpush1.bf16.msra.mxu0 0
    %1547 = vmatprep.subr.bf16.mxu0 0
    %1548 = vmatpush1.bf16.msra.mxu0 0
    %1549 = vmatprep.subr.bf16.mxu0 0
    %1550 = vmatpush1.bf16.msra.mxu0 0
    %1551 = vmatprep.subr.bf16.mxu0 0
    %1552 = vmatpush1.bf16.msra.mxu0 0
    %1553 = vmatprep.subr.bf16.mxu0 0
    %1554 = vmatpush1.bf16.msra.mxu0 0
    %1555 = vmatprep.subr.bf16.mxu0 0
    %1556 = vmatpush1.bf16.msra.mxu0 0
    %1557 = vmatprep.subr.bf16.mxu0 0
    %1558 = vmatpush1.bf16.msra.mxu0 0
    %1559 = vmatprep.subr.bf16.mxu0 0
    %1560 = vmatpush1.bf16.msra.mxu0 0
    %1561 = vmatprep.subr.bf16.mxu0 0
    %1562 = vmatpush1.bf16.msra.mxu0 0
    %1563 = vmatprep.mubr.bf16.mxu0 0
    %1564 = vmatmul.mubr.bf16.gmra.mrb[0].mxu0 %v1529
    %v1565 = vpop.f32.mrb[0].mxu0
    %v1566 = vadd.f32 0.0, %v1565
    %v1567 = vpop.f32.mrb[0].mxu0
    %v1568 = vadd.f32 0.0, %v1567
    %v1569 = vpop.f32.mrb[0].mxu0
    %v1570 = vpop.f32.mrb[0].mxu0
    %1571 = vdwg.mxu0
    %v1572 = vld [vmem:[#allocation2 + $0x40] sm:$0xff]
    %v1573 = vld [vmem:[#allocation2 + $0x48] sm:$0xff]
    %v1574 = vadd.f32 %v1572, %v1566
    %v1575 = vadd.f32 %v1573, %v1568
    %v1576 = vxor.u32 %v1574, 2147483648
    %v1577 = vmul.f32 %v1576, 1.442695
    %v1578 = vpow.pop %v1577
    %v1579 = vadd.f32 %v1578, 1.0
    %v1580 = vrcp.pop %v1579
    %v1581 = vmul.f32 1.0, %v1580
    %v1582 = vtanh.pop %v1575
    %v1583 = vxor.u32 %v1575, 2147483648
    %v1584 = vmul.f32 %v1583, 1.442695
    %v1585 = vpow.pop %v1584
    %v1586 = vadd.f32 %v1585, 1.0
    %v1587 = vrcp.pop %v1586
    %v1588 = vmul.f32 1.0, %v1587
    %v1589 = vmul.f32 %v1581, %v1295
    %v1590 = vmul.f32 %v1581, %v1582
    %1592 = vrot.lane.b32.xlu0 %v1590, 64
    %v1593 = vpop.permute.xlu0 %1592
    %v1595 = vadd.f32 %v1589, %v1593
    %v1596 = vtanh.pop %v1595
    %v1597 = vmul.f32 %v1588, %v1596
    %v1598 = vpack.c.bf16 %v1410, %v1410
    %1600 = vrot.lane.b32.xlu0 %v1598, 64
    %v1601 = vpop.permute.xlu0 %1600
    %v1603 = vsel %vm464, %v1601, 0
    %1605 = vmatprep.subr.bf16.mxu0 %v642
    %1606 = vmatpush1.bf16.msra.mxu0 %v641
    %1607 = vmatprep.subr.bf16.mxu0 %v644
    %1608 = vmatpush1.bf16.msra.mxu0 %v643
    %1609 = vmatprep.subr.bf16.mxu0 %v646
    %1610 = vmatpush1.bf16.msra.mxu0 %v645
    %1611 = vmatprep.subr.bf16.mxu0 %v648
    %1612 = vmatpush1.bf16.msra.mxu0 %v647
    %1613 = vmatprep.subr.bf16.mxu0 0
    %1614 = vmatpush1.bf16.msra.mxu0 0
    %1615 = vmatprep.subr.bf16.mxu0 0
    %1616 = vmatpush1.bf16.msra.mxu0 0
    %1617 = vmatprep.subr.bf16.mxu0 0
    %1618 = vmatpush1.bf16.msra.mxu0 0
    %1619 = vmatprep.subr.bf16.mxu0 0
    %1620 = vmatpush1.bf16.msra.mxu0 0
    %1621 = vmatprep.subr.bf16.mxu0 0
    %1622 = vmatpush1.bf16.msra.mxu0 0
    %1623 = vmatprep.subr.bf16.mxu0 0
    %1624 = vmatpush1.bf16.msra.mxu0 0
    %1625 = vmatprep.subr.bf16.mxu0 0
    %1626 = vmatpush1.bf16.msra.mxu0 0
    %1627 = vmatprep.subr.bf16.mxu0 0
    %1628 = vmatpush1.bf16.msra.mxu0 0
    %1629 = vmatprep.subr.bf16.mxu0 0
    %1630 = vmatpush1.bf16.msra.mxu0 0
    %1631 = vmatprep.subr.bf16.mxu0 0
    %1632 = vmatpush1.bf16.msra.mxu0 0
    %1633 = vmatprep.subr.bf16.mxu0 0
    %1634 = vmatpush1.bf16.msra.mxu0 0
    %1635 = vmatprep.subr.bf16.mxu0 0
    %1636 = vmatpush1.bf16.msra.mxu0 0
    %1637 = vmatprep.mubr.bf16.mxu0 0
    %1638 = vmatmul.mubr.bf16.gmra.mrb[0].mxu0 %v1603
    %v1639 = vpop.f32.mrb[0].mxu0
    %v1640 = vadd.f32 0.0, %v1639
    %v1641 = vpop.f32.mrb[0].mxu0
    %v1642 = vadd.f32 0.0, %v1641
    %v1643 = vpop.f32.mrb[0].mxu0
    %v1644 = vpop.f32.mrb[0].mxu0
    %1645 = vdwg.mxu0
    %1646 = vmatprep.subr.bf16.mxu0 %v731
    %1647 = vmatpush1.bf16.msra.mxu0 %v730
    %1648 = vmatprep.subr.bf16.mxu0 %v733
    %1649 = vmatpush1.bf16.msra.mxu0 %v732
    %1650 = vmatprep.subr.bf16.mxu0 %v735
    %1651 = vmatpush1.bf16.msra.mxu0 %v734
    %1652 = vmatprep.subr.bf16.mxu0 %v737
    %1653 = vmatpush1.bf16.msra.mxu0 %v736
    %1654 = vmatprep.subr.bf16.mxu0 0
    %1655 = vmatpush1.bf16.msra.mxu0 0
    %1656 = vmatprep.subr.bf16.mxu0 0
    %1657 = vmatpush1.bf16.msra.mxu0 0
    %1658 = vmatprep.subr.bf16.mxu0 0
    %1659 = vmatpush1.bf16.msra.mxu0 0
    %1660 = vmatprep.subr.bf16.mxu0 0
    %1661 = vmatpush1.bf16.msra.mxu0 0
    %1662 = vmatprep.subr.bf16.mxu0 0
    %1663 = vmatpush1.bf16.msra.mxu0 0
    %1664 = vmatprep.subr.bf16.mxu0 0
    %1665 = vmatpush1.bf16.msra.mxu0 0
    %1666 = vmatprep.subr.bf16.mxu0 0
    %1667 = vmatpush1.bf16.msra.mxu0 0
    %1668 = vmatprep.subr.bf16.mxu0 0
    %1669 = vmatpush1.bf16.msra.mxu0 0
    %1670 = vmatprep.subr.bf16.mxu0 0
    %1671 = vmatpush1.bf16.msra.mxu0 0
    %1672 = vmatprep.subr.bf16.mxu0 0
    %1673 = vmatpush1.bf16.msra.mxu0 0
    %1674 = vmatprep.subr.bf16.mxu0 0
    %1675 = vmatpush1.bf16.msra.mxu0 0
    %1676 = vmatprep.subr.bf16.mxu0 0
    %1677 = vmatpush1.bf16.msra.mxu0 0
    %1678 = vmatprep.mubr.bf16.mxu0 0
    %1679 = vmatmul.mubr.bf16.gmra.mrb[0].mxu0 %v1529
    %v1680 = vpop.f32.mrb[0].mxu0
    %v1681 = vadd.f32 %v1640, %v1680
    %v1682 = vpop.f32.mrb[0].mxu0
    %v1683 = vadd.f32 %v1642, %v1682
    %v1684 = vpop.f32.mrb[0].mxu0
    %v1685 = vpop.f32.mrb[0].mxu0
    %1686 = vdwg.mxu0
    %v1687 = vadd.f32 %v1681, %v792
    %v1688 = vadd.f32 %v1683, %v796
    %v1689 = vxor.u32 %v1687, 2147483648
    %v1690 = vmul.f32 %v1689, 1.442695
    %v1691 = vpow.pop %v1690
    %v1692 = vadd.f32 %v1691, 1.0
    %v1693 = vrcp.pop %v1692
    %v1694 = vmul.f32 1.0, %v1693
    %v1695 = vtanh.pop %v1688
    %v1696 = vxor.u32 %v1688, 2147483648
    %v1697 = vmul.f32 %v1696, 1.442695
    %v1698 = vpow.pop %v1697
    %v1699 = vadd.f32 %v1698, 1.0
    %v1700 = vrcp.pop %v1699
    %v1701 = vmul.f32 1.0, %v1700
    %v1702 = vmul.f32 %v1694, %v1408
    %v1703 = vmul.f32 %v1694, %v1695
    %1705 = vrot.lane.b32.xlu0 %v1703, 64
    %v1706 = vpop.permute.xlu0 %1705
    %v1708 = vadd.f32 %v1702, %v1706
    %v1709 = vtanh.pop %v1708
    %v1710 = vmul.f32 %v1701, %v1709
    %v1711 = vpack.c.bf16 %v1523, %v1523
    %1713 = vrot.lane.b32.xlu0 %v1711, 64
    %v1714 = vpop.permute.xlu0 %1713
    %v1716 = vsel %vm464, %v1714, 0
    %1718 = vmatprep.subr.bf16.mxu0 %v1043
    %1719 = vmatpush1.bf16.msra.mxu0 %v1042
    %1720 = vmatprep.subr.bf16.mxu0 %v1045
    %1721 = vmatpush1.bf16.msra.mxu0 %v1044
    %1722 = vmatprep.subr.bf16.mxu0 %v1047
    %1723 = vmatpush1.bf16.msra.mxu0 %v1046
    %1724 = vmatprep.subr.bf16.mxu0 %v1049
    %1725 = vmatpush1.bf16.msra.mxu0 %v1048
    %1726 = vmatprep.subr.bf16.mxu0 0
    %1727 = vmatpush1.bf16.msra.mxu0 0
    %1728 = vmatprep.subr.bf16.mxu0 0
    %1729 = vmatpush1.bf16.msra.mxu0 0
    %1730 = vmatprep.subr.bf16.mxu0 0
    %1731 = vmatpush1.bf16.msra.mxu0 0
    %1732 = vmatprep.subr.bf16.mxu0 0
    %1733 = vmatpush1.bf16.msra.mxu0 0
    %1734 = vmatprep.subr.bf16.mxu0 0
    %1735 = vmatpush1.bf16.msra.mxu0 0
    %1736 = vmatprep.subr.bf16.mxu0 0
    %1737 = vmatpush1.bf16.msra.mxu0 0
    %1738 = vmatprep.subr.bf16.mxu0 0
    %1739 = vmatpush1.bf16.msra.mxu0 0
    %1740 = vmatprep.subr.bf16.mxu0 0
    %1741 = vmatpush1.bf16.msra.mxu0 0
    %1742 = vmatprep.subr.bf16.mxu0 0
    %1743 = vmatpush1.bf16.msra.mxu0 0
    %1744 = vmatprep.subr.bf16.mxu0 0
    %1745 = vmatpush1.bf16.msra.mxu0 0
    %1746 = vmatprep.subr.bf16.mxu0 0
    %1747 = vmatpush1.bf16.msra.mxu0 0
    %1748 = vmatprep.subr.bf16.mxu0 0
    %1749 = vmatpush1.bf16.msra.mxu0 0
    %1750 = vmatprep.mubr.bf16.mxu0 0
    %1751 = vmatmul.mubr.bf16.gmra.mrb[0].mxu0 %v1716
    %v1752 = vpop.f32.mrb[0].mxu0
    %v1753 = vadd.f32 0.0, %v1752
    %v1754 = vpop.f32.mrb[0].mxu0
    %v1755 = vadd.f32 0.0, %v1754
    %v1756 = vpop.f32.mrb[0].mxu0
    %v1757 = vpop.f32.mrb[0].mxu0
    %1758 = vdwg.mxu0
    %1759 = vmatprep.subr.bf16.mxu0 %v1132
    %1760 = vmatpush1.bf16.msra.mxu0 %v1131
    %1761 = vmatprep.subr.bf16.mxu0 %v1134
    %1762 = vmatpush1.bf16.msra.mxu0 %v1133
    %1763 = vmatprep.subr.bf16.mxu0 %v1136
    %1764 = vmatpush1.bf16.msra.mxu0 %v1135
    %1765 = vmatprep.subr.bf16.mxu0 %v1138
    %1766 = vmatpush1.bf16.msra.mxu0 %v1137
    %1767 = vmatprep.subr.bf16.mxu0 0
    %1768 = vmatpush1.bf16.msra.mxu0 0
    %1769 = vmatprep.subr.bf16.mxu0 0
    %1770 = vmatpush1.bf16.msra.mxu0 0
    %1771 = vmatprep.subr.bf16.mxu0 0
    %1772 = vmatpush1.bf16.msra.mxu0 0
    %1773 = vmatprep.subr.bf16.mxu0 0
    %1774 = vmatpush1.bf16.msra.mxu0 0
    %1775 = vmatprep.subr.bf16.mxu0 0
    %1776 = vmatpush1.bf16.msra.mxu0 0
    %1777 = vmatprep.subr.bf16.mxu0 0
    %1778 = vmatpush1.bf16.msra.mxu0 0
    %1779 = vmatprep.subr.bf16.mxu0 0
    %1780 = vmatpush1.bf16.msra.mxu0 0
    %1781 = vmatprep.subr.bf16.mxu0 0
    %1782 = vmatpush1.bf16.msra.mxu0 0
    %1783 = vmatprep.subr.bf16.mxu0 0
    %1784 = vmatpush1.bf16.msra.mxu0 0
    %1785 = vmatprep.subr.bf16.mxu0 0
    %1786 = vmatpush1.bf16.msra.mxu0 0
    %1787 = vmatprep.subr.bf16.mxu0 0
    %1788 = vmatpush1.bf16.msra.mxu0 0
    %1789 = vmatprep.subr.bf16.mxu0 0
    %1790 = vmatpush1.bf16.msra.mxu0 0
    %1791 = vmatprep.mubr.bf16.mxu0 0
    %1792 = vmatmul.mubr.bf16.gmra.mrb[0].mxu0 %v1603
    %v1793 = vpop.f32.mrb[0].mxu0
    %v1794 = vadd.f32 %v1753, %v1793
    %v1795 = vpop.f32.mrb[0].mxu0
    %v1796 = vadd.f32 %v1755, %v1795
    %v1797 = vpop.f32.mrb[0].mxu0
    %v1798 = vpop.f32.mrb[0].mxu0
    %1799 = vdwg.mxu0
    %v1800 = vadd.f32 %v1794, %v1193
    %v1801 = vadd.f32 %v1796, %v1197
    %v1802 = vxor.u32 %v1800, 2147483648
    %v1803 = vmul.f32 %v1802, 1.442695
    %v1804 = vpow.pop %v1803
    %v1805 = vadd.f32 %v1804, 1.0
    %v1806 = vrcp.pop %v1805
    %v1807 = vmul.f32 1.0, %v1806
    %v1808 = vtanh.pop %v1801
    %v1809 = vxor.u32 %v1801, 2147483648
    %v1810 = vmul.f32 %v1809, 1.442695
    %v1811 = vpow.pop %v1810
    %v1812 = vadd.f32 %v1811, 1.0
    %v1813 = vrcp.pop %v1812
    %v1814 = vmul.f32 1.0, %v1813
    %v1815 = vmul.f32 %v1807, %v1521
    %v1816 = vmul.f32 %v1807, %v1808
    %1818 = vrot.lane.b32.xlu0 %v1816, 64
    %v1819 = vpop.permute.xlu0 %1818
    %v1821 = vadd.f32 %v1815, %v1819
    %v1822 = vtanh.pop %v1821
    %v1823 = vmul.f32 %v1814, %v1822
    %v1824 = vpack.c.bf16 %v1597, %v1597
    %1826 = vrot.lane.b32.xlu0 %v1824, 64
    %v1827 = vpop.permute.xlu0 %1826
    %v1829 = vsel %vm464, %v1827, 0
    %1831 = vmatprep.subr.bf16.mxu0 %v449
    %1832 = vmatpush1.bf16.msra.mxu0 %v448
    %1833 = vmatprep.subr.bf16.mxu0 %v451
    %1834 = vmatpush1.bf16.msra.mxu0 %v450
    %1835 = vmatprep.subr.bf16.mxu0 %v453
    %1836 = vmatpush1.bf16.msra.mxu0 %v452
    %1837 = vmatprep.subr.bf16.mxu0 %v455
    %1838 = vmatpush1.bf16.msra.mxu0 %v454
    %1839 = vmatprep.subr.bf16.mxu0 0
    %1840 = vmatpush1.bf16.msra.mxu0 0
    %1841 = vmatprep.subr.bf16.mxu0 0
    %1842 = vmatpush1.bf16.msra.mxu0 0
    %1843 = vmatprep.subr.bf16.mxu0 0
    %1844 = vmatpush1.bf16.msra.mxu0 0
    %1845 = vmatprep.subr.bf16.mxu0 0
    %1846 = vmatpush1.bf16.msra.mxu0 0
    %1847 = vmatprep.subr.bf16.mxu0 0
    %1848 = vmatpush1.bf16.msra.mxu0 0
    %1849 = vmatprep.subr.bf16.mxu0 0
    %1850 = vmatpush1.bf16.msra.mxu0 0
    %1851 = vmatprep.subr.bf16.mxu0 0
    %1852 = vmatpush1.bf16.msra.mxu0 0
    %1853 = vmatprep.subr.bf16.mxu0 0
    %1854 = vmatpush1.bf16.msra.mxu0 0
    %1855 = vmatprep.subr.bf16.mxu0 0
    %1856 = vmatpush1.bf16.msra.mxu0 0
    %1857 = vmatprep.subr.bf16.mxu0 0
    %1858 = vmatpush1.bf16.msra.mxu0 0
    %1859 = vmatprep.subr.bf16.mxu0 0
    %1860 = vmatpush1.bf16.msra.mxu0 0
    %1861 = vmatprep.subr.bf16.mxu0 0
    %1862 = vmatpush1.bf16.msra.mxu0 0
    %1863 = vmatprep.mubr.bf16.mxu0 0
    %1864 = vmatmul.mubr.bf16.gmra.mrb[0].mxu0 %v1829
    %v1865 = vpop.f32.mrb[0].mxu0
    %v1866 = vadd.f32 0.0, %v1865
    %v1867 = vpop.f32.mrb[0].mxu0
    %v1868 = vadd.f32 0.0, %v1867
    %v1869 = vpop.f32.mrb[0].mxu0
    %v1870 = vpop.f32.mrb[0].mxu0
    %1871 = vdwg.mxu0
    %v1872 = vld [vmem:[#allocation2 + $0x50] sm:$0xff]
    %v1873 = vld [vmem:[#allocation2 + $0x58] sm:$0xff]
    %v1874 = vadd.f32 %v1872, %v1866
    %v1875 = vadd.f32 %v1873, %v1868
    %v1876 = vxor.u32 %v1874, 2147483648
    %v1877 = vmul.f32 %v1876, 1.442695
    %v1878 = vpow.pop %v1877
    %v1879 = vadd.f32 %v1878, 1.0
    %v1880 = vrcp.pop %v1879
    %v1881 = vmul.f32 1.0, %v1880
    %v1882 = vtanh.pop %v1875
    %v1883 = vxor.u32 %v1875, 2147483648
    %v1884 = vmul.f32 %v1883, 1.442695
    %v1885 = vpow.pop %v1884
    %v1886 = vadd.f32 %v1885, 1.0
    %v1887 = vrcp.pop %v1886
    %v1888 = vmul.f32 1.0, %v1887
    %v1889 = vmul.f32 %v1881, %v1595
    %v1890 = vmul.f32 %v1881, %v1882
    %1892 = vrot.lane.b32.xlu0 %v1890, 64
    %v1893 = vpop.permute.xlu0 %1892
    %v1895 = vadd.f32 %v1889, %v1893
    %v1896 = vtanh.pop %v1895
    %v1897 = vmul.f32 %v1888, %v1896
    %v1898 = vpack.c.bf16 %v1710, %v1710
    %1900 = vrot.lane.b32.xlu0 %v1898, 64
    %v1901 = vpop.permute.xlu0 %1900
    %v1903 = vsel %vm464, %v1901, 0
    %1905 = vmatprep.subr.bf16.mxu0 %v642
    %1906 = vmatpush1.bf16.msra.mxu0 %v641
    %1907 = vmatprep.subr.bf16.mxu0 %v644
    %1908 = vmatpush1.bf16.msra.mxu0 %v643
    %1909 = vmatprep.subr.bf16.mxu0 %v646
    %1910 = vmatpush1.bf16.msra.mxu0 %v645
    %1911 = vmatprep.subr.bf16.mxu0 %v648
    %1912 = vmatpush1.bf16.msra.mxu0 %v647
    %1913 = vmatprep.subr.bf16.mxu0 0
    %1914 = vmatpush1.bf16.msra.mxu0 0
    %1915 = vmatprep.subr.bf16.mxu0 0
    %1916 = vmatpush1.bf16.msra.mxu0 0
    %1917 = vmatprep.subr.bf16.mxu0 0
    %1918 = vmatpush1.bf16.msra.mxu0 0
    %1919 = vmatprep.subr.bf16.mxu0 0
    %1920 = vmatpush1.bf16.msra.mxu0 0
    %1921 = vmatprep.subr.bf16.mxu0 0
    %1922 = vmatpush1.bf16.msra.mxu0 0
    %1923 = vmatprep.subr.bf16.mxu0 0
    %1924 = vmatpush1.bf16.msra.mxu0 0
    %1925 = vmatprep.subr.bf16.mxu0 0
    %1926 = vmatpush1.bf16.msra.mxu0 0
    %1927 = vmatprep.subr.bf16.mxu0 0
    %1928 = vmatpush1.bf16.msra.mxu0 0
    %1929 = vmatprep.subr.bf16.mxu0 0
    %1930 = vmatpush1.bf16.msra.mxu0 0
    %1931 = vmatprep.subr.bf16.mxu0 0
    %1932 = vmatpush1.bf16.msra.mxu0 0
    %1933 = vmatprep.subr.bf16.mxu0 0
    %1934 = vmatpush1.bf16.msra.mxu0 0
    %1935 = vmatprep.subr.bf16.mxu0 0
    %1936 = vmatpush1.bf16.msra.mxu0 0
    %1937 = vmatprep.mubr.bf16.mxu0 0
    %1938 = vmatmul.mubr.bf16.gmra.mrb[0].mxu0 %v1903
    %v1939 = vpop.f32.mrb[0].mxu0
    %v1940 = vadd.f32 0.0, %v1939
    %v1941 = vpop.f32.mrb[0].mxu0
    %v1942 = vadd.f32 0.0, %v1941
    %v1943 = vpop.f32.mrb[0].mxu0
    %v1944 = vpop.f32.mrb[0].mxu0
    %1945 = vdwg.mxu0
    %1946 = vmatprep.subr.bf16.mxu0 %v731
    %1947 = vmatpush1.bf16.msra.mxu0 %v730
    %1948 = vmatprep.subr.bf16.mxu0 %v733
    %1949 = vmatpush1.bf16.msra.mxu0 %v732
    %1950 = vmatprep.subr.bf16.mxu0 %v735
    %1951 = vmatpush1.bf16.msra.mxu0 %v734
    %1952 = vmatprep.subr.bf16.mxu0 %v737
    %1953 = vmatpush1.bf16.msra.mxu0 %v736
    %1954 = vmatprep.subr.bf16.mxu0 0
    %1955 = vmatpush1.bf16.msra.mxu0 0
    %1956 = vmatprep.subr.bf16.mxu0 0
    %1957 = vmatpush1.bf16.msra.mxu0 0
    %1958 = vmatprep.subr.bf16.mxu0 0
    %1959 = vmatpush1.bf16.msra.mxu0 0
    %1960 = vmatprep.subr.bf16.mxu0 0
    %1961 = vmatpush1.bf16.msra.mxu0 0
    %1962 = vmatprep.subr.bf16.mxu0 0
    %1963 = vmatpush1.bf16.msra.mxu0 0
    %1964 = vmatprep.subr.bf16.mxu0 0
    %1965 = vmatpush1.bf16.msra.mxu0 0
    %1966 = vmatprep.subr.bf16.mxu0 0
    %1967 = vmatpush1.bf16.msra.mxu0 0
    %1968 = vmatprep.subr.bf16.mxu0 0
    %1969 = vmatpush1.bf16.msra.mxu0 0
    %1970 = vmatprep.subr.bf16.mxu0 0
    %1971 = vmatpush1.bf16.msra.mxu0 0
    %1972 = vmatprep.subr.bf16.mxu0 0
    %1973 = vmatpush1.bf16.msra.mxu0 0
    %1974 = vmatprep.subr.bf16.mxu0 0
    %1975 = vmatpush1.bf16.msra.mxu0 0
    %1976 = vmatprep.subr.bf16.mxu0 0
    %1977 = vmatpush1.bf16.msra.mxu0 0
    %1978 = vmatprep.mubr.bf16.mxu0 0
    %1979 = vmatmul.mubr.bf16.gmra.mrb[0].mxu0 %v1829
    %v1980 = vpop.f32.mrb[0].mxu0
    %v1981 = vadd.f32 %v1940, %v1980
    %v1982 = vpop.f32.mrb[0].mxu0
    %v1983 = vadd.f32 %v1942, %v1982
    %v1984 = vpop.f32.mrb[0].mxu0
    %v1985 = vpop.f32.mrb[0].mxu0
    %1986 = vdwg.mxu0
    %v1987 = vadd.f32 %v1981, %v792
    %v1988 = vadd.f32 %v1983, %v796
    %v1989 = vxor.u32 %v1987, 2147483648
    %v1990 = vmul.f32 %v1989, 1.442695
    %v1991 = vpow.pop %v1990
    %v1992 = vadd.f32 %v1991, 1.0
    %v1993 = vrcp.pop %v1992
    %v1994 = vmul.f32 1.0, %v1993
    %v1995 = vtanh.pop %v1988
    %v1996 = vxor.u32 %v1988, 2147483648
    %v1997 = vmul.f32 %v1996, 1.442695
    %v1998 = vpow.pop %v1997
    %v1999 = vadd.f32 %v1998, 1.0
    %v2000 = vrcp.pop %v1999
    %v2001 = vmul.f32 1.0, %v2000
    %v2002 = vmul.f32 %v1994, %v1708
    %v2003 = vmul.f32 %v1994, %v1995
    %2005 = vrot.lane.b32.xlu0 %v2003, 64
    %v2006 = vpop.permute.xlu0 %2005
    %v2008 = vadd.f32 %v2002, %v2006
    %v2009 = vtanh.pop %v2008
    %v2010 = vmul.f32 %v2001, %v2009
    %v2011 = vpack.c.bf16 %v1823, %v1823
    %2013 = vrot.lane.b32.xlu0 %v2011, 64
    %v2014 = vpop.permute.xlu0 %2013
    %v2016 = vsel %vm464, %v2014, 0
    %2018 = vmatprep.subr.bf16.mxu0 %v1043
    %2019 = vmatpush1.bf16.msra.mxu0 %v1042
    %2020 = vmatprep.subr.bf16.mxu0 %v1045
    %2021 = vmatpush1.bf16.msra.mxu0 %v1044
    %2022 = vmatprep.subr.bf16.mxu0 %v1047
    %2023 = vmatpush1.bf16.msra.mxu0 %v1046
    %2024 = vmatprep.subr.bf16.mxu0 %v1049
    %2025 = vmatpush1.bf16.msra.mxu0 %v1048
    %2026 = vmatprep.subr.bf16.mxu0 0
    %2027 = vmatpush1.bf16.msra.mxu0 0
    %2028 = vmatprep.subr.bf16.mxu0 0
    %2029 = vmatpush1.bf16.msra.mxu0 0
    %2030 = vmatprep.subr.bf16.mxu0 0
    %2031 = vmatpush1.bf16.msra.mxu0 0
    %2032 = vmatprep.subr.bf16.mxu0 0
    %2033 = vmatpush1.bf16.msra.mxu0 0
    %2034 = vmatprep.subr.bf16.mxu0 0
    %2035 = vmatpush1.bf16.msra.mxu0 0
    %2036 = vmatprep.subr.bf16.mxu0 0
    %2037 = vmatpush1.bf16.msra.mxu0 0
    %2038 = vmatprep.subr.bf16.mxu0 0
    %2039 = vmatpush1.bf16.msra.mxu0 0
    %2040 = vmatprep.subr.bf16.mxu0 0
    %2041 = vmatpush1.bf16.msra.mxu0 0
    %2042 = vmatprep.subr.bf16.mxu0 0
    %2043 = vmatpush1.bf16.msra.mxu0 0
    %2044 = vmatprep.subr.bf16.mxu0 0
    %2045 = vmatpush1.bf16.msra.mxu0 0
    %2046 = vmatprep.subr.bf16.mxu0 0
    %2047 = vmatpush1.bf16.msra.mxu0 0
    %2048 = vmatprep.subr.bf16.mxu0 0
    %2049 = vmatpush1.bf16.msra.mxu0 0
    %2050 = vmatprep.mubr.bf16.mxu0 0
    %2051 = vmatmul.mubr.bf16.gmra.mrb[0].mxu0 %v2016
    %v2052 = vpop.f32.mrb[0].mxu0
    %v2053 = vadd.f32 0.0, %v2052
    %v2054 = vpop.f32.mrb[0].mxu0
    %v2055 = vadd.f32 0.0, %v2054
    %v2056 = vpop.f32.mrb[0].mxu0
    %v2057 = vpop.f32.mrb[0].mxu0
    %2058 = vdwg.mxu0
    %2059 = vmatprep.subr.bf16.mxu0 %v1132
    %2060 = vmatpush1.bf16.msra.mxu0 %v1131
    %2061 = vmatprep.subr.bf16.mxu0 %v1134
    %2062 = vmatpush1.bf16.msra.mxu0 %v1133
    %2063 = vmatprep.subr.bf16.mxu0 %v1136
    %2064 = vmatpush1.bf16.msra.mxu0 %v1135
    %2065 = vmatprep.subr.bf16.mxu0 %v1138
    %2066 = vmatpush1.bf16.msra.mxu0 %v1137
    %2067 = vmatprep.subr.bf16.mxu0 0
    %2068 = vmatpush1.bf16.msra.mxu0 0
    %2069 = vmatprep.subr.bf16.mxu0 0
    %2070 = vmatpush1.bf16.msra.mxu0 0
    %2071 = vmatprep.subr.bf16.mxu0 0
    %2072 = vmatpush1.bf16.msra.mxu0 0
    %2073 = vmatprep.subr.bf16.mxu0 0
    %2074 = vmatpush1.bf16.msra.mxu0 0
    %2075 = vmatprep.subr.bf16.mxu0 0
    %2076 = vmatpush1.bf16.msra.mxu0 0
    %2077 = vmatprep.subr.bf16.mxu0 0
    %2078 = vmatpush1.bf16.msra.mxu0 0
    %2079 = vmatprep.subr.bf16.mxu0 0
    %2080 = vmatpush1.bf16.msra.mxu0 0
    %2081 = vmatprep.subr.bf16.mxu0 0
    %2082 = vmatpush1.bf16.msra.mxu0 0
    %2083 = vmatprep.subr.bf16.mxu0 0
    %2084 = vmatpush1.bf16.msra.mxu0 0
    %2085 = vmatprep.subr.bf16.mxu0 0
    %2086 = vmatpush1.bf16.msra.mxu0 0
    %2087 = vmatprep.subr.bf16.mxu0 0
    %2088 = vmatpush1.bf16.msra.mxu0 0
    %2089 = vmatprep.subr.bf16.mxu0 0
    %2090 = vmatpush1.bf16.msra.mxu0 0
    %2091 = vmatprep.mubr.bf16.mxu0 0
    %2092 = vmatmul.mubr.bf16.gmra.mrb[0].mxu0 %v1903
    %v2093 = vpop.f32.mrb[0].mxu0
    %v2094 = vadd.f32 %v2053, %v2093
    %v2095 = vpop.f32.mrb[0].mxu0
    %v2096 = vadd.f32 %v2055, %v2095
    %v2097 = vpop.f32.mrb[0].mxu0
    %v2098 = vpop.f32.mrb[0].mxu0
    %2099 = vdwg.mxu0
    %v2100 = vadd.f32 %v2094, %v1193
    %v2101 = vadd.f32 %v2096, %v1197
    %v2102 = vxor.u32 %v2100, 2147483648
    %v2103 = vmul.f32 %v2102, 1.442695
    %v2104 = vpow.pop %v2103
    %v2105 = vadd.f32 %v2104, 1.0
    %v2106 = vrcp.pop %v2105
    %v2107 = vmul.f32 1.0, %v2106
    %v2108 = vtanh.pop %v2101
    %v2109 = vxor.u32 %v2101, 2147483648
    %v2110 = vmul.f32 %v2109, 1.442695
    %v2111 = vpow.pop %v2110
    %v2112 = vadd.f32 %v2111, 1.0
    %v2113 = vrcp.pop %v2112
    %v2114 = vmul.f32 1.0, %v2113
    %v2115 = vmul.f32 %v2107, %v1821
    %v2116 = vmul.f32 %v2107, %v2108
    %2118 = vrot.lane.b32.xlu0 %v2116, 64
    %v2119 = vpop.permute.xlu0 %2118
    %v2121 = vadd.f32 %v2115, %v2119
    %v2122 = vtanh.pop %v2121
    %v2123 = vmul.f32 %v2114, %v2122
    %v2124 = vpack.c.bf16 %v1897, %v1897
    %2126 = vrot.lane.b32.xlu0 %v2124, 64
    %v2127 = vpop.permute.xlu0 %2126
    %v2129 = vsel %vm464, %v2127, 0
    %2131 = vmatprep.subr.bf16.mxu0 %v449
    %2132 = vmatpush1.bf16.msra.mxu0 %v448
    %2133 = vmatprep.subr.bf16.mxu0 %v451
    %2134 = vmatpush1.bf16.msra.mxu0 %v450
    %2135 = vmatprep.subr.bf16.mxu0 %v453
    %2136 = vmatpush1.bf16.msra.mxu0 %v452
    %2137 = vmatprep.subr.bf16.mxu0 %v455
    %2138 = vmatpush1.bf16.msra.mxu0 %v454
    %2139 = vmatprep.subr.bf16.mxu0 0
    %2140 = vmatpush1.bf16.msra.mxu0 0
    %2141 = vmatprep.subr.bf16.mxu0 0
    %2142 = vmatpush1.bf16.msra.mxu0 0
    %2143 = vmatprep.subr.bf16.mxu0 0
    %2144 = vmatpush1.bf16.msra.mxu0 0
    %2145 = vmatprep.subr.bf16.mxu0 0
    %2146 = vmatpush1.bf16.msra.mxu0 0
    %2147 = vmatprep.subr.bf16.mxu0 0
    %2148 = vmatpush1.bf16.msra.mxu0 0
    %2149 = vmatprep.subr.bf16.mxu0 0
    %2150 = vmatpush1.bf16.msra.mxu0 0
    %2151 = vmatprep.subr.bf16.mxu0 0
    %2152 = vmatpush1.bf16.msra.mxu0 0
    %2153 = vmatprep.subr.bf16.mxu0 0
    %2154 = vmatpush1.bf16.msra.mxu0 0
    %2155 = vmatprep.subr.bf16.mxu0 0
    %2156 = vmatpush1.bf16.msra.mxu0 0
    %2157 = vmatprep.subr.bf16.mxu0 0
    %2158 = vmatpush1.bf16.msra.mxu0 0
    %2159 = vmatprep.subr.bf16.mxu0 0
    %2160 = vmatpush1.bf16.msra.mxu0 0
    %2161 = vmatprep.subr.bf16.mxu0 0
    %2162 = vmatpush1.bf16.msra.mxu0 0
    %2163 = vmatprep.mubr.bf16.mxu0 0
    %2164 = vmatmul.mubr.bf16.gmra.mrb[0].mxu0 %v2129
    %v2165 = vpop.f32.mrb[0].mxu0
    %v2166 = vadd.f32 0.0, %v2165
    %v2167 = vpop.f32.mrb[0].mxu0
    %v2168 = vadd.f32 0.0, %v2167
    %v2169 = vpop.f32.mrb[0].mxu0
    %v2170 = vpop.f32.mrb[0].mxu0
    %2171 = vdwg.mxu0
    %v2172 = vld [vmem:[#allocation2 + $0x60] sm:$0xff]
    %v2173 = vld [vmem:[#allocation2 + $0x68] sm:$0xff]
    %v2174 = vadd.f32 %v2172, %v2166
    %v2175 = vadd.f32 %v2173, %v2168
    %v2176 = vxor.u32 %v2174, 2147483648
    %v2177 = vmul.f32 %v2176, 1.442695
    %v2178 = vpow.pop %v2177
    %v2179 = vadd.f32 %v2178, 1.0
    %v2180 = vrcp.pop %v2179
    %v2181 = vmul.f32 1.0, %v2180
    %v2182 = vtanh.pop %v2175
    %v2183 = vxor.u32 %v2175, 2147483648
    %v2184 = vmul.f32 %v2183, 1.442695
    %v2185 = vpow.pop %v2184
    %v2186 = vadd.f32 %v2185, 1.0
    %v2187 = vrcp.pop %v2186
    %v2188 = vmul.f32 1.0, %v2187
    %v2189 = vmul.f32 %v2181, %v1895
    %v2190 = vmul.f32 %v2181, %v2182
    %2192 = vrot.lane.b32.xlu0 %v2190, 64
    %v2193 = vpop.permute.xlu0 %2192
    %v2195 = vadd.f32 %v2189, %v2193
    %v2196 = vtanh.pop %v2195
    %v2197 = vmul.f32 %v2188, %v2196
    %v2198 = vpack.c.bf16 %v2010, %v2010
    %2200 = vrot.lane.b32.xlu0 %v2198, 64
    %v2201 = vpop.permute.xlu0 %2200
    %v2203 = vsel %vm464, %v2201, 0
    %2205 = vmatprep.subr.bf16.mxu0 %v642
    %2206 = vmatpush1.bf16.msra.mxu0 %v641
    %2207 = vmatprep.subr.bf16.mxu0 %v644
    %2208 = vmatpush1.bf16.msra.mxu0 %v643
    %2209 = vmatprep.subr.bf16.mxu0 %v646
    %2210 = vmatpush1.bf16.msra.mxu0 %v645
    %2211 = vmatprep.subr.bf16.mxu0 %v648
    %2212 = vmatpush1.bf16.msra.mxu0 %v647
    %2213 = vmatprep.subr.bf16.mxu0 0
    %2214 = vmatpush1.bf16.msra.mxu0 0
    %2215 = vmatprep.subr.bf16.mxu0 0
    %2216 = vmatpush1.bf16.msra.mxu0 0
    %2217 = vmatprep.subr.bf16.mxu0 0
    %2218 = vmatpush1.bf16.msra.mxu0 0
    %2219 = vmatprep.subr.bf16.mxu0 0
    %2220 = vmatpush1.bf16.msra.mxu0 0
    %2221 = vmatprep.subr.bf16.mxu0 0
    %2222 = vmatpush1.bf16.msra.mxu0 0
    %2223 = vmatprep.subr.bf16.mxu0 0
    %2224 = vmatpush1.bf16.msra.mxu0 0
    %2225 = vmatprep.subr.bf16.mxu0 0
    %2226 = vmatpush1.bf16.msra.mxu0 0
    %2227 = vmatprep.subr.bf16.mxu0 0
    %2228 = vmatpush1.bf16.msra.mxu0 0
    %2229 = vmatprep.subr.bf16.mxu0 0
    %2230 = vmatpush1.bf16.msra.mxu0 0
    %2231 = vmatprep.subr.bf16.mxu0 0
    %2232 = vmatpush1.bf16.msra.mxu0 0
    %2233 = vmatprep.subr.bf16.mxu0 0
    %2234 = vmatpush1.bf16.msra.mxu0 0
    %2235 = vmatprep.subr.bf16.mxu0 0
    %2236 = vmatpush1.bf16.msra.mxu0 0
    %2237 = vmatprep.mubr.bf16.mxu0 0
    %2238 = vmatmul.mubr.bf16.gmra.mrb[0].mxu0 %v2203
    %v2239 = vpop.f32.mrb[0].mxu0
    %v2240 = vadd.f32 0.0, %v2239
    %v2241 = vpop.f32.mrb[0].mxu0
    %v2242 = vadd.f32 0.0, %v2241
    %v2243 = vpop.f32.mrb[0].mxu0
    %v2244 = vpop.f32.mrb[0].mxu0
    %2245 = vdwg.mxu0
    %2246 = vmatprep.subr.bf16.mxu0 %v731
    %2247 = vmatpush1.bf16.msra.mxu0 %v730
    %2248 = vmatprep.subr.bf16.mxu0 %v733
    %2249 = vmatpush1.bf16.msra.mxu0 %v732
    %2250 = vmatprep.subr.bf16.mxu0 %v735
    %2251 = vmatpush1.bf16.msra.mxu0 %v734
    %2252 = vmatprep.subr.bf16.mxu0 %v737
    %2253 = vmatpush1.bf16.msra.mxu0 %v736
    %2254 = vmatprep.subr.bf16.mxu0 0
    %2255 = vmatpush1.bf16.msra.mxu0 0
    %2256 = vmatprep.subr.bf16.mxu0 0
    %2257 = vmatpush1.bf16.msra.mxu0 0
    %2258 = vmatprep.subr.bf16.mxu0 0
    %2259 = vmatpush1.bf16.msra.mxu0 0
    %2260 = vmatprep.subr.bf16.mxu0 0
    %2261 = vmatpush1.bf16.msra.mxu0 0
    %2262 = vmatprep.subr.bf16.mxu0 0
    %2263 = vmatpush1.bf16.msra.mxu0 0
    %2264 = vmatprep.subr.bf16.mxu0 0
    %2265 = vmatpush1.bf16.msra.mxu0 0
    %2266 = vmatprep.subr.bf16.mxu0 0
    %2267 = vmatpush1.bf16.msra.mxu0 0
    %2268 = vmatprep.subr.bf16.mxu0 0
    %2269 = vmatpush1.bf16.msra.mxu0 0
    %2270 = vmatprep.subr.bf16.mxu0 0
    %2271 = vmatpush1.bf16.msra.mxu0 0
    %2272 = vmatprep.subr.bf16.mxu0 0
    %2273 = vmatpush1.bf16.msra.mxu0 0
    %2274 = vmatprep.subr.bf16.mxu0 0
    %2275 = vmatpush1.bf16.msra.mxu0 0
    %2276 = vmatprep.subr.bf16.mxu0 0
    %2277 = vmatpush1.bf16.msra.mxu0 0
    %2278 = vmatprep.mubr.bf16.mxu0 0
    %2279 = vmatmul.mubr.bf16.gmra.mrb[0].mxu0 %v2129
    %v2280 = vpop.f32.mrb[0].mxu0
    %v2281 = vadd.f32 %v2240, %v2280
    %v2282 = vpop.f32.mrb[0].mxu0
    %v2283 = vadd.f32 %v2242, %v2282
    %v2284 = vpop.f32.mrb[0].mxu0
    %v2285 = vpop.f32.mrb[0].mxu0
    %2286 = vdwg.mxu0
    %v2287 = vadd.f32 %v2281, %v792
    %v2288 = vadd.f32 %v2283, %v796
    %v2289 = vxor.u32 %v2287, 2147483648
    %v2290 = vmul.f32 %v2289, 1.442695
    %v2291 = vpow.pop %v2290
    %v2292 = vadd.f32 %v2291, 1.0
    %v2293 = vrcp.pop %v2292
    %v2294 = vmul.f32 1.0, %v2293
    %v2295 = vtanh.pop %v2288
    %v2296 = vxor.u32 %v2288, 2147483648
    %v2297 = vmul.f32 %v2296, 1.442695
    %v2298 = vpow.pop %v2297
    %v2299 = vadd.f32 %v2298, 1.0
    %v2300 = vrcp.pop %v2299
    %v2301 = vmul.f32 1.0, %v2300
    %v2302 = vmul.f32 %v2294, %v2008
    %v2303 = vmul.f32 %v2294, %v2295
    %2305 = vrot.lane.b32.xlu0 %v2303, 64
    %v2306 = vpop.permute.xlu0 %2305
    %v2308 = vadd.f32 %v2302, %v2306
    %v2309 = vtanh.pop %v2308
    %v2310 = vmul.f32 %v2301, %v2309
    %v2311 = vpack.c.bf16 %v2123, %v2123
    %2313 = vrot.lane.b32.xlu0 %v2311, 64
    %v2314 = vpop.permute.xlu0 %2313
    %v2316 = vsel %vm464, %v2314, 0
    %2318 = vmatprep.subr.bf16.mxu0 %v1043
    %2319 = vmatpush1.bf16.msra.mxu0 %v1042
    %2320 = vmatprep.subr.bf16.mxu0 %v1045
    %2321 = vmatpush1.bf16.msra.mxu0 %v1044
    %2322 = vmatprep.subr.bf16.mxu0 %v1047
    %2323 = vmatpush1.bf16.msra.mxu0 %v1046
    %2324 = vmatprep.subr.bf16.mxu0 %v1049
    %2325 = vmatpush1.bf16.msra.mxu0 %v1048
    %2326 = vmatprep.subr.bf16.mxu0 0
    %2327 = vmatpush1.bf16.msra.mxu0 0
    %2328 = vmatprep.subr.bf16.mxu0 0
    %2329 = vmatpush1.bf16.msra.mxu0 0
    %2330 = vmatprep.subr.bf16.mxu0 0
    %2331 = vmatpush1.bf16.msra.mxu0 0
    %2332 = vmatprep.subr.bf16.mxu0 0
    %2333 = vmatpush1.bf16.msra.mxu0 0
    %2334 = vmatprep.subr.bf16.mxu0 0
    %2335 = vmatpush1.bf16.msra.mxu0 0
    %2336 = vmatprep.subr.bf16.mxu0 0
    %2337 = vmatpush1.bf16.msra.mxu0 0
    %2338 = vmatprep.subr.bf16.mxu0 0
    %2339 = vmatpush1.bf16.msra.mxu0 0
    %2340 = vmatprep.subr.bf16.mxu0 0
    %2341 = vmatpush1.bf16.msra.mxu0 0
    %2342 = vmatprep.subr.bf16.mxu0 0
    %2343 = vmatpush1.bf16.msra.mxu0 0
    %2344 = vmatprep.subr.bf16.mxu0 0
    %2345 = vmatpush1.bf16.msra.mxu0 0
    %2346 = vmatprep.subr.bf16.mxu0 0
    %2347 = vmatpush1.bf16.msra.mxu0 0
    %2348 = vmatprep.subr.bf16.mxu0 0
    %2349 = vmatpush1.bf16.msra.mxu0 0
    %2350 = vmatprep.mubr.bf16.mxu0 0
    %2351 = vmatmul.mubr.bf16.gmra.mrb[0].mxu0 %v2316
    %v2352 = vpop.f32.mrb[0].mxu0
    %v2353 = vadd.f32 0.0, %v2352
    %v2354 = vpop.f32.mrb[0].mxu0
    %v2355 = vadd.f32 0.0, %v2354
    %v2356 = vpop.f32.mrb[0].mxu0
    %v2357 = vpop.f32.mrb[0].mxu0
    %2358 = vdwg.mxu0
    %2359 = vmatprep.subr.bf16.mxu0 %v1132
    %2360 = vmatpush1.bf16.msra.mxu0 %v1131
    %2361 = vmatprep.subr.bf16.mxu0 %v1134
    %2362 = vmatpush1.bf16.msra.mxu0 %v1133
    %2363 = vmatprep.subr.bf16.mxu0 %v1136
    %2364 = vmatpush1.bf16.msra.mxu0 %v1135
    %2365 = vmatprep.subr.bf16.mxu0 %v1138
    %2366 = vmatpush1.bf16.msra.mxu0 %v1137
    %2367 = vmatprep.subr.bf16.mxu0 0
    %2368 = vmatpush1.bf16.msra.mxu0 0
    %2369 = vmatprep.subr.bf16.mxu0 0
    %2370 = vmatpush1.bf16.msra.mxu0 0
    %2371 = vmatprep.subr.bf16.mxu0 0
    %2372 = vmatpush1.bf16.msra.mxu0 0
    %2373 = vmatprep.subr.bf16.mxu0 0
    %2374 = vmatpush1.bf16.msra.mxu0 0
    %2375 = vmatprep.subr.bf16.mxu0 0
    %2376 = vmatpush1.bf16.msra.mxu0 0
    %2377 = vmatprep.subr.bf16.mxu0 0
    %2378 = vmatpush1.bf16.msra.mxu0 0
    %2379 = vmatprep.subr.bf16.mxu0 0
    %2380 = vmatpush1.bf16.msra.mxu0 0
    %2381 = vmatprep.subr.bf16.mxu0 0
    %2382 = vmatpush1.bf16.msra.mxu0 0
    %2383 = vmatprep.subr.bf16.mxu0 0
    %2384 = vmatpush1.bf16.msra.mxu0 0
    %2385 = vmatprep.subr.bf16.mxu0 0
    %2386 = vmatpush1.bf16.msra.mxu0 0
    %2387 = vmatprep.subr.bf16.mxu0 0
    %2388 = vmatpush1.bf16.msra.mxu0 0
    %2389 = vmatprep.subr.bf16.mxu0 0
    %2390 = vmatpush1.bf16.msra.mxu0 0
    %2391 = vmatprep.mubr.bf16.mxu0 0
    %2392 = vmatmul.mubr.bf16.gmra.mrb[0].mxu0 %v2203
    %v2393 = vpop.f32.mrb[0].mxu0
    %v2394 = vadd.f32 %v2353, %v2393
    %v2395 = vpop.f32.mrb[0].mxu0
    %v2396 = vadd.f32 %v2355, %v2395
    %v2397 = vpop.f32.mrb[0].mxu0
    %v2398 = vpop.f32.mrb[0].mxu0
    %2399 = vdwg.mxu0
    %v2400 = vadd.f32 %v2394, %v1193
    %v2401 = vadd.f32 %v2396, %v1197
    %v2402 = vxor.u32 %v2400, 2147483648
    %v2403 = vmul.f32 %v2402, 1.442695
    %v2404 = vpow.pop %v2403
    %v2405 = vadd.f32 %v2404, 1.0
    %v2406 = vrcp.pop %v2405
    %v2407 = vmul.f32 1.0, %v2406
    %v2408 = vtanh.pop %v2401
    %v2409 = vxor.u32 %v2401, 2147483648
    %v2410 = vmul.f32 %v2409, 1.442695
    %v2411 = vpow.pop %v2410
    %v2412 = vadd.f32 %v2411, 1.0
    %v2413 = vrcp.pop %v2412
    %v2414 = vmul.f32 1.0, %v2413
    %v2415 = vmul.f32 %v2407, %v2121
    %v2416 = vmul.f32 %v2407, %v2408
    %2418 = vrot.lane.b32.xlu0 %v2416, 64
    %v2419 = vpop.permute.xlu0 %2418
    %v2421 = vadd.f32 %v2415, %v2419
    %v2422 = vtanh.pop %v2421
    %v2423 = vmul.f32 %v2414, %v2422
    %v2424 = vpack.c.bf16 %v2197, %v2197
    %2426 = vrot.lane.b32.xlu0 %v2424, 64
    %v2427 = vpop.permute.xlu0 %2426
    %v2429 = vsel %vm464, %v2427, 0
    %2431 = vmatprep.subr.bf16.mxu0 %v449
    %2432 = vmatpush1.bf16.msra.mxu0 %v448
    %2433 = vmatprep.subr.bf16.mxu0 %v451
    %2434 = vmatpush1.bf16.msra.mxu0 %v450
    %2435 = vmatprep.subr.bf16.mxu0 %v453
    %2436 = vmatpush1.bf16.msra.mxu0 %v452
    %2437 = vmatprep.subr.bf16.mxu0 %v455
    %2438 = vmatpush1.bf16.msra.mxu0 %v454
    %2439 = vmatprep.subr.bf16.mxu0 0
    %2440 = vmatpush1.bf16.msra.mxu0 0
    %2441 = vmatprep.subr.bf16.mxu0 0
    %2442 = vmatpush1.bf16.msra.mxu0 0
    %2443 = vmatprep.subr.bf16.mxu0 0
    %2444 = vmatpush1.bf16.msra.mxu0 0
    %2445 = vmatprep.subr.bf16.mxu0 0
    %2446 = vmatpush1.bf16.msra.mxu0 0
    %2447 = vmatprep.subr.bf16.mxu0 0
    %2448 = vmatpush1.bf16.msra.mxu0 0
    %2449 = vmatprep.subr.bf16.mxu0 0
    %2450 = vmatpush1.bf16.msra.mxu0 0
    %2451 = vmatprep.subr.bf16.mxu0 0
    %2452 = vmatpush1.bf16.msra.mxu0 0
    %2453 = vmatprep.subr.bf16.mxu0 0
    %2454 = vmatpush1.bf16.msra.mxu0 0
    %2455 = vmatprep.subr.bf16.mxu0 0
    %2456 = vmatpush1.bf16.msra.mxu0 0
    %2457 = vmatprep.subr.bf16.mxu0 0
    %2458 = vmatpush1.bf16.msra.mxu0 0
    %2459 = vmatprep.subr.bf16.mxu0 0
    %2460 = vmatpush1.bf16.msra.mxu0 0
    %2461 = vmatprep.subr.bf16.mxu0 0
    %2462 = vmatpush1.bf16.msra.mxu0 0
    %2463 = vmatprep.mubr.bf16.mxu0 0
    %2464 = vmatmul.mubr.bf16.gmra.mrb[0].mxu0 %v2429
    %v2465 = vpop.f32.mrb[0].mxu0
    %v2466 = vadd.f32 0.0, %v2465
    %v2467 = vpop.f32.mrb[0].mxu0
    %v2468 = vadd.f32 0.0, %v2467
    %v2469 = vpop.f32.mrb[0].mxu0
    %v2470 = vpop.f32.mrb[0].mxu0
    %2471 = vdwg.mxu0
    %v2472 = vld [vmem:[#allocation2 + $0x70] sm:$0xff]
    %v2473 = vld [vmem:[#allocation2 + $0x78] sm:$0xff]
    %v2474 = vadd.f32 %v2472, %v2466
    %v2475 = vadd.f32 %v2473, %v2468
    %v2476 = vxor.u32 %v2474, 2147483648
    %v2477 = vmul.f32 %v2476, 1.442695
    %v2478 = vpow.pop %v2477
    %v2479 = vadd.f32 %v2478, 1.0
    %v2480 = vrcp.pop %v2479
    %v2481 = vmul.f32 1.0, %v2480
    %v2482 = vtanh.pop %v2475
    %v2483 = vxor.u32 %v2475, 2147483648
    %v2484 = vmul.f32 %v2483, 1.442695
    %v2485 = vpow.pop %v2484
    %v2486 = vadd.f32 %v2485, 1.0
    %v2487 = vrcp.pop %v2486
    %v2488 = vmul.f32 1.0, %v2487
    %v2489 = vmul.f32 %v2481, %v2195
    %v2490 = vmul.f32 %v2481, %v2482
    %2492 = vrot.lane.b32.xlu0 %v2490, 64
    %v2493 = vpop.permute.xlu0 %2492
    %v2495 = vadd.f32 %v2489, %v2493
    %v2496 = vtanh.pop %v2495
    %v2497 = vmul.f32 %v2488, %v2496
    %v2498 = vpack.c.bf16 %v2310, %v2310
    %2500 = vrot.lane.b32.xlu0 %v2498, 64
    %v2501 = vpop.permute.xlu0 %2500
    %v2503 = vsel %vm464, %v2501, 0
    %2505 = vmatprep.subr.bf16.mxu0 %v642
    %2506 = vmatpush1.bf16.msra.mxu0 %v641
    %2507 = vmatprep.subr.bf16.mxu0 %v644
    %2508 = vmatpush1.bf16.msra.mxu0 %v643
    %2509 = vmatprep.subr.bf16.mxu0 %v646
    %2510 = vmatpush1.bf16.msra.mxu0 %v645
    %2511 = vmatprep.subr.bf16.mxu0 %v648
    %2512 = vmatpush1.bf16.msra.mxu0 %v647
    %2513 = vmatprep.subr.bf16.mxu0 0
    %2514 = vmatpush1.bf16.msra.mxu0 0
    %2515 = vmatprep.subr.bf16.mxu0 0
    %2516 = vmatpush1.bf16.msra.mxu0 0
    %2517 = vmatprep.subr.bf16.mxu0 0
    %2518 = vmatpush1.bf16.msra.mxu0 0
    %2519 = vmatprep.subr.bf16.mxu0 0
    %2520 = vmatpush1.bf16.msra.mxu0 0
    %2521 = vmatprep.subr.bf16.mxu0 0
    %2522 = vmatpush1.bf16.msra.mxu0 0
    %2523 = vmatprep.subr.bf16.mxu0 0
    %2524 = vmatpush1.bf16.msra.mxu0 0
    %2525 = vmatprep.subr.bf16.mxu0 0
    %2526 = vmatpush1.bf16.msra.mxu0 0
    %2527 = vmatprep.subr.bf16.mxu0 0
    %2528 = vmatpush1.bf16.msra.mxu0 0
    %2529 = vmatprep.subr.bf16.mxu0 0
    %2530 = vmatpush1.bf16.msra.mxu0 0
    %2531 = vmatprep.subr.bf16.mxu0 0
    %2532 = vmatpush1.bf16.msra.mxu0 0
    %2533 = vmatprep.subr.bf16.mxu0 0
    %2534 = vmatpush1.bf16.msra.mxu0 0
    %2535 = vmatprep.subr.bf16.mxu0 0
    %2536 = vmatpush1.bf16.msra.mxu0 0
    %2537 = vmatprep.mubr.bf16.mxu0 0
    %2538 = vmatmul.mubr.bf16.gmra.mrb[0].mxu0 %v2503
    %v2539 = vpop.f32.mrb[0].mxu0
    %v2540 = vadd.f32 0.0, %v2539
    %v2541 = vpop.f32.mrb[0].mxu0
    %v2542 = vadd.f32 0.0, %v2541
    %v2543 = vpop.f32.mrb[0].mxu0
    %v2544 = vpop.f32.mrb[0].mxu0
    %2545 = vdwg.mxu0
    %2546 = vmatprep.subr.bf16.mxu0 %v731
    %2547 = vmatpush1.bf16.msra.mxu0 %v730
    %2548 = vmatprep.subr.bf16.mxu0 %v733
    %2549 = vmatpush1.bf16.msra.mxu0 %v732
    %2550 = vmatprep.subr.bf16.mxu0 %v735
    %2551 = vmatpush1.bf16.msra.mxu0 %v734
    %2552 = vmatprep.subr.bf16.mxu0 %v737
    %2553 = vmatpush1.bf16.msra.mxu0 %v736
    %2554 = vmatprep.subr.bf16.mxu0 0
    %2555 = vmatpush1.bf16.msra.mxu0 0
    %2556 = vmatprep.subr.bf16.mxu0 0
    %2557 = vmatpush1.bf16.msra.mxu0 0
    %2558 = vmatprep.subr.bf16.mxu0 0
    %2559 = vmatpush1.bf16.msra.mxu0 0
    %2560 = vmatprep.subr.bf16.mxu0 0
    %2561 = vmatpush1.bf16.msra.mxu0 0
    %2562 = vmatprep.subr.bf16.mxu0 0
    %2563 = vmatpush1.bf16.msra.mxu0 0
    %2564 = vmatprep.subr.bf16.mxu0 0
    %2565 = vmatpush1.bf16.msra.mxu0 0
    %2566 = vmatprep.subr.bf16.mxu0 0
    %2567 = vmatpush1.bf16.msra.mxu0 0
    %2568 = vmatprep.subr.bf16.mxu0 0
    %2569 = vmatpush1.bf16.msra.mxu0 0
    %2570 = vmatprep.subr.bf16.mxu0 0
    %2571 = vmatpush1.bf16.msra.mxu0 0
    %2572 = vmatprep.subr.bf16.mxu0 0
    %2573 = vmatpush1.bf16.msra.mxu0 0
    %2574 = vmatprep.subr.bf16.mxu0 0
    %2575 = vmatpush1.bf16.msra.mxu0 0
    %2576 = vmatprep.subr.bf16.mxu0 0
    %2577 = vmatpush1.bf16.msra.mxu0 0
    %2578 = vmatprep.mubr.bf16.mxu0 0
    %2579 = vmatmul.mubr.bf16.gmra.mrb[0].mxu0 %v2429
    %v2580 = vpop.f32.mrb[0].mxu0
    %v2581 = vadd.f32 %v2540, %v2580
    %v2582 = vpop.f32.mrb[0].mxu0
    %v2583 = vadd.f32 %v2542, %v2582
    %v2584 = vpop.f32.mrb[0].mxu0
    %v2585 = vpop.f32.mrb[0].mxu0
    %2586 = vdwg.mxu0
    %v2587 = vadd.f32 %v2581, %v792
    %v2588 = vadd.f32 %v2583, %v796
    %v2589 = vxor.u32 %v2587, 2147483648
    %v2590 = vmul.f32 %v2589, 1.442695
    %v2591 = vpow.pop %v2590
    %v2592 = vadd.f32 %v2591, 1.0
    %v2593 = vrcp.pop %v2592
    %v2594 = vmul.f32 1.0, %v2593
    %v2595 = vtanh.pop %v2588
    %v2596 = vxor.u32 %v2588, 2147483648
    %v2597 = vmul.f32 %v2596, 1.442695
    %v2598 = vpow.pop %v2597
    %v2599 = vadd.f32 %v2598, 1.0
    %v2600 = vrcp.pop %v2599
    %v2601 = vmul.f32 1.0, %v2600
    %v2602 = vmul.f32 %v2594, %v2308
    %v2603 = vmul.f32 %v2594, %v2595
    %2605 = vrot.lane.b32.xlu0 %v2603, 64
    %v2606 = vpop.permute.xlu0 %2605
    %v2608 = vadd.f32 %v2602, %v2606
    %v2609 = vtanh.pop %v2608
    %v2610 = vmul.f32 %v2601, %v2609
    %v2611 = vpack.c.bf16 %v2423, %v2423
    %2613 = vrot.lane.b32.xlu0 %v2611, 64
    %v2614 = vpop.permute.xlu0 %2613
    %v2616 = vsel %vm464, %v2614, 0
    %2618 = vmatprep.subr.bf16.mxu0 %v1043
    %2619 = vmatpush1.bf16.msra.mxu0 %v1042
    %2620 = vmatprep.subr.bf16.mxu0 %v1045
    %2621 = vmatpush1.bf16.msra.mxu0 %v1044
    %2622 = vmatprep.subr.bf16.mxu0 %v1047
    %2623 = vmatpush1.bf16.msra.mxu0 %v1046
    %2624 = vmatprep.subr.bf16.mxu0 %v1049
    %2625 = vmatpush1.bf16.msra.mxu0 %v1048
    %2626 = vmatprep.subr.bf16.mxu0 0
    %2627 = vmatpush1.bf16.msra.mxu0 0
    %2628 = vmatprep.subr.bf16.mxu0 0
    %2629 = vmatpush1.bf16.msra.mxu0 0
    %2630 = vmatprep.subr.bf16.mxu0 0
    %2631 = vmatpush1.bf16.msra.mxu0 0
    %2632 = vmatprep.subr.bf16.mxu0 0
    %2633 = vmatpush1.bf16.msra.mxu0 0
    %2634 = vmatprep.subr.bf16.mxu0 0
    %2635 = vmatpush1.bf16.msra.mxu0 0
    %2636 = vmatprep.subr.bf16.mxu0 0
    %2637 = vmatpush1.bf16.msra.mxu0 0
    %2638 = vmatprep.subr.bf16.mxu0 0
    %2639 = vmatpush1.bf16.msra.mxu0 0
    %2640 = vmatprep.subr.bf16.mxu0 0
    %2641 = vmatpush1.bf16.msra.mxu0 0
    %2642 = vmatprep.subr.bf16.mxu0 0
    %2643 = vmatpush1.bf16.msra.mxu0 0
    %2644 = vmatprep.subr.bf16.mxu0 0
    %2645 = vmatpush1.bf16.msra.mxu0 0
    %2646 = vmatprep.subr.bf16.mxu0 0
    %2647 = vmatpush1.bf16.msra.mxu0 0
    %2648 = vmatprep.subr.bf16.mxu0 0
    %2649 = vmatpush1.bf16.msra.mxu0 0
    %2650 = vmatprep.mubr.bf16.mxu0 0
    %2651 = vmatmul.mubr.bf16.gmra.mrb[0].mxu0 %v2616
    %v2652 = vpop.f32.mrb[0].mxu0
    %v2653 = vadd.f32 0.0, %v2652
    %v2654 = vpop.f32.mrb[0].mxu0
    %v2655 = vadd.f32 0.0, %v2654
    %v2656 = vpop.f32.mrb[0].mxu0
    %v2657 = vpop.f32.mrb[0].mxu0
    %2658 = vdwg.mxu0
    %2659 = vmatprep.subr.bf16.mxu0 %v1132
    %2660 = vmatpush1.bf16.msra.mxu0 %v1131
    %2661 = vmatprep.subr.bf16.mxu0 %v1134
    %2662 = vmatpush1.bf16.msra.mxu0 %v1133
    %2663 = vmatprep.subr.bf16.mxu0 %v1136
    %2664 = vmatpush1.bf16.msra.mxu0 %v1135
    %2665 = vmatprep.subr.bf16.mxu0 %v1138
    %2666 = vmatpush1.bf16.msra.mxu0 %v1137
    %2667 = vmatprep.subr.bf16.mxu0 0
    %2668 = vmatpush1.bf16.msra.mxu0 0
    %2669 = vmatprep.subr.bf16.mxu0 0
    %2670 = vmatpush1.bf16.msra.mxu0 0
    %2671 = vmatprep.subr.bf16.mxu0 0
    %2672 = vmatpush1.bf16.msra.mxu0 0
    %2673 = vmatprep.subr.bf16.mxu0 0
    %2674 = vmatpush1.bf16.msra.mxu0 0
    %2675 = vmatprep.subr.bf16.mxu0 0
    %2676 = vmatpush1.bf16.msra.mxu0 0
    %2677 = vmatprep.subr.bf16.mxu0 0
    %2678 = vmatpush1.bf16.msra.mxu0 0
    %2679 = vmatprep.subr.bf16.mxu0 0
    %2680 = vmatpush1.bf16.msra.mxu0 0
    %2681 = vmatprep.subr.bf16.mxu0 0
    %2682 = vmatpush1.bf16.msra.mxu0 0
    %2683 = vmatprep.subr.bf16.mxu0 0
    %2684 = vmatpush1.bf16.msra.mxu0 0
    %2685 = vmatprep.subr.bf16.mxu0 0
    %2686 = vmatpush1.bf16.msra.mxu0 0
    %2687 = vmatprep.subr.bf16.mxu0 0
    %2688 = vmatpush1.bf16.msra.mxu0 0
    %2689 = vmatprep.subr.bf16.mxu0 0
    %2690 = vmatpush1.bf16.msra.mxu0 0
    %2691 = vmatprep.mubr.bf16.mxu0 0
    %2692 = vmatmul.mubr.bf16.gmra.mrb[0].mxu0 %v2503
    %v2693 = vpop.f32.mrb[0].mxu0
    %v2694 = vadd.f32 %v2653, %v2693
    %v2695 = vpop.f32.mrb[0].mxu0
    %v2696 = vadd.f32 %v2655, %v2695
    %v2697 = vpop.f32.mrb[0].mxu0
    %v2698 = vpop.f32.mrb[0].mxu0
    %2699 = vdwg.mxu0
    %v2700 = vadd.f32 %v2694, %v1193
    %v2701 = vadd.f32 %v2696, %v1197
    %v2702 = vxor.u32 %v2700, 2147483648
    %v2703 = vmul.f32 %v2702, 1.442695
    %v2704 = vpow.pop %v2703
    %v2705 = vadd.f32 %v2704, 1.0
    %v2706 = vrcp.pop %v2705
    %v2707 = vmul.f32 1.0, %v2706
    %v2708 = vtanh.pop %v2701
    %v2709 = vxor.u32 %v2701, 2147483648
    %v2710 = vmul.f32 %v2709, 1.442695
    %v2711 = vpow.pop %v2710
    %v2712 = vadd.f32 %v2711, 1.0
    %v2713 = vrcp.pop %v2712
    %v2714 = vmul.f32 1.0, %v2713
    %v2715 = vmul.f32 %v2707, %v2421
    %v2716 = vmul.f32 %v2707, %v2708
    %2718 = vrot.lane.b32.xlu0 %v2716, 64
    %v2719 = vpop.permute.xlu0 %2718
    %v2721 = vadd.f32 %v2715, %v2719
    %v2722 = vtanh.pop %v2721
    %v2723 = vmul.f32 %v2714, %v2722
    %v2724 = vpack.c.bf16 %v2610, %v2610
    %2726 = vrot.lane.b32.xlu0 %v2724, 64
    %v2727 = vpop.permute.xlu0 %2726
    %v2729 = vsel %vm464, %v2727, 0
    %2731 = vmatprep.subr.bf16.mxu0 %v642
    %2732 = vmatpush1.bf16.msra.mxu0 %v641
    %2733 = vmatprep.subr.bf16.mxu0 %v644
    %2734 = vmatpush1.bf16.msra.mxu0 %v643
    %2735 = vmatprep.subr.bf16.mxu0 %v646
    %2736 = vmatpush1.bf16.msra.mxu0 %v645
    %2737 = vmatprep.subr.bf16.mxu0 %v648
    %2738 = vmatpush1.bf16.msra.mxu0 %v647
    %2739 = vmatprep.subr.bf16.mxu0 0
    %2740 = vmatpush1.bf16.msra.mxu0 0
    %2741 = vmatprep.subr.bf16.mxu0 0
    %2742 = vmatpush1.bf16.msra.mxu0 0
    %2743 = vmatprep.subr.bf16.mxu0 0
    %2744 = vmatpush1.bf16.msra.mxu0 0
    %2745 = vmatprep.subr.bf16.mxu0 0
    %2746 = vmatpush1.bf16.msra.mxu0 0
    %2747 = vmatprep.subr.bf16.mxu0 0
    %2748 = vmatpush1.bf16.msra.mxu0 0
    %2749 = vmatprep.subr.bf16.mxu0 0
    %2750 = vmatpush1.bf16.msra.mxu0 0
    %2751 = vmatprep.subr.bf16.mxu0 0
    %2752 = vmatpush1.bf16.msra.mxu0 0
    %2753 = vmatprep.subr.bf16.mxu0 0
    %2754 = vmatpush1.bf16.msra.mxu0 0
    %2755 = vmatprep.subr.bf16.mxu0 0
    %2756 = vmatpush1.bf16.msra.mxu0 0
    %2757 = vmatprep.subr.bf16.mxu0 0
    %2758 = vmatpush1.bf16.msra.mxu0 0
    %2759 = vmatprep.subr.bf16.mxu0 0
    %2760 = vmatpush1.bf16.msra.mxu0 0
    %2761 = vmatprep.subr.bf16.mxu0 0
    %2762 = vmatpush1.bf16.msra.mxu0 0
    %2763 = vmatprep.mubr.bf16.mxu0 0
    %2764 = vmatmul.mubr.bf16.gmra.mrb[0].mxu0 %v2729
    %v2765 = vpop.f32.mrb[0].mxu0
    %v2766 = vadd.f32 0.0, %v2765
    %v2767 = vpop.f32.mrb[0].mxu0
    %v2768 = vadd.f32 0.0, %v2767
    %v2769 = vpop.f32.mrb[0].mxu0
    %v2770 = vpop.f32.mrb[0].mxu0
    %2771 = vdwg.mxu0
    %v2772 = vpack.c.bf16 %v2497, %v2497
    %2774 = vrot.lane.b32.xlu0 %v2772, 64
    %v2775 = vpop.permute.xlu0 %2774
    %v2777 = vsel %vm464, %v2775, 0
    %2779 = vmatprep.subr.bf16.mxu0 %v731
    %2780 = vmatpush1.bf16.msra.mxu0 %v730
    %2781 = vmatprep.subr.bf16.mxu0 %v733
    %2782 = vmatpush1.bf16.msra.mxu0 %v732
    %2783 = vmatprep.subr.bf16.mxu0 %v735
    %2784 = vmatpush1.bf16.msra.mxu0 %v734
    %2785 = vmatprep.subr.bf16.mxu0 %v737
    %2786 = vmatpush1.bf16.msra.mxu0 %v736
    %2787 = vmatprep.subr.bf16.mxu0 0
    %2788 = vmatpush1.bf16.msra.mxu0 0
    %2789 = vmatprep.subr.bf16.mxu0 0
    %2790 = vmatpush1.bf16.msra.mxu0 0
    %2791 = vmatprep.subr.bf16.mxu0 0
    %2792 = vmatpush1.bf16.msra.mxu0 0
    %2793 = vmatprep.subr.bf16.mxu0 0
    %2794 = vmatpush1.bf16.msra.mxu0 0
    %2795 = vmatprep.subr.bf16.mxu0 0
    %2796 = vmatpush1.bf16.msra.mxu0 0
    %2797 = vmatprep.subr.bf16.mxu0 0
    %2798 = vmatpush1.bf16.msra.mxu0 0
    %2799 = vmatprep.subr.bf16.mxu0 0
    %2800 = vmatpush1.bf16.msra.mxu0 0
    %2801 = vmatprep.subr.bf16.mxu0 0
    %2802 = vmatpush1.bf16.msra.mxu0 0
    %2803 = vmatprep.subr.bf16.mxu0 0
    %2804 = vmatpush1.bf16.msra.mxu0 0
    %2805 = vmatprep.subr.bf16.mxu0 0
    %2806 = vmatpush1.bf16.msra.mxu0 0
    %2807 = vmatprep.subr.bf16.mxu0 0
    %2808 = vmatpush1.bf16.msra.mxu0 0
    %2809 = vmatprep.subr.bf16.mxu0 0
    %2810 = vmatpush1.bf16.msra.mxu0 0
    %2811 = vmatprep.mubr.bf16.mxu0 0
    %2812 = vmatmul.mubr.bf16.gmra.mrb[0].mxu0 %v2777
    %v2813 = vpop.f32.mrb[0].mxu0
    %v2814 = vadd.f32 %v2766, %v2813
    %v2815 = vpop.f32.mrb[0].mxu0
    %v2816 = vadd.f32 %v2768, %v2815
    %v2817 = vpop.f32.mrb[0].mxu0
    %v2818 = vpop.f32.mrb[0].mxu0
    %2819 = vdwg.mxu0
    %v2820 = vadd.f32 %v2814, %v792
    %v2821 = vadd.f32 %v2816, %v796
    %v2822 = vxor.u32 %v2820, 2147483648
    %v2823 = vmul.f32 %v2822, 1.442695
    %v2824 = vpow.pop %v2823
    %v2825 = vadd.f32 %v2824, 1.0
    %v2826 = vrcp.pop %v2825
    %v2827 = vmul.f32 1.0, %v2826
    %v2828 = vtanh.pop %v2821
    %v2829 = vxor.u32 %v2821, 2147483648
    %v2830 = vmul.f32 %v2829, 1.442695
    %v2831 = vpow.pop %v2830
    %v2832 = vadd.f32 %v2831, 1.0
    %v2833 = vrcp.pop %v2832
    %v2834 = vmul.f32 1.0, %v2833
    %v2835 = vmul.f32 %v2827, %v2608
    %v2836 = vmul.f32 %v2827, %v2828
    %2838 = vrot.lane.b32.xlu0 %v2836, 64
    %v2839 = vpop.permute.xlu0 %2838
    %v2841 = vadd.f32 %v2835, %v2839
    %v2842 = vtanh.pop %v2841
    %v2843 = vmul.f32 %v2834, %v2842
    %v2844 = vpack.c.bf16 %v2723, %v2723
    %2846 = vrot.lane.b32.xlu0 %v2844, 64
    %v2847 = vpop.permute.xlu0 %2846
    %v2849 = vsel %vm464, %v2847, 0
    %2851 = vmatprep.subr.bf16.mxu0 %v1043
    %2852 = vmatpush1.bf16.msra.mxu0 %v1042
    %2853 = vmatprep.subr.bf16.mxu0 %v1045
    %2854 = vmatpush1.bf16.msra.mxu0 %v1044
    %2855 = vmatprep.subr.bf16.mxu0 %v1047
    %2856 = vmatpush1.bf16.msra.mxu0 %v1046
    %2857 = vmatprep.subr.bf16.mxu0 %v1049
    %2858 = vmatpush1.bf16.msra.mxu0 %v1048
    %2859 = vmatprep.subr.bf16.mxu0 0
    %2860 = vmatpush1.bf16.msra.mxu0 0
    %2861 = vmatprep.subr.bf16.mxu0 0
    %2862 = vmatpush1.bf16.msra.mxu0 0
    %2863 = vmatprep.subr.bf16.mxu0 0
    %2864 = vmatpush1.bf16.msra.mxu0 0
    %2865 = vmatprep.subr.bf16.mxu0 0
    %2866 = vmatpush1.bf16.msra.mxu0 0
    %2867 = vmatprep.subr.bf16.mxu0 0
    %2868 = vmatpush1.bf16.msra.mxu0 0
    %2869 = vmatprep.subr.bf16.mxu0 0
    %2870 = vmatpush1.bf16.msra.mxu0 0
    %2871 = vmatprep.subr.bf16.mxu0 0
    %2872 = vmatpush1.bf16.msra.mxu0 0
    %2873 = vmatprep.subr.bf16.mxu0 0
    %2874 = vmatpush1.bf16.msra.mxu0 0
    %2875 = vmatprep.subr.bf16.mxu0 0
    %2876 = vmatpush1.bf16.msra.mxu0 0
    %2877 = vmatprep.subr.bf16.mxu0 0
    %2878 = vmatpush1.bf16.msra.mxu0 0
    %2879 = vmatprep.subr.bf16.mxu0 0
    %2880 = vmatpush1.bf16.msra.mxu0 0
    %2881 = vmatprep.subr.bf16.mxu0 0
    %2882 = vmatpush1.bf16.msra.mxu0 0
    %2883 = vmatprep.mubr.bf16.mxu0 0
    %2884 = vmatmul.mubr.bf16.gmra.mrb[0].mxu0 %v2849
    %v2885 = vpop.f32.mrb[0].mxu0
    %v2886 = vadd.f32 0.0, %v2885
    %v2887 = vpop.f32.mrb[0].mxu0
    %v2888 = vadd.f32 0.0, %v2887
    %v2889 = vpop.f32.mrb[0].mxu0
    %v2890 = vpop.f32.mrb[0].mxu0
    %2891 = vdwg.mxu0
    %2892 = vmatprep.subr.bf16.mxu0 %v1132
    %2893 = vmatpush1.bf16.msra.mxu0 %v1131
    %2894 = vmatprep.subr.bf16.mxu0 %v1134
    %2895 = vmatpush1.bf16.msra.mxu0 %v1133
    %2896 = vmatprep.subr.bf16.mxu0 %v1136
    %2897 = vmatpush1.bf16.msra.mxu0 %v1135
    %2898 = vmatprep.subr.bf16.mxu0 %v1138
    %2899 = vmatpush1.bf16.msra.mxu0 %v1137
    %2900 = vmatprep.subr.bf16.mxu0 0
    %2901 = vmatpush1.bf16.msra.mxu0 0
    %2902 = vmatprep.subr.bf16.mxu0 0
    %2903 = vmatpush1.bf16.msra.mxu0 0
    %2904 = vmatprep.subr.bf16.mxu0 0
    %2905 = vmatpush1.bf16.msra.mxu0 0
    %2906 = vmatprep.subr.bf16.mxu0 0
    %2907 = vmatpush1.bf16.msra.mxu0 0
    %2908 = vmatprep.subr.bf16.mxu0 0
    %2909 = vmatpush1.bf16.msra.mxu0 0
    %2910 = vmatprep.subr.bf16.mxu0 0
    %2911 = vmatpush1.bf16.msra.mxu0 0
    %2912 = vmatprep.subr.bf16.mxu0 0
    %2913 = vmatpush1.bf16.msra.mxu0 0
    %2914 = vmatprep.subr.bf16.mxu0 0
    %2915 = vmatpush1.bf16.msra.mxu0 0
    %2916 = vmatprep.subr.bf16.mxu0 0
    %2917 = vmatpush1.bf16.msra.mxu0 0
    %2918 = vmatprep.subr.bf16.mxu0 0
    %2919 = vmatpush1.bf16.msra.mxu0 0
    %2920 = vmatprep.subr.bf16.mxu0 0
    %2921 = vmatpush1.bf16.msra.mxu0 0
    %2922 = vmatprep.subr.bf16.mxu0 0
    %2923 = vmatpush1.bf16.msra.mxu0 0
    %2924 = vmatprep.mubr.bf16.mxu0 0
    %2925 = vmatmul.mubr.bf16.gmra.mrb[0].mxu0 %v2729
    %v2926 = vpop.f32.mrb[0].mxu0
    %v2927 = vadd.f32 %v2886, %v2926
    %v2928 = vpop.f32.mrb[0].mxu0
    %v2929 = vadd.f32 %v2888, %v2928
    %v2930 = vpop.f32.mrb[0].mxu0
    %v2931 = vpop.f32.mrb[0].mxu0
    %2932 = vdwg.mxu0
    %v2933 = vadd.f32 %v2927, %v1193
    %v2934 = vadd.f32 %v2929, %v1197
    %v2935 = vxor.u32 %v2933, 2147483648
    %v2936 = vmul.f32 %v2935, 1.442695
    %v2937 = vpow.pop %v2936
    %v2938 = vadd.f32 %v2937, 1.0
    %v2939 = vrcp.pop %v2938
    %v2940 = vmul.f32 1.0, %v2939
    %v2941 = vtanh.pop %v2934
    %v2942 = vxor.u32 %v2934, 2147483648
    %v2943 = vmul.f32 %v2942, 1.442695
    %v2944 = vpow.pop %v2943
    %v2945 = vadd.f32 %v2944, 1.0
    %v2946 = vrcp.pop %v2945
    %v2947 = vmul.f32 1.0, %v2946
    %v2948 = vmul.f32 %v2940, %v2721
    %v2949 = vmul.f32 %v2940, %v2941
    %2951 = vrot.lane.b32.xlu0 %v2949, 64
    %v2952 = vpop.permute.xlu0 %2951
    %v2954 = vadd.f32 %v2948, %v2952
    %v2955 = vtanh.pop %v2954
    %v2956 = vmul.f32 %v2947, %v2955
    %v2957 = vpack.c.bf16 %v2956, %v2956
    %2959 = vrot.lane.b32.xlu0 %v2957, 64
    %v2960 = vpop.permute.xlu0 %2959
    %v2962 = vsel %vm464, %v2960, 0
    %2964 = vmatprep.subr.bf16.mxu0 %v1043
    %2965 = vmatpush1.bf16.msra.mxu0 %v1042
    %2966 = vmatprep.subr.bf16.mxu0 %v1045
    %2967 = vmatpush1.bf16.msra.mxu0 %v1044
    %2968 = vmatprep.subr.bf16.mxu0 %v1047
    %2969 = vmatpush1.bf16.msra.mxu0 %v1046
    %2970 = vmatprep.subr.bf16.mxu0 %v1049
    %2971 = vmatpush1.bf16.msra.mxu0 %v1048
    %2972 = vmatprep.subr.bf16.mxu0 0
    %2973 = vmatpush1.bf16.msra.mxu0 0
    %2974 = vmatprep.subr.bf16.mxu0 0
    %2975 = vmatpush1.bf16.msra.mxu0 0
    %2976 = vmatprep.subr.bf16.mxu0 0
    %2977 = vmatpush1.bf16.msra.mxu0 0
    %2978 = vmatprep.subr.bf16.mxu0 0
    %2979 = vmatpush1.bf16.msra.mxu0 0
    %2980 = vmatprep.subr.bf16.mxu0 0
    %2981 = vmatpush1.bf16.msra.mxu0 0
    %2982 = vmatprep.subr.bf16.mxu0 0
    %2983 = vmatpush1.bf16.msra.mxu0 0
    %2984 = vmatprep.subr.bf16.mxu0 0
    %2985 = vmatpush1.bf16.msra.mxu0 0
    %2986 = vmatprep.subr.bf16.mxu0 0
    %2987 = vmatpush1.bf16.msra.mxu0 0
    %2988 = vmatprep.subr.bf16.mxu0 0
    %2989 = vmatpush1.bf16.msra.mxu0 0
    %2990 = vmatprep.subr.bf16.mxu0 0
    %2991 = vmatpush1.bf16.msra.mxu0 0
    %2992 = vmatprep.subr.bf16.mxu0 0
    %2993 = vmatpush1.bf16.msra.mxu0 0
    %2994 = vmatprep.subr.bf16.mxu0 0
    %2995 = vmatpush1.bf16.msra.mxu0 0
    %2996 = vmatprep.mubr.bf16.mxu0 0
    %2997 = vmatmul.mubr.bf16.gmra.mrb[0].mxu0 %v2962
    %v2998 = vpop.f32.mrb[0].mxu0
    %v2999 = vadd.f32 0.0, %v2998
    %v3000 = vpop.f32.mrb[0].mxu0
    %v3001 = vadd.f32 0.0, %v3000
    %v3002 = vpop.f32.mrb[0].mxu0
    %v3003 = vpop.f32.mrb[0].mxu0
    %3004 = vdwg.mxu0
    %v3005 = vpack.c.bf16 %v2843, %v2843
    %3007 = vrot.lane.b32.xlu0 %v3005, 64
    %v3008 = vpop.permute.xlu0 %3007
    %v3010 = vsel %vm464, %v3008, 0
    %3012 = vmatprep.subr.bf16.mxu0 %v1132
    %3013 = vmatpush1.bf16.msra.mxu0 %v1131
    %3014 = vmatprep.subr.bf16.mxu0 %v1134
    %3015 = vmatpush1.bf16.msra.mxu0 %v1133
    %3016 = vmatprep.subr.bf16.mxu0 %v1136
    %3017 = vmatpush1.bf16.msra.mxu0 %v1135
    %3018 = vmatprep.subr.bf16.mxu0 %v1138
    %3019 = vmatpush1.bf16.msra.mxu0 %v1137
    %3020 = vmatprep.subr.bf16.mxu0 0
    %3021 = vmatpush1.bf16.msra.mxu0 0
    %3022 = vmatprep.subr.bf16.mxu0 0
    %3023 = vmatpush1.bf16.msra.mxu0 0
    %3024 = vmatprep.subr.bf16.mxu0 0
    %3025 = vmatpush1.bf16.msra.mxu0 0
    %3026 = vmatprep.subr.bf16.mxu0 0
    %3027 = vmatpush1.bf16.msra.mxu0 0
    %3028 = vmatprep.subr.bf16.mxu0 0
    %3029 = vmatpush1.bf16.msra.mxu0 0
    %3030 = vmatprep.subr.bf16.mxu0 0
    %3031 = vmatpush1.bf16.msra.mxu0 0
    %3032 = vmatprep.subr.bf16.mxu0 0
    %3033 = vmatpush1.bf16.msra.mxu0 0
    %3034 = vmatprep.subr.bf16.mxu0 0
    %3035 = vmatpush1.bf16.msra.mxu0 0
    %3036 = vmatprep.subr.bf16.mxu0 0
    %3037 = vmatpush1.bf16.msra.mxu0 0
    %3038 = vmatprep.subr.bf16.mxu0 0
    %3039 = vmatpush1.bf16.msra.mxu0 0
    %3040 = vmatprep.subr.bf16.mxu0 0
    %3041 = vmatpush1.bf16.msra.mxu0 0
    %3042 = vmatprep.subr.bf16.mxu0 0
    %3043 = vmatpush1.bf16.msra.mxu0 0
    %3044 = vmatprep.mubr.bf16.mxu0 0
    %3045 = vmatmul.mubr.bf16.gmra.mrb[0].mxu0 %v3010
    %v3046 = vpop.f32.mrb[0].mxu0
    %v3047 = vadd.f32 %v2999, %v3046
    %v3048 = vpop.f32.mrb[0].mxu0
    %v3049 = vadd.f32 %v3001, %v3048
    %v3050 = vpop.f32.mrb[0].mxu0
    %v3051 = vpop.f32.mrb[0].mxu0
    %3052 = vdwg.mxu0
    %v3053 = vadd.f32 %v3047, %v1193
    %v3054 = vadd.f32 %v3049, %v1197
    %v3055 = vxor.u32 %v3053, 2147483648
    %v3056 = vmul.f32 %v3055, 1.442695
    %v3057 = vpow.pop %v3056
    %v3058 = vadd.f32 %v3057, 1.0
    %v3059 = vrcp.pop %v3058
    %v3060 = vmul.f32 1.0, %v3059
    %v3061 = vtanh.pop %v3054
    %v3062 = vxor.u32 %v3054, 2147483648
    %v3063 = vmul.f32 %v3062, 1.442695
    %v3064 = vpow.pop %v3063
    %v3065 = vadd.f32 %v3064, 1.0
    %v3066 = vrcp.pop %v3065
    %v3067 = vmul.f32 1.0, %v3066
    %v3068 = vmul.f32 %v3060, %v2954
    %v3069 = vmul.f32 %v3060, %v3061
    %3071 = vrot.lane.b32.xlu0 %v3069, 64
    %v3072 = vpop.permute.xlu0 %3071
    %v3074 = vadd.f32 %v3068, %v3072
    %v3075 = vtanh.pop %v3074
    %v3076 = vmul.f32 %v3067, %v3075
    %v3077 = vpack.c.bf16 %v3076, %v3076
    %v3078 = vld [vmem:[#allocation16] sm:$0xf]
    %v3079 = vld [vmem:[#allocation16 + $0x4] sm:$0xf]
    %v3080 = vld [vmem:[#allocation16 + $0x8] sm:$0xf]
    %v3081 = vld [vmem:[#allocation16 + $0xc] sm:$0xf]
    %v3082 = vld [vmem:[#allocation16 + $0x10] sm:$0xf]
    %v3083 = vld [vmem:[#allocation16 + $0x14] sm:$0xf]
    %v3084 = vld [vmem:[#allocation16 + $0x18] sm:$0xf]
    %v3085 = vld [vmem:[#allocation16 + $0x1c] sm:$0xf]
    %v3086 = vld [vmem:[#allocation17] sm:$0x1]
    %v3088 = vlaneseq
    %v3089 = vshrl.u32 %v3088, 7
    %v3090 = vsub.s32 0, %v3089
    %v3091 = vrot.slane %v3086, %v3090
    %3094 = vrot.lane.b32.xlu0 %v3077, 64
    %v3095 = vpop.permute.xlu0 %3094
    %v3104 = vunpack.c.l.b16 %v3078
    %v3105 = vunpack.c.l.b16 %v3079
    %v3106 = vunpack.c.l.b16 %v3080
    %v3107 = vunpack.c.l.b16 %v3081
    %v3108 = vunpack.c.l.b16 %v3082
    %v3109 = vunpack.c.l.b16 %v3083
    %v3110 = vunpack.c.l.b16 %v3084
    %v3111 = vunpack.c.l.b16 %v3085
    %v3112 = vpack.c.b16 %v3105, %v3104
    %v3113 = vpack.c.b16 %v3107, %v3106
    %v3114 = vpack.c.b16 %v3109, %v3108
    %v3115 = vpack.c.b16 %v3111, %v3110
    %v3121 = vsel %vm464, %v3095, 0
    %3123 = vmatprep.subr.bf16.mxu0 0
    %3124 = vmatpush1.bf16.msra.mxu0 %v3112
    %3125 = vmatprep.subr.bf16.mxu0 0
    %3126 = vmatpush1.bf16.msra.mxu0 %v3113
    %3127 = vmatprep.subr.bf16.mxu0 0
    %3128 = vmatpush1.bf16.msra.mxu0 %v3114
    %3129 = vmatprep.subr.bf16.mxu0 0
    %3130 = vmatpush1.bf16.msra.mxu0 %v3115
    %3131 = vmatprep.subr.bf16.mxu0 0
    %3132 = vmatpush1.bf16.msra.mxu0 0
    %3133 = vmatprep.subr.bf16.mxu0 0
    %3134 = vmatpush1.bf16.msra.mxu0 0
    %3135 = vmatprep.subr.bf16.mxu0 0
    %3136 = vmatpush1.bf16.msra.mxu0 0
    %3137 = vmatprep.subr.bf16.mxu0 0
    %3138 = vmatpush1.bf16.msra.mxu0 0
    %3139 = vmatprep.subr.bf16.mxu0 0
    %3140 = vmatpush1.bf16.msra.mxu0 0
    %3141 = vmatprep.subr.bf16.mxu0 0
    %3142 = vmatpush1.bf16.msra.mxu0 0
    %3143 = vmatprep.subr.bf16.mxu0 0
    %3144 = vmatpush1.bf16.msra.mxu0 0
    %3145 = vmatprep.subr.bf16.mxu0 0
    %3146 = vmatpush1.bf16.msra.mxu0 0
    %3147 = vmatprep.subr.bf16.mxu0 0
    %3148 = vmatpush1.bf16.msra.mxu0 0
    %3149 = vmatprep.subr.bf16.mxu0 0
    %3150 = vmatpush1.bf16.msra.mxu0 0
    %3151 = vmatprep.subr.bf16.mxu0 0
    %3152 = vmatpush1.bf16.msra.mxu0 0
    %3153 = vmatprep.subr.bf16.mxu0 0
    %3154 = vmatpush1.bf16.msra.mxu0 0
    %3155 = vmatprep.mubr.bf16.mxu0 0
    %3156 = vmatmul.mubr.bf16.gmra.mrb[0].mxu0 %v3121
    %v3157 = vpop.f32.mrb[0].mxu0
    %v3158 = vadd.f32 %v3091, %v3157
    %v3159 = vpop.f32.mrb[0].mxu0
    %v3160 = vpop.f32.mrb[0].mxu0
    %v3161 = vpop.f32.mrb[0].mxu0
    %3162 = vdwg.mxu0
    %v3163 = vmax.f32 %v3158, 0.0
    %v3164 = vpack.c.bf16 %v3163, %v3163
    %v3165 = vld [vmem:[#allocation19] sm:$0xf]
    %v3166 = vld [vmem:[#allocation19 + $0x4] sm:$0xf]
    %v3167 = vld [vmem:[#allocation19 + $0x8] sm:$0xf]
    %v3168 = vld [vmem:[#allocation19 + $0xc] sm:$0xf]
    %v3169 = vld [vmem:[#allocation19 + $0x10] sm:$0xf]
    %v3170 = vld [vmem:[#allocation19 + $0x14] sm:$0xf]
    %v3171 = vld [vmem:[#allocation19 + $0x18] sm:$0xf]
    %v3172 = vld [vmem:[#allocation19 + $0x1c] sm:$0xf]
    %v3173 = vld [vmem:[#allocation19 + $0x20] sm:$0xf]
    %v3174 = vld [vmem:[#allocation19 + $0x24] sm:$0xf]
    %v3175 = vld [vmem:[#allocation19 + $0x28] sm:$0xf]
    %v3176 = vld [vmem:[#allocation19 + $0x2c] sm:$0xf]
    %v3177 = vld [vmem:[#allocation19 + $0x30] sm:$0xf]
    %v3178 = vld [vmem:[#allocation19 + $0x34] sm:$0xf]
    %v3179 = vld [vmem:[#allocation19 + $0x38] sm:$0xf]
    %v3180 = vld [vmem:[#allocation19 + $0x3c] sm:$0xf]
    %v3181 = vld [vmem:[#allocation20] sm:$0x1]
    %v3183 = vlaneseq
    %v3184 = vshrl.u32 %v3183, 7
    %v3185 = vsub.s32 0, %v3184
    %v3186 = vrot.slane %v3181, %v3185
    %v3204 = vunpack.c.l.b16 %v3165
    %v3205 = vunpack.c.l.b16 %v3166
    %v3206 = vunpack.c.l.b16 %v3167
    %v3207 = vunpack.c.l.b16 %v3168
    %v3208 = vunpack.c.l.b16 %v3169
    %v3209 = vunpack.c.l.b16 %v3170
    %v3210 = vunpack.c.l.b16 %v3171
    %v3211 = vunpack.c.l.b16 %v3172
    %v3212 = vunpack.c.l.b16 %v3173
    %v3213 = vunpack.c.l.b16 %v3174
    %v3214 = vunpack.c.l.b16 %v3175
    %v3215 = vunpack.c.l.b16 %v3176
    %v3216 = vunpack.c.l.b16 %v3177
    %v3217 = vunpack.c.l.b16 %v3178
    %v3218 = vunpack.c.l.b16 %v3179
    %v3219 = vunpack.c.l.b16 %v3180
    %v3220 = vpack.c.b16 %v3205, %v3204
    %v3221 = vpack.c.b16 %v3207, %v3206
    %v3222 = vpack.c.b16 %v3209, %v3208
    %v3223 = vpack.c.b16 %v3211, %v3210
    %v3224 = vpack.c.b16 %v3213, %v3212
    %v3225 = vpack.c.b16 %v3215, %v3214
    %v3226 = vpack.c.b16 %v3217, %v3216
    %v3227 = vpack.c.b16 %v3219, %v3218
    %3236 = vmatprep.subr.bf16.mxu0 0
    %3237 = vmatpush1.bf16.msra.mxu0 %v3220
    %3238 = vmatprep.subr.bf16.mxu0 0
    %3239 = vmatpush1.bf16.msra.mxu0 %v3221
    %3240 = vmatprep.subr.bf16.mxu0 0
    %3241 = vmatpush1.bf16.msra.mxu0 %v3222
    %3242 = vmatprep.subr.bf16.mxu0 0
    %3243 = vmatpush1.bf16.msra.mxu0 %v3223
    %3244 = vmatprep.subr.bf16.mxu0 0
    %3245 = vmatpush1.bf16.msra.mxu0 %v3224
    %3246 = vmatprep.subr.bf16.mxu0 0
    %3247 = vmatpush1.bf16.msra.mxu0 %v3225
    %3248 = vmatprep.subr.bf16.mxu0 0
    %3249 = vmatpush1.bf16.msra.mxu0 %v3226
    %3250 = vmatprep.subr.bf16.mxu0 0
    %3251 = vmatpush1.bf16.msra.mxu0 %v3227
    %3252 = vmatprep.subr.bf16.mxu0 0
    %3253 = vmatpush1.bf16.msra.mxu0 0
    %3254 = vmatprep.subr.bf16.mxu0 0
    %3255 = vmatpush1.bf16.msra.mxu0 0
    %3256 = vmatprep.subr.bf16.mxu0 0
    %3257 = vmatpush1.bf16.msra.mxu0 0
    %3258 = vmatprep.subr.bf16.mxu0 0
    %3259 = vmatpush1.bf16.msra.mxu0 0
    %3260 = vmatprep.subr.bf16.mxu0 0
    %3261 = vmatpush1.bf16.msra.mxu0 0
    %3262 = vmatprep.subr.bf16.mxu0 0
    %3263 = vmatpush1.bf16.msra.mxu0 0
    %3264 = vmatprep.subr.bf16.mxu0 0
    %3265 = vmatpush1.bf16.msra.mxu0 0
    %3266 = vmatprep.subr.bf16.mxu0 0
    %3267 = vmatpush1.bf16.msra.mxu0 0
    %3268 = vmatprep.mubr.bf16.mxu0 0
    %3269 = vmatmul.mubr.bf16.gmra.mrb[0].mxu0 %v3164
    %v3270 = vpop.f32.mrb[0].mxu0
    %v3271 = vadd.f32 %v3186, %v3270
    %v3272 = vpop.f32.mrb[0].mxu0
    %v3273 = vpop.f32.mrb[0].mxu0
    %v3274 = vpop.f32.mrb[0].mxu0
    %3275 = vdwg.mxu0
    %v3276 = vmax.f32 %v3271, 0.0
    %v3277 = vpack.c.bf16 %v3276, %v3276
    %v3278 = vld [vmem:[%s14] sm:$0xf]
    %v3279 = vld [vmem:[%s14 + $0x4] sm:$0xf]
    %v3280 = vld [vmem:[%s14 + $0x8] sm:$0xf]
    %v3281 = vld [vmem:[%s14 + $0xc] sm:$0xf]
    %v3282 = vld [vmem:[%s14 + $0x10] sm:$0xf]
    %v3283 = vld [vmem:[%s14 + $0x14] sm:$0xf]
    %v3284 = vld [vmem:[%s14 + $0x18] sm:$0xf]
    %v3285 = vld [vmem:[%s14 + $0x1c] sm:$0xf]
    %v3286 = vld [vmem:[%s14 + $0x20] sm:$0xf]
    %v3287 = vld [vmem:[%s14 + $0x24] sm:$0xf]
    %v3288 = vld [vmem:[%s14 + $0x28] sm:$0xf]
    %v3289 = vld [vmem:[%s14 + $0x2c] sm:$0xf]
    %v3290 = vld [vmem:[%s14 + $0x30] sm:$0xf]
    %v3291 = vld [vmem:[%s14 + $0x34] sm:$0xf]
    %v3292 = vld [vmem:[%s14 + $0x38] sm:$0xf]
    %v3293 = vld [vmem:[%s14 + $0x3c] sm:$0xf]
    %v3294 = vld [vmem:[#allocation22] sm:$0x1]
    %v3296 = vlaneseq
    %v3297 = vshrl.u32 %v3296, 7
    %v3298 = vsub.s32 0, %v3297
    %v3299 = vrot.slane %v3294, %v3298
    %v3317 = vunpack.c.l.b16 %v3278
    %v3318 = vunpack.c.l.b16 %v3279
    %v3319 = vunpack.c.l.b16 %v3280
    %v3320 = vunpack.c.l.b16 %v3281
    %v3321 = vunpack.c.l.b16 %v3282
    %v3322 = vunpack.c.l.b16 %v3283
    %v3323 = vunpack.c.l.b16 %v3284
    %v3324 = vunpack.c.l.b16 %v3285
    %v3325 = vunpack.c.l.b16 %v3286
    %v3326 = vunpack.c.l.b16 %v3287
    %v3327 = vunpack.c.l.b16 %v3288
    %v3328 = vunpack.c.l.b16 %v3289
    %v3329 = vunpack.c.l.b16 %v3290
    %v3330 = vunpack.c.l.b16 %v3291
    %v3331 = vunpack.c.l.b16 %v3292
    %v3332 = vunpack.c.l.b16 %v3293
    %v3333 = vpack.c.b16 %v3318, %v3317
    %v3334 = vpack.c.b16 %v3320, %v3319
    %v3335 = vpack.c.b16 %v3322, %v3321
    %v3336 = vpack.c.b16 %v3324, %v3323
    %v3337 = vpack.c.b16 %v3326, %v3325
    %v3338 = vpack.c.b16 %v3328, %v3327
    %v3339 = vpack.c.b16 %v3330, %v3329
    %v3340 = vpack.c.b16 %v3332, %v3331
    %3349 = vmatprep.subr.bf16.mxu0 0
    %3350 = vmatpush1.bf16.msra.mxu0 %v3333
    %3351 = vmatprep.subr.bf16.mxu0 0
    %3352 = vmatpush1.bf16.msra.mxu0 %v3334
    %3353 = vmatprep.subr.bf16.mxu0 0
    %3354 = vmatpush1.bf16.msra.mxu0 %v3335
    %3355 = vmatprep.subr.bf16.mxu0 0
    %3356 = vmatpush1.bf16.msra.mxu0 %v3336
    %3357 = vmatprep.subr.bf16.mxu0 0
    %3358 = vmatpush1.bf16.msra.mxu0 %v3337
    %3359 = vmatprep.subr.bf16.mxu0 0
    %3360 = vmatpush1.bf16.msra.mxu0 %v3338
    %3361 = vmatprep.subr.bf16.mxu0 0
    %3362 = vmatpush1.bf16.msra.mxu0 %v3339
    %3363 = vmatprep.subr.bf16.mxu0 0
    %3364 = vmatpush1.bf16.msra.mxu0 %v3340
    %3365 = vmatprep.subr.bf16.mxu0 0
    %3366 = vmatpush1.bf16.msra.mxu0 0
    %3367 = vmatprep.subr.bf16.mxu0 0
    %3368 = vmatpush1.bf16.msra.mxu0 0
    %3369 = vmatprep.subr.bf16.mxu0 0
    %3370 = vmatpush1.bf16.msra.mxu0 0
    %3371 = vmatprep.subr.bf16.mxu0 0
    %3372 = vmatpush1.bf16.msra.mxu0 0
    %3373 = vmatprep.subr.bf16.mxu0 0
    %3374 = vmatpush1.bf16.msra.mxu0 0
    %3375 = vmatprep.subr.bf16.mxu0 0
    %3376 = vmatpush1.bf16.msra.mxu0 0
    %3377 = vmatprep.subr.bf16.mxu0 0
    %3378 = vmatpush1.bf16.msra.mxu0 0
    %3379 = vmatprep.subr.bf16.mxu0 0
    %3380 = vmatpush1.bf16.msra.mxu0 0
    %3381 = vmatprep.mubr.bf16.mxu0 0
    %3382 = vmatmul.mubr.bf16.gmra.mrb[0].mxu0 %v3277
    %v3383 = vpop.f32.mrb[0].mxu0
    %v3384 = vadd.f32 %v3299, %v3383
    %v3385 = vpop.f32.mrb[0].mxu0
    %v3386 = vpop.f32.mrb[0].mxu0
    %v3387 = vpop.f32.mrb[0].mxu0
    %3388 = vdwg.mxu0
    %v3389 = vmax.f32 %v3384, 0.0
    %v3390 = vpack.c.bf16 %v3389, %v3389
    %v3391 = vld [vmem:[#allocation23] sm:$0xf]
    %v3392 = vld [vmem:[#allocation23 + $0x4] sm:$0xf]
    %v3393 = vld [vmem:[#allocation23 + $0x8] sm:$0xf]
    %v3394 = vld [vmem:[#allocation23 + $0xc] sm:$0xf]
    %v3395 = vld [vmem:[#allocation23 + $0x10] sm:$0xf]
    %v3396 = vld [vmem:[#allocation23 + $0x14] sm:$0xf]
    %v3397 = vld [vmem:[#allocation23 + $0x18] sm:$0xf]
    %v3398 = vld [vmem:[#allocation23 + $0x1c] sm:$0xf]
    %v3399 = vld [vmem:[#allocation23 + $0x20] sm:$0xf]
    %v3400 = vld [vmem:[#allocation23 + $0x24] sm:$0xf]
    %v3401 = vld [vmem:[#allocation23 + $0x28] sm:$0xf]
    %v3402 = vld [vmem:[#allocation23 + $0x2c] sm:$0xf]
    %v3403 = vld [vmem:[#allocation23 + $0x30] sm:$0xf]
    %v3404 = vld [vmem:[#allocation23 + $0x34] sm:$0xf]
    %v3405 = vld [vmem:[#allocation23 + $0x38] sm:$0xf]
    %v3406 = vld [vmem:[#allocation23 + $0x3c] sm:$0xf]
    %v3407 = vld [vmem:[#allocation25] sm:$0x1]
    %v3409 = vlaneseq
    %v3410 = vshrl.u32 %v3409, 7
    %v3411 = vsub.s32 0, %v3410
    %v3412 = vrot.slane %v3407, %v3411
    %v3430 = vunpack.c.l.b16 %v3391
    %v3431 = vunpack.c.l.b16 %v3392
    %v3432 = vunpack.c.l.b16 %v3393
    %v3433 = vunpack.c.l.b16 %v3394
    %v3434 = vunpack.c.l.b16 %v3395
    %v3435 = vunpack.c.l.b16 %v3396
    %v3436 = vunpack.c.l.b16 %v3397
    %v3437 = vunpack.c.l.b16 %v3398
    %v3438 = vunpack.c.l.b16 %v3399
    %v3439 = vunpack.c.l.b16 %v3400
    %v3440 = vunpack.c.l.b16 %v3401
    %v3441 = vunpack.c.l.b16 %v3402
    %v3442 = vunpack.c.l.b16 %v3403
    %v3443 = vunpack.c.l.b16 %v3404
    %v3444 = vunpack.c.l.b16 %v3405
    %v3445 = vunpack.c.l.b16 %v3406
    %v3446 = vpack.c.b16 %v3431, %v3430
    %v3447 = vpack.c.b16 %v3433, %v3432
    %v3448 = vpack.c.b16 %v3435, %v3434
    %v3449 = vpack.c.b16 %v3437, %v3436
    %v3450 = vpack.c.b16 %v3439, %v3438
    %v3451 = vpack.c.b16 %v3441, %v3440
    %v3452 = vpack.c.b16 %v3443, %v3442
    %v3453 = vpack.c.b16 %v3445, %v3444
    %3462 = vmatprep.subr.bf16.mxu0 0
    %3463 = vmatpush1.bf16.msra.mxu0 %v3446
    %3464 = vmatprep.subr.bf16.mxu0 0
    %3465 = vmatpush1.bf16.msra.mxu0 %v3447
    %3466 = vmatprep.subr.bf16.mxu0 0
    %3467 = vmatpush1.bf16.msra.mxu0 %v3448
    %3468 = vmatprep.subr.bf16.mxu0 0
    %3469 = vmatpush1.bf16.msra.mxu0 %v3449
    %3470 = vmatprep.subr.bf16.mxu0 0
    %3471 = vmatpush1.bf16.msra.mxu0 %v3450
    %3472 = vmatprep.subr.bf16.mxu0 0
    %3473 = vmatpush1.bf16.msra.mxu0 %v3451
    %3474 = vmatprep.subr.bf16.mxu0 0
    %3475 = vmatpush1.bf16.msra.mxu0 %v3452
    %3476 = vmatprep.subr.bf16.mxu0 0
    %3477 = vmatpush1.bf16.msra.mxu0 %v3453
    %3478 = vmatprep.subr.bf16.mxu0 0
    %3479 = vmatpush1.bf16.msra.mxu0 0
    %3480 = vmatprep.subr.bf16.mxu0 0
    %3481 = vmatpush1.bf16.msra.mxu0 0
    %3482 = vmatprep.subr.bf16.mxu0 0
    %3483 = vmatpush1.bf16.msra.mxu0 0
    %3484 = vmatprep.subr.bf16.mxu0 0
    %3485 = vmatpush1.bf16.msra.mxu0 0
    %3486 = vmatprep.subr.bf16.mxu0 0
    %3487 = vmatpush1.bf16.msra.mxu0 0
    %3488 = vmatprep.subr.bf16.mxu0 0
    %3489 = vmatpush1.bf16.msra.mxu0 0
    %3490 = vmatprep.subr.bf16.mxu0 0
    %3491 = vmatpush1.bf16.msra.mxu0 0
    %3492 = vmatprep.subr.bf16.mxu0 0
    %3493 = vmatpush1.bf16.msra.mxu0 0
    %3494 = vmatprep.mubr.bf16.mxu0 0
    %3495 = vmatmul.mubr.bf16.gmra.mrb[0].mxu0 %v3390
    %v3496 = vpop.f32.mrb[0].mxu0
    %v3497 = vadd.f32 %v3412, %v3496
    %v3498 = vpop.f32.mrb[0].mxu0
    %v3499 = vpop.f32.mrb[0].mxu0
    %v3500 = vpop.f32.mrb[0].mxu0
    %3501 = vdwg.mxu0
    %3502 = vst [vmem:[%s18] sm:$0xff] %v3497
    // Predicated region
    $region134: #{lstm_model_forward.1} parent=1 // pred_check
      _
    $region135: #{lstm_model_forward.1} parent=1 // pred_check_branch
      %3504 = sbr.rel (0) target = $region137
    $region136: #{lstm_model_forward.1} parent=1 // pred_region
      _
    $region137: #{lstm_model_forward.1} parent=1 // pred_fallthru
      _
    // Predicated region
    $region138: #{lstm_model_forward.1} parent=1 // pred_check
      _
    $region139: #{lstm_model_forward.1} parent=1 // pred_check_branch
      %3506 = sbr.rel (0) target = $region141
    $region140: #{lstm_model_forward.1} parent=1 // pred_region
      _
    $region141: #{lstm_model_forward.1} parent=1 // pred_fallthru
      _
    %3507 = vsyncpa [#allocation4], 1
    %3508 = vsyncpa [#allocation6], 1
    %3509 = vsyncpa [#allocation9], 1
    %3510 = vsyncpa [#allocation12], 1
    %3511 = vsyncpa [#allocation15], 1
    %3512 = vsyncpa [#allocation18], 1
    %3513 = vsyncpa [#allocation21], 1
    %3514 = vsyncpa [#allocation24], 1

</llo_original>
